<compile_context>
chip_gen: v7x
topology: tpu7x:2x2x1
jax: 0.10.0
libtpu: 0.0.40
codegen_flags: <defaults>
</compile_context>

<pallas_src>
import jax
import jax.numpy as jnp
from jax.experimental import pallas as pl
from jax.experimental.pallas import tpu as pltpu

EMB = 512          # embedding_size (module default)
BATCH = 128        # sublane-friendly, fills more MXU rows than 64
EPS = 1e-5
NEG_SLOPE = 0.2
NUM_LAYERS = 4


def mlp_bn_kernel(x_ref, w_hbm,
                  g1, be1, g2, be2, g3, be3, g4, be4,
                  o_ref, wbuf, sem):
    """x_ref: (B, D) bf16 in VMEM.  w_hbm: (4, D, D) bf16 in HBM (manual DMA).
    g*/be*: (1, D) f32 BN affine params.  wbuf: (2, D, D) bf16 double buffer."""
    gb = ((g1, be1), (g2, be2), (g3, be3), (g4, be4))

    def fetch(layer, slot):
        pltpu.make_async_copy(w_hbm.at[layer], wbuf.at[slot], sem.at[slot]).start()

    # Prime the first weight matrix; subsequent layers are prefetched during compute.
    fetch(0, 0)

    h = x_ref[...]  # bf16 on entry; f32 after the first BN

    for k in range(NUM_LAYERS):
        slot = k & 1
        pltpu.make_async_copy(w_hbm.at[k], wbuf.at[slot], sem.at[slot]).wait()
        if k + 1 < NUM_LAYERS:
            fetch(k + 1, 1 - slot)  # overlap next-layer weight DMA with this layer

        # Linear (bias dropped: BN removes any per-feature constant).  bf16 MXU,
        # f32 accumulation.
        z = jnp.dot(h.astype(jnp.bfloat16), wbuf[slot],
                    preferred_element_type=jnp.float32)

        # BatchNorm1d, training-mode (biased batch variance), folded into one
        # scale/shift with one-pass variance.  Statistics kept in f32.
        g = gb[k][0][...]
        be = gb[k][1][...]
        mu = jnp.mean(z, axis=0, keepdims=True)
        msq = jnp.mean(z * z, axis=0, keepdims=True)
        scale = g * jax.lax.rsqrt(msq - mu * mu + EPS)
        shift = be - mu * scale
        h = z * scale + shift

        if k < NUM_LAYERS - 1:  # LeakyReLU(0.2) after bn1..bn3 only
            h = jnp.where(h > 0, h, NEG_SLOPE * h)

    o_ref[...] = h.astype(o_ref.dtype)


@jax.jit
def single_layer_model(x, w_stack, gammas, betas):
    """x: (B, D) bf16. w_stack: (4, D, D) bf16, layout (layer, in, out).
    gammas/betas: 4-tuples of (1, D) f32."""
    B, D = x.shape
    gb_flat = []
    for g, be in zip(gammas, betas):
        gb_flat += [g, be]

    vm_full = pl.BlockSpec((B, D), lambda: (0, 0))
    vm_row = pl.BlockSpec((1, D), lambda: (0, 0))
    in_specs = ([vm_full, pl.BlockSpec(memory_space=pl.ANY)]
                + [vm_row] * (2 * NUM_LAYERS))

    cost = pl.CostEstimate(
        flops=2 * NUM_LAYERS * B * D * D + 10 * NUM_LAYERS * B * D,
        transcendentals=NUM_LAYERS * D,                      # rsqrt per feature/layer
        bytes_accessed=(NUM_LAYERS * D * D * 2               # bf16 weights
                        + B * D * 2                          # bf16 activations in
                        + B * D * 4                          # f32 output
                        + 2 * NUM_LAYERS * D * 4),           # gamma/beta
    )

    return pl.pallas_call(
        mlp_bn_kernel,
        out_shape=jax.ShapeDtypeStruct((B, D), jnp.float32),
        in_specs=in_specs,
        out_specs=pl.BlockSpec((B, D), lambda: (0, 0)),
        scratch_shapes=[
            pltpu.VMEM((2, D, D), jnp.bfloat16),   # double-buffered weight tile
            pltpu.SemaphoreType.DMA((2,)),
        ],
        compiler_params=pltpu.CompilerParams(vmem_limit_bytes=16 << 20),
        cost_estimate=cost,
    )(x, w_stack, *gb_flat)


def init_params(key, d):
    """PyTorch-style init: W (out,in), b ~ U(-1/sqrt(d), 1/sqrt(d)); BN gamma~1,
    beta~0 (perturbed so the test is non-trivial)."""
    params = []
    bound = 1.0 / jnp.sqrt(d)
    for _ in range(NUM_LAYERS):
        key, k1, k2, k3, k4 = jax.random.split(key, 5)
        w = jax.random.uniform(k1, (d, d), jnp.float32, -bound, bound)   # (out, in)
        b = jax.random.uniform(k2, (1, d), jnp.float32, -bound, bound)
        gamma = 1.0 + 0.1 * jax.random.normal(k3, (1, d), jnp.float32)
        beta = 0.05 * jax.random.normal(k4, (1, d), jnp.float32)
        params.append((w, b, gamma, beta))
    return params


def pack_params(params):
    """Kernel-side packing: transpose W to (in, out), stack to (4, D, D), cast bf16.
    Linear biases are intentionally omitted (algebraically dead under training BN)."""
    w_stack = jnp.stack([w.T for (w, _b, _g, _be) in params]).astype(jnp.bfloat16)
    gammas = tuple(g.astype(jnp.float32) for (_w, _b, g, _be) in params)
    betas = tuple(be.astype(jnp.float32) for (_w, _b, _g, be) in params)
    return w_stack, gammas, betas


def reference_f32(x, params):
    """PyTorch-faithful fp32 forward (Linear with bias, training-mode BatchNorm1d)."""
    h = x
    for i, (w, b, g, be) in enumerate(params):
        h = h @ w.T + b
        mu = jnp.mean(h, axis=0, keepdims=True)
        var = jnp.mean((h - mu) ** 2, axis=0, keepdims=True)
        h = (h - mu) / jnp.sqrt(var + EPS) * g + be
        if i < NUM_LAYERS - 1:
            h = jnp.where(h > 0, h, NEG_SLOPE * h)
    return h


def reference_kernel_math(x_bf16, params):
    """Pure-JAX mirror of the kernel's numerics (bf16 matmul operands, no bias,
    f32 BN) — used for a tight structural check."""
    h = x_bf16.astype(jnp.float32)
    for i, (w, _b, g, be) in enumerate(params):
        wt = w.T.astype(jnp.bfloat16)
        z = jnp.dot(h.astype(jnp.bfloat16), wt, preferred_element_type=jnp.float32)
        mu = jnp.mean(z, axis=0, keepdims=True)
        var = jnp.mean((z - mu) ** 2, axis=0, keepdims=True)
        h = (z - mu) * jax.lax.rsqrt(var + EPS) * g + be
        if i < NUM_LAYERS - 1:
            h = jnp.where(h > 0, h, NEG_SLOPE * h)
    return h


if __name__ == "__main__":
    key = jax.random.PRNGKey(0)
    kx, kp = jax.random.split(key)
    x = jax.random.normal(kx, (BATCH, EMB), jnp.float32)
    params = init_params(kp, EMB)

    x_bf16 = x.astype(jnp.bfloat16)
    w_stack, gammas, betas = pack_params(params)

    out = single_layer_model(x_bf16, w_stack, gammas, betas)
    out = jax.block_until_ready(out)
    assert out.shape == (BATCH, EMB) and out.dtype == jnp.float32

    # Tight check against a pure-JAX mirror of the kernel's own numerics.
    ref_same = reference_kernel_math(x_bf16, params)
    err_same = float(jnp.max(jnp.abs(out - ref_same)))
    assert jnp.allclose(out, ref_same, atol=1e-2, rtol=1e-2), (
        f"kernel vs same-precision reference: max abs err {err_same}")

    # Looser check against the fp32 PyTorch-semantics reference (bf16 weights
    # introduce ~1e-3-1e-2 element-wise differences over 4 layers).
    ref_t = reference_f32(x_bf16.astype(jnp.float32), params)
    err_f32 = float(jnp.max(jnp.abs(out - ref_t)))
    assert jnp.allclose(out, ref_t, atol=5e-2, rtol=5e-2), (
        f"kernel vs fp32 reference: max abs err {err_f32}")

    print("KERNEL_OK")
</pallas_src>

<mosaic_0001>
module attributes {stable_mosaic.version = 11 : i64} {
  func.func @mlp_bn_kernel(%arg0: memref<128x512xbf16, #tpu.memory_space<vmem>>, %arg1: memref<4x512x512xbf16, #tpu.memory_space<any>>, %arg2: memref<1x512xf32, #tpu.memory_space<vmem>>, %arg3: memref<1x512xf32, #tpu.memory_space<vmem>>, %arg4: memref<1x512xf32, #tpu.memory_space<vmem>>, %arg5: memref<1x512xf32, #tpu.memory_space<vmem>>, %arg6: memref<1x512xf32, #tpu.memory_space<vmem>>, %arg7: memref<1x512xf32, #tpu.memory_space<vmem>>, %arg8: memref<1x512xf32, #tpu.memory_space<vmem>>, %arg9: memref<1x512xf32, #tpu.memory_space<vmem>>, %arg10: memref<128x512xf32, #tpu.memory_space<vmem>>, %arg11: memref<2x512x512xbf16, #tpu.memory_space<vmem>>, %arg12: memref<2x!tpu.dma_semaphore, #tpu.memory_space<semaphore_mem>>) attributes {dimension_semantics = [], scalar_prefetch = 0 : i64, scratch_operands = 2 : i64, tpu.core_type = #tpu.core_type<tc>} {
    %c0_i32 = arith.constant 0 : i32
    %c0_i32_0 = arith.constant 0 : i32
    %c0_i32_1 = arith.constant 0 : i32
    %c0_i32_2 = arith.constant 0 : i32
    %c0_i32_3 = arith.constant 0 : i32
    %0 = tpu.memref_slice %arg1[%c0_i32, %c0_i32_2, %c0_i32_3] : memref<4x512x512xbf16, #tpu.memory_space<any>> -> memref<1x512x512xbf16, #tpu.memory_space<any>>
    %1 = tpu.memref_squeeze %0 : memref<1x512x512xbf16, #tpu.memory_space<any>> -> memref<512x512xbf16, #tpu.memory_space<any>>
    %c0_i32_4 = arith.constant 0 : i32
    %c0_i32_5 = arith.constant 0 : i32
    %2 = tpu.memref_slice %arg11[%c0_i32_0, %c0_i32_4, %c0_i32_5] : memref<2x512x512xbf16, #tpu.memory_space<vmem>> -> memref<1x512x512xbf16, #tpu.memory_space<vmem>>
    %3 = tpu.memref_squeeze %2 : memref<1x512x512xbf16, #tpu.memory_space<vmem>> -> memref<512x512xbf16, #tpu.memory_space<vmem>>
    %4 = tpu.memref_slice %arg12[%c0_i32_1] : memref<2x!tpu.dma_semaphore, #tpu.memory_space<semaphore_mem>> -> memref<1x!tpu.dma_semaphore, #tpu.memory_space<semaphore_mem>>
    %5 = tpu.memref_squeeze %4 : memref<1x!tpu.dma_semaphore, #tpu.memory_space<semaphore_mem>> -> memref<!tpu.dma_semaphore, #tpu.memory_space<semaphore_mem>>
    tpu.enqueue_dma source(%1 : memref<512x512xbf16, #tpu.memory_space<any>>) target(%3 : memref<512x512xbf16, #tpu.memory_space<vmem>>) target_semaphore(%5 : memref<!tpu.dma_semaphore, #tpu.memory_space<semaphore_mem>>)
    %c0 = arith.constant 0 : index
    %c0_6 = arith.constant 0 : index
    %6 = vector.load %arg0[%c0, %c0_6] : memref<128x512xbf16, #tpu.memory_space<vmem>>, vector<128x512xbf16>
    %c0_i32_7 = arith.constant 0 : i32
    %c0_i32_8 = arith.constant 0 : i32
    %c0_i32_9 = arith.constant 0 : i32
    %c0_i32_10 = arith.constant 0 : i32
    %c0_i32_11 = arith.constant 0 : i32
    %7 = tpu.memref_slice %arg1[%c0_i32_7, %c0_i32_10, %c0_i32_11] : memref<4x512x512xbf16, #tpu.memory_space<any>> -> memref<1x512x512xbf16, #tpu.memory_space<any>>
    %8 = tpu.memref_squeeze %7 : memref<1x512x512xbf16, #tpu.memory_space<any>> -> memref<512x512xbf16, #tpu.memory_space<any>>
    %c0_i32_12 = arith.constant 0 : i32
    %c0_i32_13 = arith.constant 0 : i32
    %9 = tpu.memref_slice %arg11[%c0_i32_8, %c0_i32_12, %c0_i32_13] : memref<2x512x512xbf16, #tpu.memory_space<vmem>> -> memref<1x512x512xbf16, #tpu.memory_space<vmem>>
    %10 = tpu.memref_squeeze %9 : memref<1x512x512xbf16, #tpu.memory_space<vmem>> -> memref<512x512xbf16, #tpu.memory_space<vmem>>
    %11 = tpu.memref_slice %arg12[%c0_i32_9] : memref<2x!tpu.dma_semaphore, #tpu.memory_space<semaphore_mem>> -> memref<1x!tpu.dma_semaphore, #tpu.memory_space<semaphore_mem>>
    %12 = tpu.memref_squeeze %11 : memref<1x!tpu.dma_semaphore, #tpu.memory_space<semaphore_mem>> -> memref<!tpu.dma_semaphore, #tpu.memory_space<semaphore_mem>>
    tpu.wait_dma2 semaphore(%12 : memref<!tpu.dma_semaphore, #tpu.memory_space<semaphore_mem>>) src(%8 : memref<512x512xbf16, #tpu.memory_space<any>>) dst(%10 : memref<512x512xbf16, #tpu.memory_space<vmem>>)
    %c1_i32 = arith.constant 1 : i32
    %c1_i32_14 = arith.constant 1 : i32
    %c1_i32_15 = arith.constant 1 : i32
    %c0_i32_16 = arith.constant 0 : i32
    %c0_i32_17 = arith.constant 0 : i32
    %13 = tpu.memref_slice %arg1[%c1_i32, %c0_i32_16, %c0_i32_17] : memref<4x512x512xbf16, #tpu.memory_space<any>> -> memref<1x512x512xbf16, #tpu.memory_space<any>>
    %14 = tpu.memref_squeeze %13 : memref<1x512x512xbf16, #tpu.memory_space<any>> -> memref<512x512xbf16, #tpu.memory_space<any>>
    %c0_i32_18 = arith.constant 0 : i32
    %c0_i32_19 = arith.constant 0 : i32
    %15 = tpu.memref_slice %arg11[%c1_i32_14, %c0_i32_18, %c0_i32_19] : memref<2x512x512xbf16, #tpu.memory_space<vmem>> -> memref<1x512x512xbf16, #tpu.memory_space<vmem>>
    %16 = tpu.memref_squeeze %15 : memref<1x512x512xbf16, #tpu.memory_space<vmem>> -> memref<512x512xbf16, #tpu.memory_space<vmem>>
    %17 = tpu.memref_slice %arg12[%c1_i32_15] : memref<2x!tpu.dma_semaphore, #tpu.memory_space<semaphore_mem>> -> memref<1x!tpu.dma_semaphore, #tpu.memory_space<semaphore_mem>>
    %18 = tpu.memref_squeeze %17 : memref<1x!tpu.dma_semaphore, #tpu.memory_space<semaphore_mem>> -> memref<!tpu.dma_semaphore, #tpu.memory_space<semaphore_mem>>
    tpu.enqueue_dma source(%14 : memref<512x512xbf16, #tpu.memory_space<any>>) target(%16 : memref<512x512xbf16, #tpu.memory_space<vmem>>) target_semaphore(%18 : memref<!tpu.dma_semaphore, #tpu.memory_space<semaphore_mem>>)
    %c0_20 = arith.constant 0 : index
    %c0_21 = arith.constant 0 : index
    %c0_22 = arith.constant 0 : index
    %19 = vector.load %arg11[%c0_20, %c0_21, %c0_22] : memref<2x512x512xbf16, #tpu.memory_space<vmem>>, vector<1x512x512xbf16>
    %20 = vector.shape_cast %19 : vector<1x512x512xbf16> to vector<512x512xbf16>
    %cst = arith.constant dense<0.000000e+00> : vector<128x512xf32>
    %21 = tpu.matmul %6, %20, %cst {dimension_numbers = #tpu.dot_dimension_numbers<[1], [0], [0], [1], [0, 0, 1, 1], [], []>} : vector<128x512xbf16>, vector<512x512xbf16>, vector<128x512xf32> -> vector<128x512xf32>
    %c0_23 = arith.constant 0 : index
    %c0_24 = arith.constant 0 : index
    %22 = vector.load %arg2[%c0_23, %c0_24] : memref<1x512xf32, #tpu.memory_space<vmem>>, vector<1x512xf32>
    %c0_25 = arith.constant 0 : index
    %c0_26 = arith.constant 0 : index
    %23 = vector.load %arg3[%c0_25, %c0_26] : memref<1x512xf32, #tpu.memory_space<vmem>>, vector<1x512xf32>
    %cst_27 = arith.constant dense<0.000000e+00> : vector<512xf32>
    %24 = vector.multi_reduction <add>, %21, %cst_27 [0] : vector<128x512xf32> to vector<512xf32>
    %25 = vector.shape_cast %24 : vector<512xf32> to vector<1x512xf32>
    %cst_28 = arith.constant 1.280000e+02 : f32
    %26 = vector.broadcast %cst_28 : f32 to vector<1x512xf32>
    %27 = arith.divf %25, %26 : vector<1x512xf32>
    %28 = arith.mulf %21, %21 : vector<128x512xf32>
    %cst_29 = arith.constant dense<0.000000e+00> : vector<512xf32>
    %29 = vector.multi_reduction <add>, %28, %cst_29 [0] : vector<128x512xf32> to vector<512xf32>
    %30 = vector.shape_cast %29 : vector<512xf32> to vector<1x512xf32>
    %cst_30 = arith.constant 1.280000e+02 : f32
    %31 = vector.broadcast %cst_30 : f32 to vector<1x512xf32>
    %32 = arith.divf %30, %31 : vector<1x512xf32>
    %33 = arith.mulf %27, %27 : vector<1x512xf32>
    %34 = arith.subf %32, %33 : vector<1x512xf32>
    %cst_31 = arith.constant 9.99999974E-6 : f32
    %35 = vector.broadcast %cst_31 : f32 to vector<1x512xf32>
    %36 = arith.addf %34, %35 : vector<1x512xf32>
    %37 = math.rsqrt %36 : vector<1x512xf32>
    %38 = arith.mulf %22, %37 : vector<1x512xf32>
    %39 = arith.mulf %27, %38 : vector<1x512xf32>
    %40 = arith.subf %23, %39 : vector<1x512xf32>
    %41 = vector.broadcast %38 : vector<1x512xf32> to vector<128x512xf32>
    %42 = arith.mulf %21, %41 : vector<128x512xf32>
    %43 = vector.broadcast %40 : vector<1x512xf32> to vector<128x512xf32>
    %44 = arith.addf %42, %43 : vector<128x512xf32>
    %cst_32 = arith.constant 0.000000e+00 : f32
    %45 = vector.broadcast %cst_32 : f32 to vector<128x512xf32>
    %46 = arith.cmpf ogt, %44, %45 : vector<128x512xf32>
    %cst_33 = arith.constant 2.000000e-01 : f32
    %47 = vector.broadcast %cst_33 : f32 to vector<128x512xf32>
    %48 = arith.mulf %47, %44 : vector<128x512xf32>
    %49 = arith.select %46, %44, %48 : vector<128x512xi1>, vector<128x512xf32>
    %c1_i32_34 = arith.constant 1 : i32
    %c1_i32_35 = arith.constant 1 : i32
    %c1_i32_36 = arith.constant 1 : i32
    %c0_i32_37 = arith.constant 0 : i32
    %c0_i32_38 = arith.constant 0 : i32
    %50 = tpu.memref_slice %arg1[%c1_i32_34, %c0_i32_37, %c0_i32_38] : memref<4x512x512xbf16, #tpu.memory_space<any>> -> memref<1x512x512xbf16, #tpu.memory_space<any>>
    %51 = tpu.memref_squeeze %50 : memref<1x512x512xbf16, #tpu.memory_space<any>> -> memref<512x512xbf16, #tpu.memory_space<any>>
    %c0_i32_39 = arith.constant 0 : i32
    %c0_i32_40 = arith.constant 0 : i32
    %52 = tpu.memref_slice %arg11[%c1_i32_35, %c0_i32_39, %c0_i32_40] : memref<2x512x512xbf16, #tpu.memory_space<vmem>> -> memref<1x512x512xbf16, #tpu.memory_space<vmem>>
    %53 = tpu.memref_squeeze %52 : memref<1x512x512xbf16, #tpu.memory_space<vmem>> -> memref<512x512xbf16, #tpu.memory_space<vmem>>
    %54 = tpu.memref_slice %arg12[%c1_i32_36] : memref<2x!tpu.dma_semaphore, #tpu.memory_space<semaphore_mem>> -> memref<1x!tpu.dma_semaphore, #tpu.memory_space<semaphore_mem>>
    %55 = tpu.memref_squeeze %54 : memref<1x!tpu.dma_semaphore, #tpu.memory_space<semaphore_mem>> -> memref<!tpu.dma_semaphore, #tpu.memory_space<semaphore_mem>>
    tpu.wait_dma2 semaphore(%55 : memref<!tpu.dma_semaphore, #tpu.memory_space<semaphore_mem>>) src(%51 : memref<512x512xbf16, #tpu.memory_space<any>>) dst(%53 : memref<512x512xbf16, #tpu.memory_space<vmem>>)
    %c2_i32 = arith.constant 2 : i32
    %c0_i32_41 = arith.constant 0 : i32
    %c0_i32_42 = arith.constant 0 : i32
    %c0_i32_43 = arith.constant 0 : i32
    %c0_i32_44 = arith.constant 0 : i32
    %56 = tpu.memref_slice %arg1[%c2_i32, %c0_i32_43, %c0_i32_44] : memref<4x512x512xbf16, #tpu.memory_space<any>> -> memref<1x512x512xbf16, #tpu.memory_space<any>>
    %57 = tpu.memref_squeeze %56 : memref<1x512x512xbf16, #tpu.memory_space<any>> -> memref<512x512xbf16, #tpu.memory_space<any>>
    %c0_i32_45 = arith.constant 0 : i32
    %c0_i32_46 = arith.constant 0 : i32
    %58 = tpu.memref_slice %arg11[%c0_i32_41, %c0_i32_45, %c0_i32_46] : memref<2x512x512xbf16, #tpu.memory_space<vmem>> -> memref<1x512x512xbf16, #tpu.memory_space<vmem>>
    %59 = tpu.memref_squeeze %58 : memref<1x512x512xbf16, #tpu.memory_space<vmem>> -> memref<512x512xbf16, #tpu.memory_space<vmem>>
    %60 = tpu.memref_slice %arg12[%c0_i32_42] : memref<2x!tpu.dma_semaphore, #tpu.memory_space<semaphore_mem>> -> memref<1x!tpu.dma_semaphore, #tpu.memory_space<semaphore_mem>>
    %61 = tpu.memref_squeeze %60 : memref<1x!tpu.dma_semaphore, #tpu.memory_space<semaphore_mem>> -> memref<!tpu.dma_semaphore, #tpu.memory_space<semaphore_mem>>
    tpu.enqueue_dma source(%57 : memref<512x512xbf16, #tpu.memory_space<any>>) target(%59 : memref<512x512xbf16, #tpu.memory_space<vmem>>) target_semaphore(%61 : memref<!tpu.dma_semaphore, #tpu.memory_space<semaphore_mem>>)
    %62 = arith.truncf %49 : vector<128x512xf32> to vector<128x512xbf16>
    %c1 = arith.constant 1 : index
    %c0_47 = arith.constant 0 : index
    %c0_48 = arith.constant 0 : index
    %63 = vector.load %arg11[%c1, %c0_47, %c0_48] : memref<2x512x512xbf16, #tpu.memory_space<vmem>>, vector<1x512x512xbf16>
    %64 = vector.shape_cast %63 : vector<1x512x512xbf16> to vector<512x512xbf16>
    %cst_49 = arith.constant dense<0.000000e+00> : vector<128x512xf32>
    %65 = tpu.matmul %62, %64, %cst_49 {dimension_numbers = #tpu.dot_dimension_numbers<[1], [0], [0], [1], [0, 0, 1, 1], [], []>} : vector<128x512xbf16>, vector<512x512xbf16>, vector<128x512xf32> -> vector<128x512xf32>
    %c0_50 = arith.constant 0 : index
    %c0_51 = arith.constant 0 : index
    %66 = vector.load %arg4[%c0_50, %c0_51] : memref<1x512xf32, #tpu.memory_space<vmem>>, vector<1x512xf32>
    %c0_52 = arith.constant 0 : index
    %c0_53 = arith.constant 0 : index
    %67 = vector.load %arg5[%c0_52, %c0_53] : memref<1x512xf32, #tpu.memory_space<vmem>>, vector<1x512xf32>
    %cst_54 = arith.constant dense<0.000000e+00> : vector<512xf32>
    %68 = vector.multi_reduction <add>, %65, %cst_54 [0] : vector<128x512xf32> to vector<512xf32>
    %69 = vector.shape_cast %68 : vector<512xf32> to vector<1x512xf32>
    %cst_55 = arith.constant 1.280000e+02 : f32
    %70 = vector.broadcast %cst_55 : f32 to vector<1x512xf32>
    %71 = arith.divf %69, %70 : vector<1x512xf32>
    %72 = arith.mulf %65, %65 : vector<128x512xf32>
    %cst_56 = arith.constant dense<0.000000e+00> : vector<512xf32>
    %73 = vector.multi_reduction <add>, %72, %cst_56 [0] : vector<128x512xf32> to vector<512xf32>
    %74 = vector.shape_cast %73 : vector<512xf32> to vector<1x512xf32>
    %cst_57 = arith.constant 1.280000e+02 : f32
    %75 = vector.broadcast %cst_57 : f32 to vector<1x512xf32>
    %76 = arith.divf %74, %75 : vector<1x512xf32>
    %77 = arith.mulf %71, %71 : vector<1x512xf32>
    %78 = arith.subf %76, %77 : vector<1x512xf32>
    %cst_58 = arith.constant 9.99999974E-6 : f32
    %79 = vector.broadcast %cst_58 : f32 to vector<1x512xf32>
    %80 = arith.addf %78, %79 : vector<1x512xf32>
    %81 = math.rsqrt %80 : vector<1x512xf32>
    %82 = arith.mulf %66, %81 : vector<1x512xf32>
    %83 = arith.mulf %71, %82 : vector<1x512xf32>
    %84 = arith.subf %67, %83 : vector<1x512xf32>
    %85 = vector.broadcast %82 : vector<1x512xf32> to vector<128x512xf32>
    %86 = arith.mulf %65, %85 : vector<128x512xf32>
    %87 = vector.broadcast %84 : vector<1x512xf32> to vector<128x512xf32>
    %88 = arith.addf %86, %87 : vector<128x512xf32>
    %cst_59 = arith.constant 0.000000e+00 : f32
    %89 = vector.broadcast %cst_59 : f32 to vector<128x512xf32>
    %90 = arith.cmpf ogt, %88, %89 : vector<128x512xf32>
    %cst_60 = arith.constant 2.000000e-01 : f32
    %91 = vector.broadcast %cst_60 : f32 to vector<128x512xf32>
    %92 = arith.mulf %91, %88 : vector<128x512xf32>
    %93 = arith.select %90, %88, %92 : vector<128x512xi1>, vector<128x512xf32>
    %c2_i32_61 = arith.constant 2 : i32
    %c0_i32_62 = arith.constant 0 : i32
    %c0_i32_63 = arith.constant 0 : i32
    %c0_i32_64 = arith.constant 0 : i32
    %c0_i32_65 = arith.constant 0 : i32
    %94 = tpu.memref_slice %arg1[%c2_i32_61, %c0_i32_64, %c0_i32_65] : memref<4x512x512xbf16, #tpu.memory_space<any>> -> memref<1x512x512xbf16, #tpu.memory_space<any>>
    %95 = tpu.memref_squeeze %94 : memref<1x512x512xbf16, #tpu.memory_space<any>> -> memref<512x512xbf16, #tpu.memory_space<any>>
    %c0_i32_66 = arith.constant 0 : i32
    %c0_i32_67 = arith.constant 0 : i32
    %96 = tpu.memref_slice %arg11[%c0_i32_62, %c0_i32_66, %c0_i32_67] : memref<2x512x512xbf16, #tpu.memory_space<vmem>> -> memref<1x512x512xbf16, #tpu.memory_space<vmem>>
    %97 = tpu.memref_squeeze %96 : memref<1x512x512xbf16, #tpu.memory_space<vmem>> -> memref<512x512xbf16, #tpu.memory_space<vmem>>
    %98 = tpu.memref_slice %arg12[%c0_i32_63] : memref<2x!tpu.dma_semaphore, #tpu.memory_space<semaphore_mem>> -> memref<1x!tpu.dma_semaphore, #tpu.memory_space<semaphore_mem>>
    %99 = tpu.memref_squeeze %98 : memref<1x!tpu.dma_semaphore, #tpu.memory_space<semaphore_mem>> -> memref<!tpu.dma_semaphore, #tpu.memory_space<semaphore_mem>>
    tpu.wait_dma2 semaphore(%99 : memref<!tpu.dma_semaphore, #tpu.memory_space<semaphore_mem>>) src(%95 : memref<512x512xbf16, #tpu.memory_space<any>>) dst(%97 : memref<512x512xbf16, #tpu.memory_space<vmem>>)
    %c3_i32 = arith.constant 3 : i32
    %c1_i32_68 = arith.constant 1 : i32
    %c1_i32_69 = arith.constant 1 : i32
    %c0_i32_70 = arith.constant 0 : i32
    %c0_i32_71 = arith.constant 0 : i32
    %100 = tpu.memref_slice %arg1[%c3_i32, %c0_i32_70, %c0_i32_71] : memref<4x512x512xbf16, #tpu.memory_space<any>> -> memref<1x512x512xbf16, #tpu.memory_space<any>>
    %101 = tpu.memref_squeeze %100 : memref<1x512x512xbf16, #tpu.memory_space<any>> -> memref<512x512xbf16, #tpu.memory_space<any>>
    %c0_i32_72 = arith.constant 0 : i32
    %c0_i32_73 = arith.constant 0 : i32
    %102 = tpu.memref_slice %arg11[%c1_i32_68, %c0_i32_72, %c0_i32_73] : memref<2x512x512xbf16, #tpu.memory_space<vmem>> -> memref<1x512x512xbf16, #tpu.memory_space<vmem>>
    %103 = tpu.memref_squeeze %102 : memref<1x512x512xbf16, #tpu.memory_space<vmem>> -> memref<512x512xbf16, #tpu.memory_space<vmem>>
    %104 = tpu.memref_slice %arg12[%c1_i32_69] : memref<2x!tpu.dma_semaphore, #tpu.memory_space<semaphore_mem>> -> memref<1x!tpu.dma_semaphore, #tpu.memory_space<semaphore_mem>>
    %105 = tpu.memref_squeeze %104 : memref<1x!tpu.dma_semaphore, #tpu.memory_space<semaphore_mem>> -> memref<!tpu.dma_semaphore, #tpu.memory_space<semaphore_mem>>
    tpu.enqueue_dma source(%101 : memref<512x512xbf16, #tpu.memory_space<any>>) target(%103 : memref<512x512xbf16, #tpu.memory_space<vmem>>) target_semaphore(%105 : memref<!tpu.dma_semaphore, #tpu.memory_space<semaphore_mem>>)
    %106 = arith.truncf %93 : vector<128x512xf32> to vector<128x512xbf16>
    %c0_74 = arith.constant 0 : index
    %c0_75 = arith.constant 0 : index
    %c0_76 = arith.constant 0 : index
    %107 = vector.load %arg11[%c0_74, %c0_75, %c0_76] : memref<2x512x512xbf16, #tpu.memory_space<vmem>>, vector<1x512x512xbf16>
    %108 = vector.shape_cast %107 : vector<1x512x512xbf16> to vector<512x512xbf16>
    %cst_77 = arith.constant dense<0.000000e+00> : vector<128x512xf32>
    %109 = tpu.matmul %106, %108, %cst_77 {dimension_numbers = #tpu.dot_dimension_numbers<[1], [0], [0], [1], [0, 0, 1, 1], [], []>} : vector<128x512xbf16>, vector<512x512xbf16>, vector<128x512xf32> -> vector<128x512xf32>
    %c0_78 = arith.constant 0 : index
    %c0_79 = arith.constant 0 : index
    %110 = vector.load %arg6[%c0_78, %c0_79] : memref<1x512xf32, #tpu.memory_space<vmem>>, vector<1x512xf32>
    %c0_80 = arith.constant 0 : index
    %c0_81 = arith.constant 0 : index
    %111 = vector.load %arg7[%c0_80, %c0_81] : memref<1x512xf32, #tpu.memory_space<vmem>>, vector<1x512xf32>
    %cst_82 = arith.constant dense<0.000000e+00> : vector<512xf32>
    %112 = vector.multi_reduction <add>, %109, %cst_82 [0] : vector<128x512xf32> to vector<512xf32>
    %113 = vector.shape_cast %112 : vector<512xf32> to vector<1x512xf32>
    %cst_83 = arith.constant 1.280000e+02 : f32
    %114 = vector.broadcast %cst_83 : f32 to vector<1x512xf32>
    %115 = arith.divf %113, %114 : vector<1x512xf32>
    %116 = arith.mulf %109, %109 : vector<128x512xf32>
    %cst_84 = arith.constant dense<0.000000e+00> : vector<512xf32>
    %117 = vector.multi_reduction <add>, %116, %cst_84 [0] : vector<128x512xf32> to vector<512xf32>
    %118 = vector.shape_cast %117 : vector<512xf32> to vector<1x512xf32>
    %cst_85 = arith.constant 1.280000e+02 : f32
    %119 = vector.broadcast %cst_85 : f32 to vector<1x512xf32>
    %120 = arith.divf %118, %119 : vector<1x512xf32>
    %121 = arith.mulf %115, %115 : vector<1x512xf32>
    %122 = arith.subf %120, %121 : vector<1x512xf32>
    %cst_86 = arith.constant 9.99999974E-6 : f32
    %123 = vector.broadcast %cst_86 : f32 to vector<1x512xf32>
    %124 = arith.addf %122, %123 : vector<1x512xf32>
    %125 = math.rsqrt %124 : vector<1x512xf32>
    %126 = arith.mulf %110, %125 : vector<1x512xf32>
    %127 = arith.mulf %115, %126 : vector<1x512xf32>
    %128 = arith.subf %111, %127 : vector<1x512xf32>
    %129 = vector.broadcast %126 : vector<1x512xf32> to vector<128x512xf32>
    %130 = arith.mulf %109, %129 : vector<128x512xf32>
    %131 = vector.broadcast %128 : vector<1x512xf32> to vector<128x512xf32>
    %132 = arith.addf %130, %131 : vector<128x512xf32>
    %cst_87 = arith.constant 0.000000e+00 : f32
    %133 = vector.broadcast %cst_87 : f32 to vector<128x512xf32>
    %134 = arith.cmpf ogt, %132, %133 : vector<128x512xf32>
    %cst_88 = arith.constant 2.000000e-01 : f32
    %135 = vector.broadcast %cst_88 : f32 to vector<128x512xf32>
    %136 = arith.mulf %135, %132 : vector<128x512xf32>
    %137 = arith.select %134, %132, %136 : vector<128x512xi1>, vector<128x512xf32>
    %c3_i32_89 = arith.constant 3 : i32
    %c1_i32_90 = arith.constant 1 : i32
    %c1_i32_91 = arith.constant 1 : i32
    %c0_i32_92 = arith.constant 0 : i32
    %c0_i32_93 = arith.constant 0 : i32
    %138 = tpu.memref_slice %arg1[%c3_i32_89, %c0_i32_92, %c0_i32_93] : memref<4x512x512xbf16, #tpu.memory_space<any>> -> memref<1x512x512xbf16, #tpu.memory_space<any>>
    %139 = tpu.memref_squeeze %138 : memref<1x512x512xbf16, #tpu.memory_space<any>> -> memref<512x512xbf16, #tpu.memory_space<any>>
    %c0_i32_94 = arith.constant 0 : i32
    %c0_i32_95 = arith.constant 0 : i32
    %140 = tpu.memref_slice %arg11[%c1_i32_90, %c0_i32_94, %c0_i32_95] : memref<2x512x512xbf16, #tpu.memory_space<vmem>> -> memref<1x512x512xbf16, #tpu.memory_space<vmem>>
    %141 = tpu.memref_squeeze %140 : memref<1x512x512xbf16, #tpu.memory_space<vmem>> -> memref<512x512xbf16, #tpu.memory_space<vmem>>
    %142 = tpu.memref_slice %arg12[%c1_i32_91] : memref<2x!tpu.dma_semaphore, #tpu.memory_space<semaphore_mem>> -> memref<1x!tpu.dma_semaphore, #tpu.memory_space<semaphore_mem>>
    %143 = tpu.memref_squeeze %142 : memref<1x!tpu.dma_semaphore, #tpu.memory_space<semaphore_mem>> -> memref<!tpu.dma_semaphore, #tpu.memory_space<semaphore_mem>>
    tpu.wait_dma2 semaphore(%143 : memref<!tpu.dma_semaphore, #tpu.memory_space<semaphore_mem>>) src(%139 : memref<512x512xbf16, #tpu.memory_space<any>>) dst(%141 : memref<512x512xbf16, #tpu.memory_space<vmem>>)
    %144 = arith.truncf %137 : vector<128x512xf32> to vector<128x512xbf16>
    %c1_96 = arith.constant 1 : index
    %c0_97 = arith.constant 0 : index
    %c0_98 = arith.constant 0 : index
    %145 = vector.load %arg11[%c1_96, %c0_97, %c0_98] : memref<2x512x512xbf16, #tpu.memory_space<vmem>>, vector<1x512x512xbf16>
    %146 = vector.shape_cast %145 : vector<1x512x512xbf16> to vector<512x512xbf16>
    %cst_99 = arith.constant dense<0.000000e+00> : vector<128x512xf32>
    %147 = tpu.matmul %144, %146, %cst_99 {dimension_numbers = #tpu.dot_dimension_numbers<[1], [0], [0], [1], [0, 0, 1, 1], [], []>} : vector<128x512xbf16>, vector<512x512xbf16>, vector<128x512xf32> -> vector<128x512xf32>
    %c0_100 = arith.constant 0 : index
    %c0_101 = arith.constant 0 : index
    %148 = vector.load %arg8[%c0_100, %c0_101] : memref<1x512xf32, #tpu.memory_space<vmem>>, vector<1x512xf32>
    %c0_102 = arith.constant 0 : index
    %c0_103 = arith.constant 0 : index
    %149 = vector.load %arg9[%c0_102, %c0_103] : memref<1x512xf32, #tpu.memory_space<vmem>>, vector<1x512xf32>
    %cst_104 = arith.constant dense<0.000000e+00> : vector<512xf32>
    %150 = vector.multi_reduction <add>, %147, %cst_104 [0] : vector<128x512xf32> to vector<512xf32>
    %151 = vector.shape_cast %150 : vector<512xf32> to vector<1x512xf32>
    %cst_105 = arith.constant 1.280000e+02 : f32
    %152 = vector.broadcast %cst_105 : f32 to vector<1x512xf32>
    %153 = arith.divf %151, %152 : vector<1x512xf32>
    %154 = arith.mulf %147, %147 : vector<128x512xf32>
    %cst_106 = arith.constant dense<0.000000e+00> : vector<512xf32>
    %155 = vector.multi_reduction <add>, %154, %cst_106 [0] : vector<128x512xf32> to vector<512xf32>
    %156 = vector.shape_cast %155 : vector<512xf32> to vector<1x512xf32>
    %cst_107 = arith.constant 1.280000e+02 : f32
    %157 = vector.broadcast %cst_107 : f32 to vector<1x512xf32>
    %158 = arith.divf %156, %157 : vector<1x512xf32>
    %159 = arith.mulf %153, %153 : vector<1x512xf32>
    %160 = arith.subf %158, %159 : vector<1x512xf32>
    %cst_108 = arith.constant 9.99999974E-6 : f32
    %161 = vector.broadcast %cst_108 : f32 to vector<1x512xf32>
    %162 = arith.addf %160, %161 : vector<1x512xf32>
    %163 = math.rsqrt %162 : vector<1x512xf32>
    %164 = arith.mulf %148, %163 : vector<1x512xf32>
    %165 = arith.mulf %153, %164 : vector<1x512xf32>
    %166 = arith.subf %149, %165 : vector<1x512xf32>
    %167 = vector.broadcast %164 : vector<1x512xf32> to vector<128x512xf32>
    %168 = arith.mulf %147, %167 : vector<128x512xf32>
    %169 = vector.broadcast %166 : vector<1x512xf32> to vector<128x512xf32>
    %170 = arith.addf %168, %169 : vector<128x512xf32>
    %c0_109 = arith.constant 0 : index
    %c0_110 = arith.constant 0 : index
    %171 = vector.load %arg10[%c0_109, %c0_110] : memref<128x512xf32, #tpu.memory_space<vmem>>, vector<128x512xf32>
    tpu.vector_store %arg10[%c0_109, %c0_110], %170 {strides = array<i32>} : memref<128x512xf32, #tpu.memory_space<vmem>>, vector<128x512xf32>,
    return
  }
}

</mosaic_0001>

<llo_original>
// kernel: single_layer_model.1
$region0: #{single_layer_model.1}
  #allocation0 [shape = 'u32[]', space=smem, size = 0x4, offset = 0x4, fixed_abs, tag = 'smem constant byte address 0x4 - core index']
  #allocation1 [shape = 'u32[144,128]{1,0:T(1,128)}', space=vmem, size = 0x12000, scoped, tag = 'internal scratch']
  #allocation2 [shape = 'bf16[2,512,512]{2,1,0:T(16,128)(2,1)}', space=vmem, size = 0x100000, scoped, tag = 'scratch operand']
  #allocation3 [shape = 's32[2]{0}', space=sflag, size = 0x8, scoped, tag = 'scratch operand']
  #allocation20 [shape = 's32[]', space=sflag, size = 0x4, offset = 0, fixed_abs, tag = 'sflag constant byte address 0x0 - dummy sync flag']
  #allocation22 [shape = 's32[]', space=sflag, size = 0x4, offset = 0, fixed_abs, tag = 'sflag constant byte address 0x0 - dummy sync flag']
  #allocation24 [shape = 's32[]', space=sflag, size = 0x4, offset = 0, fixed_abs, tag = 'sflag constant byte address 0x0 - dummy sync flag']
  #allocation26 [shape = 's32[]', space=sflag, size = 0x4, offset = 0, fixed_abs, tag = 'sflag constant byte address 0x0 - dummy sync flag']
  %s0 = inlined_call_operand.hbm [shape: bf16[128,512], index: 0, kind: input, shape index: {}]
  %s1 = inlined_call_operand.hbm [shape: bf16[4,512,512], index: 1, kind: input, shape index: {}]
  %s2 = inlined_call_operand.hbm [shape: f32[1,512], index: 2, kind: input, shape index: {}]
  %s3 = inlined_call_operand.hbm [shape: f32[1,512], index: 3, kind: input, shape index: {}]
  %s4 = inlined_call_operand.hbm [shape: f32[1,512], index: 4, kind: input, shape index: {}]
  %s5 = inlined_call_operand.hbm [shape: f32[1,512], index: 5, kind: input, shape index: {}]
  %s6 = inlined_call_operand.hbm [shape: f32[1,512], index: 6, kind: input, shape index: {}]
  %s7 = inlined_call_operand.hbm [shape: f32[1,512], index: 7, kind: input, shape index: {}]
  %s8 = inlined_call_operand.hbm [shape: f32[1,512], index: 8, kind: input, shape index: {}]
  %s9 = inlined_call_operand.hbm [shape: f32[1,512], index: 9, kind: input, shape index: {}]
  %s10 = inlined_call_operand.hbm [shape: f32[128,512], index: 10, kind: output, shape index: {}]
  %s11 = sld [smem:[#allocation0]]
  $region82: #{single_layer_model.1} parent=0
    _
  %s13 = ssub.s32 1, %s11
  %s14 = scalar_select 0, %s13, %s11
  $region1: #{single_layer_model.1} parent=0
    #allocation4 [shape = 'u8[131072]{0}', space=vmem, size = 0x20000, scoped, tag = 'input window, operand 0, single buffered']
    #allocation5 [shape = 's32[1]{0}', space=sflag, size = 0x4, scoped, tag = 'scoped memory for single_layer_model.1']
    #allocation6 [shape = 's32[1]{0}', space=sflag, size = 0x4, scoped, tag = 'scoped memory for single_layer_model.1']
    #allocation7 [shape = 'u8[2048]{0}', space=vmem, size = 0x800, scoped, tag = 'input window, operand 2, single buffered']
    #allocation8 [shape = 's32[1]{0}', space=sflag, size = 0x4, scoped, tag = 'scoped memory for single_layer_model.1']
    #allocation9 [shape = 'u8[2048]{0}', space=vmem, size = 0x800, scoped, tag = 'input window, operand 3, single buffered']
    #allocation10 [shape = 'u8[2048]{0}', space=vmem, size = 0x800, scoped, tag = 'input window, operand 4, single buffered']
    #allocation11 [shape = 's32[1]{0}', space=sflag, size = 0x4, scoped, tag = 'scoped memory for single_layer_model.1']
    #allocation12 [shape = 'u8[2048]{0}', space=vmem, size = 0x800, scoped, tag = 'input window, operand 5, single buffered']
    #allocation13 [shape = 'u8[2048]{0}', space=vmem, size = 0x800, scoped, tag = 'input window, operand 6, single buffered']
    #allocation14 [shape = 's32[1]{0}', space=sflag, size = 0x4, scoped, tag = 'scoped memory for single_layer_model.1']
    #allocation15 [shape = 'u8[2048]{0}', space=vmem, size = 0x800, scoped, tag = 'input window, operand 7, single buffered']
    #allocation16 [shape = 'u8[2048]{0}', space=vmem, size = 0x800, scoped, tag = 'input window, operand 8, single buffered']
    #allocation17 [shape = 's32[1]{0}', space=sflag, size = 0x4, scoped, tag = 'scoped memory for single_layer_model.1']
    #allocation18 [shape = 'u8[2048]{0}', space=vmem, size = 0x800, scoped, tag = 'input window, operand 9, single buffered']
    #allocation19 [shape = 'u8[262144]{0}', space=vmem, size = 0x40000, scoped, tag = 'output window, operand 0, single buffered']
    #allocation21 [shape = 'u32[9]{0}', space=smem, size = 0x24, scoped, tag = 'DMA stride descriptor']
    #allocation23 [shape = 'u32[9]{0}', space=smem, size = 0x24, scoped, tag = 'DMA stride descriptor']
    #allocation25 [shape = 'u32[9]{0}', space=smem, size = 0x24, scoped, tag = 'DMA stride descriptor']
    #allocation27 [shape = 'u32[9]{0}', space=smem, size = 0x24, scoped, tag = 'DMA stride descriptor']
    %15 = vsyncpa [#allocation5], 0
    %16 = vsyncpa [#allocation8], 0
    %17 = vsyncpa [#allocation11], 0
    %18 = vsyncpa [#allocation14], 0
    %19 = vsyncpa [#allocation17], 0
    %20 = vsyncpa [#allocation6], 0
    // Predicated region
    $region2: #{single_layer_model.1} parent=1 // pred_check
      _
    $region3: #{single_layer_model.1} parent=1 // pred_check_branch
      %22 = sbr.rel (0) target = $region5
    $region4: #{single_layer_model.1} parent=1 // pred_region
      %s24 = ssub.s32 4096, 4096
      %25 = vsyncadd [#allocation5], %s24
      %s26 = sshll.u32 [#allocation4], 4
      %s27 = int_to_ptr.vmem [resolvable:$true] %s26
      %32 = dma.hbm_to_vmem [thread:$0]  %s0, 4096, %s27, [#allocation5], 256, 256, 16
    $region5: #{single_layer_model.1} parent=1 // pred_fallthru
      _
    // Predicated region
    $region6: #{single_layer_model.1} parent=1 // pred_check
      _
    $region7: #{single_layer_model.1} parent=1 // pred_check_branch
      %34 = sbr.rel (0) target = $region9
    $region8: #{single_layer_model.1} parent=1 // pred_region
      %s36 = ssub.s32 64, 64
      %37 = vsyncadd [#allocation8], %s36
      %s39 = sshll.u32 [#allocation7], 4
      %s40 = int_to_ptr.vmem [resolvable:$true] %s39
      %42 = dma.hbm_to_vmem [thread:$0]  %s2, 64, %s40, [#allocation8]
    $region9: #{single_layer_model.1} parent=1 // pred_fallthru
      _
    // Predicated region
    $region10: #{single_layer_model.1} parent=1 // pred_check
      _
    $region11: #{single_layer_model.1} parent=1 // pred_check_branch
      %44 = sbr.rel (0) target = $region13
    $region12: #{single_layer_model.1} parent=1 // pred_region
      %s46 = ssub.s32 64, 64
      %47 = vsyncadd [#allocation8], %s46
      %s49 = sshll.u32 [#allocation9], 4
      %s50 = int_to_ptr.vmem [resolvable:$true] %s49
      %52 = dma.hbm_to_vmem [thread:$0]  %s3, 64, %s50, [#allocation8]
    $region13: #{single_layer_model.1} parent=1 // pred_fallthru
      _
    // Predicated region
    $region14: #{single_layer_model.1} parent=1 // pred_check
      _
    $region15: #{single_layer_model.1} parent=1 // pred_check_branch
      %54 = sbr.rel (0) target = $region17
    $region16: #{single_layer_model.1} parent=1 // pred_region
      %s56 = ssub.s32 64, 64
      %57 = vsyncadd [#allocation11], %s56
      %s59 = sshll.u32 [#allocation10], 4
      %s60 = int_to_ptr.vmem [resolvable:$true] %s59
      %62 = dma.hbm_to_vmem [thread:$0]  %s4, 64, %s60, [#allocation11]
    $region17: #{single_layer_model.1} parent=1 // pred_fallthru
      _
    // Predicated region
    $region18: #{single_layer_model.1} parent=1 // pred_check
      _
    $region19: #{single_layer_model.1} parent=1 // pred_check_branch
      %64 = sbr.rel (0) target = $region21
    $region20: #{single_layer_model.1} parent=1 // pred_region
      %s66 = ssub.s32 64, 64
      %67 = vsyncadd [#allocation11], %s66
      %s69 = sshll.u32 [#allocation12], 4
      %s70 = int_to_ptr.vmem [resolvable:$true] %s69
      %72 = dma.hbm_to_vmem [thread:$0]  %s5, 64, %s70, [#allocation11]
    $region21: #{single_layer_model.1} parent=1 // pred_fallthru
      _
    // Predicated region
    $region22: #{single_layer_model.1} parent=1 // pred_check
      _
    $region23: #{single_layer_model.1} parent=1 // pred_check_branch
      %74 = sbr.rel (0) target = $region25
    $region24: #{single_layer_model.1} parent=1 // pred_region
      %s76 = ssub.s32 64, 64
      %77 = vsyncadd [#allocation14], %s76
      %s79 = sshll.u32 [#allocation13], 4
      %s80 = int_to_ptr.vmem [resolvable:$true] %s79
      %82 = dma.hbm_to_vmem [thread:$0]  %s6, 64, %s80, [#allocation14]
    $region25: #{single_layer_model.1} parent=1 // pred_fallthru
      _
    // Predicated region
    $region26: #{single_layer_model.1} parent=1 // pred_check
      _
    $region27: #{single_layer_model.1} parent=1 // pred_check_branch
      %84 = sbr.rel (0) target = $region29
    $region28: #{single_layer_model.1} parent=1 // pred_region
      %s86 = ssub.s32 64, 64
      %87 = vsyncadd [#allocation14], %s86
      %s89 = sshll.u32 [#allocation15], 4
      %s90 = int_to_ptr.vmem [resolvable:$true] %s89
      %92 = dma.hbm_to_vmem [thread:$0]  %s7, 64, %s90, [#allocation14]
    $region29: #{single_layer_model.1} parent=1 // pred_fallthru
      _
    // Predicated region
    $region30: #{single_layer_model.1} parent=1 // pred_check
      _
    $region31: #{single_layer_model.1} parent=1 // pred_check_branch
      %94 = sbr.rel (0) target = $region33
    $region32: #{single_layer_model.1} parent=1 // pred_region
      %s96 = ssub.s32 64, 64
      %97 = vsyncadd [#allocation17], %s96
      %s99 = sshll.u32 [#allocation16], 4
      %s100 = int_to_ptr.vmem [resolvable:$true] %s99
      %102 = dma.hbm_to_vmem [thread:$0]  %s8, 64, %s100, [#allocation17]
    $region33: #{single_layer_model.1} parent=1 // pred_fallthru
      _
    // Predicated region
    $region34: #{single_layer_model.1} parent=1 // pred_check
      _
    $region35: #{single_layer_model.1} parent=1 // pred_check_branch
      %104 = sbr.rel (0) target = $region37
    $region36: #{single_layer_model.1} parent=1 // pred_region
      %s106 = ssub.s32 64, 64
      %107 = vsyncadd [#allocation17], %s106
      %s109 = sshll.u32 [#allocation18], 4
      %s110 = int_to_ptr.vmem [resolvable:$true] %s109
      %112 = dma.hbm_to_vmem [thread:$0]  %s9, 64, %s110, [#allocation17]
    $region37: #{single_layer_model.1} parent=1 // pred_fallthru
      _
    // Predicated region
    $region38: #{single_layer_model.1} parent=1 // pred_check
      _
    $region39: #{single_layer_model.1} parent=1 // pred_check_branch
      %114 = sbr.rel (0) target = $region41
    $region40: #{single_layer_model.1} parent=1 // pred_region
      %115 = dma.done [#allocation5], 4096
    $region41: #{single_layer_model.1} parent=1 // pred_fallthru
      _
    // Predicated region
    $region42: #{single_layer_model.1} parent=1 // pred_check
      _
    $region43: #{single_layer_model.1} parent=1 // pred_check_branch
      %117 = sbr.rel (0) target = $region45
    $region44: #{single_layer_model.1} parent=1 // pred_region
      %118 = dma.done [#allocation8], 64
    $region45: #{single_layer_model.1} parent=1 // pred_fallthru
      _
    // Predicated region
    $region46: #{single_layer_model.1} parent=1 // pred_check
      _
    $region47: #{single_layer_model.1} parent=1 // pred_check_branch
      %120 = sbr.rel (0) target = $region49
    $region48: #{single_layer_model.1} parent=1 // pred_region
      %121 = dma.done [#allocation8], 64
    $region49: #{single_layer_model.1} parent=1 // pred_fallthru
      _
    // Predicated region
    $region50: #{single_layer_model.1} parent=1 // pred_check
      _
    $region51: #{single_layer_model.1} parent=1 // pred_check_branch
      %123 = sbr.rel (0) target = $region53
    $region52: #{single_layer_model.1} parent=1 // pred_region
      %124 = dma.done [#allocation11], 64
    $region53: #{single_layer_model.1} parent=1 // pred_fallthru
      _
    // Predicated region
    $region54: #{single_layer_model.1} parent=1 // pred_check
      _
    $region55: #{single_layer_model.1} parent=1 // pred_check_branch
      %126 = sbr.rel (0) target = $region57
    $region56: #{single_layer_model.1} parent=1 // pred_region
      %127 = dma.done [#allocation11], 64
    $region57: #{single_layer_model.1} parent=1 // pred_fallthru
      _
    // Predicated region
    $region58: #{single_layer_model.1} parent=1 // pred_check
      _
    $region59: #{single_layer_model.1} parent=1 // pred_check_branch
      %129 = sbr.rel (0) target = $region61
    $region60: #{single_layer_model.1} parent=1 // pred_region
      %130 = dma.done [#allocation14], 64
    $region61: #{single_layer_model.1} parent=1 // pred_fallthru
      _
    // Predicated region
    $region62: #{single_layer_model.1} parent=1 // pred_check
      _
    $region63: #{single_layer_model.1} parent=1 // pred_check_branch
      %132 = sbr.rel (0) target = $region65
    $region64: #{single_layer_model.1} parent=1 // pred_region
      %133 = dma.done [#allocation14], 64
    $region65: #{single_layer_model.1} parent=1 // pred_fallthru
      _
    // Predicated region
    $region66: #{single_layer_model.1} parent=1 // pred_check
      _
    $region67: #{single_layer_model.1} parent=1 // pred_check_branch
      %135 = sbr.rel (0) target = $region69
    $region68: #{single_layer_model.1} parent=1 // pred_region
      %136 = dma.done [#allocation17], 64
    $region69: #{single_layer_model.1} parent=1 // pred_fallthru
      _
    // Predicated region
    $region70: #{single_layer_model.1} parent=1 // pred_check
      _
    $region71: #{single_layer_model.1} parent=1 // pred_check_branch
      %138 = sbr.rel (0) target = $region73
    $region72: #{single_layer_model.1} parent=1 // pred_region
      %139 = dma.done [#allocation17], 64
    $region73: #{single_layer_model.1} parent=1 // pred_fallthru
      _
    %s141 = sshll.u32 1, 14
    %s142 = sxor.u32 4294967295, %s141
    %s144 = sld [smem:[#allocation0]]
    %s145 = sadd.s32 2, %s144
    %s147 = sshll.u32 7, 26
    %s148 = sxor.u32 4294967295, %s147
    %s149 = sand.u32 0, %s148
    %s150 = sshll.u32 %s145, 26
    %s151 = sor.u32 %s149, %s150
    %s152 = sshll.u32 [#allocation2], 4
    %s153 = int_to_ptr.vmem [resolvable:$true] %s152
    %156 = sst [smem:[#allocation21]] 512
    %s157 = scalar_lea.smem [#allocation21], 1
    %158 = sst [smem:[%s157]] 512
    %s159 = scalar_lea.smem [#allocation21], 2
    %160 = sst [smem:[%s159]] 4
    %s161 = scalar_lea.smem [#allocation21], 3
    %162 = sst [smem:[%s161]] 64
    %s163 = scalar_lea.smem [#allocation21], 4
    %164 = sst [smem:[%s163]] 128
    %s165 = scalar_lea.smem [#allocation21], 5
    %166 = sst [smem:[%s165]] 2
    %s167 = scalar_lea.smem [#allocation21], 6
    %168 = sst [smem:[%s167]] 256
    %s169 = scalar_lea.smem [#allocation21], 7
    %170 = sst [smem:[%s169]] 64
    %s171 = scalar_lea.smem [#allocation21], 8
    %172 = sst [smem:[%s171]] 4
    %174 = dma.general %s1, 16384, %s153, [#allocation3], [#allocation20], [#allocation21], %s151, 0
    %v175 = vld [vmem:[#allocation4] sm:$0xff]
    %v176 = vld [vmem:[#allocation4 + $0x8] sm:$0xff]
    %v177 = vld [vmem:[#allocation4 + $0x10] sm:$0xff]
    %v178 = vld [vmem:[#allocation4 + $0x18] sm:$0xff]
    %v179 = vld [vmem:[#allocation4 + $0x20] sm:$0xff]
    %v180 = vld [vmem:[#allocation4 + $0x28] sm:$0xff]
    %v181 = vld [vmem:[#allocation4 + $0x30] sm:$0xff]
    %v182 = vld [vmem:[#allocation4 + $0x38] sm:$0xff]
    %v183 = vld [vmem:[#allocation4 + $0x40] sm:$0xff]
    %v184 = vld [vmem:[#allocation4 + $0x48] sm:$0xff]
    %v185 = vld [vmem:[#allocation4 + $0x50] sm:$0xff]
    %v186 = vld [vmem:[#allocation4 + $0x58] sm:$0xff]
    %v187 = vld [vmem:[#allocation4 + $0x60] sm:$0xff]
    %v188 = vld [vmem:[#allocation4 + $0x68] sm:$0xff]
    %v189 = vld [vmem:[#allocation4 + $0x70] sm:$0xff]
    %v190 = vld [vmem:[#allocation4 + $0x78] sm:$0xff]
    %v191 = vld [vmem:[#allocation4 + $0x80] sm:$0xff]
    %v192 = vld [vmem:[#allocation4 + $0x88] sm:$0xff]
    %v193 = vld [vmem:[#allocation4 + $0x90] sm:$0xff]
    %v194 = vld [vmem:[#allocation4 + $0x98] sm:$0xff]
    %v195 = vld [vmem:[#allocation4 + $0xa0] sm:$0xff]
    %v196 = vld [vmem:[#allocation4 + $0xa8] sm:$0xff]
    %v197 = vld [vmem:[#allocation4 + $0xb0] sm:$0xff]
    %v198 = vld [vmem:[#allocation4 + $0xb8] sm:$0xff]
    %v199 = vld [vmem:[#allocation4 + $0xc0] sm:$0xff]
    %v200 = vld [vmem:[#allocation4 + $0xc8] sm:$0xff]
    %v201 = vld [vmem:[#allocation4 + $0xd0] sm:$0xff]
    %v202 = vld [vmem:[#allocation4 + $0xd8] sm:$0xff]
    %v203 = vld [vmem:[#allocation4 + $0xe0] sm:$0xff]
    %v204 = vld [vmem:[#allocation4 + $0xe8] sm:$0xff]
    %v205 = vld [vmem:[#allocation4 + $0xf0] sm:$0xff]
    %v206 = vld [vmem:[#allocation4 + $0xf8] sm:$0xff]
    %s207 = smul.u32 4, 64
    %s208 = smul.u32 %s207, 4
    %s209 = sshll.u32 %s208, 4
    %210 = dma.done [#allocation3], %s209
    %s211 = scalar_lea.hbm %s1, 16384
    %s212 = scalar_lea.vmem [#allocation2], 1024
    %s213 = scalar_lea.sflag [#allocation3], 1
    %s215 = sshll.u32 1, 14
    %s216 = sxor.u32 4294967295, %s215
    %s218 = sadd.s32 2, %s144
    %s220 = sshll.u32 7, 26
    %s221 = sxor.u32 4294967295, %s220
    %s222 = sand.u32 0, %s221
    %s223 = sshll.u32 %s218, 26
    %s224 = sor.u32 %s222, %s223
    %s225 = sshll.u32 %s212, 4
    %s226 = int_to_ptr.vmem [resolvable:$true] %s225
    %229 = sst [smem:[#allocation23]] 512
    %s230 = scalar_lea.smem [#allocation23], 1
    %231 = sst [smem:[%s230]] 512
    %s232 = scalar_lea.smem [#allocation23], 2
    %233 = sst [smem:[%s232]] 4
    %s234 = scalar_lea.smem [#allocation23], 3
    %235 = sst [smem:[%s234]] 64
    %s236 = scalar_lea.smem [#allocation23], 4
    %237 = sst [smem:[%s236]] 128
    %s238 = scalar_lea.smem [#allocation23], 5
    %239 = sst [smem:[%s238]] 2
    %s240 = scalar_lea.smem [#allocation23], 6
    %241 = sst [smem:[%s240]] 256
    %s242 = scalar_lea.smem [#allocation23], 7
    %243 = sst [smem:[%s242]] 64
    %s244 = scalar_lea.smem [#allocation23], 8
    %245 = sst [smem:[%s244]] 4
    %247 = dma.general %s211, 16384, %s226, %s213, [#allocation22], [#allocation23], %s224, 0
    %v248 = vld [vmem:[#allocation2] sm:$0xff]
    %v249 = vld [vmem:[#allocation2 + $0x8] sm:$0xff]
    %v250 = vld [vmem:[#allocation2 + $0x10] sm:$0xff]
    %v251 = vld [vmem:[#allocation2 + $0x18] sm:$0xff]
    %v252 = vld [vmem:[#allocation2 + $0x20] sm:$0xff]
    %v253 = vld [vmem:[#allocation2 + $0x28] sm:$0xff]
    %v254 = vld [vmem:[#allocation2 + $0x30] sm:$0xff]
    %v255 = vld [vmem:[#allocation2 + $0x38] sm:$0xff]
    %v256 = vld [vmem:[#allocation2 + $0x40] sm:$0xff]
    %v257 = vld [vmem:[#allocation2 + $0x48] sm:$0xff]
    %v258 = vld [vmem:[#allocation2 + $0x50] sm:$0xff]
    %v259 = vld [vmem:[#allocation2 + $0x58] sm:$0xff]
    %v260 = vld [vmem:[#allocation2 + $0x60] sm:$0xff]
    %v261 = vld [vmem:[#allocation2 + $0x68] sm:$0xff]
    %v262 = vld [vmem:[#allocation2 + $0x70] sm:$0xff]
    %v263 = vld [vmem:[#allocation2 + $0x78] sm:$0xff]
    %v264 = vld [vmem:[#allocation2 + $0x80] sm:$0xff]
    %v265 = vld [vmem:[#allocation2 + $0x88] sm:$0xff]
    %v266 = vld [vmem:[#allocation2 + $0x90] sm:$0xff]
    %v267 = vld [vmem:[#allocation2 + $0x98] sm:$0xff]
    %v268 = vld [vmem:[#allocation2 + $0xa0] sm:$0xff]
    %v269 = vld [vmem:[#allocation2 + $0xa8] sm:$0xff]
    %v270 = vld [vmem:[#allocation2 + $0xb0] sm:$0xff]
    %v271 = vld [vmem:[#allocation2 + $0xb8] sm:$0xff]
    %v272 = vld [vmem:[#allocation2 + $0xc0] sm:$0xff]
    %v273 = vld [vmem:[#allocation2 + $0xc8] sm:$0xff]
    %v274 = vld [vmem:[#allocation2 + $0xd0] sm:$0xff]
    %v275 = vld [vmem:[#allocation2 + $0xd8] sm:$0xff]
    %v276 = vld [vmem:[#allocation2 + $0xe0] sm:$0xff]
    %v277 = vld [vmem:[#allocation2 + $0xe8] sm:$0xff]
    %v278 = vld [vmem:[#allocation2 + $0xf0] sm:$0xff]
    %v279 = vld [vmem:[#allocation2 + $0xf8] sm:$0xff]
    %v280 = vld [vmem:[#allocation2 + $0x100] sm:$0xff]
    %v281 = vld [vmem:[#allocation2 + $0x108] sm:$0xff]
    %v282 = vld [vmem:[#allocation2 + $0x110] sm:$0xff]
    %v283 = vld [vmem:[#allocation2 + $0x118] sm:$0xff]
    %v284 = vld [vmem:[#allocation2 + $0x120] sm:$0xff]
    %v285 = vld [vmem:[#allocation2 + $0x128] sm:$0xff]
    %v286 = vld [vmem:[#allocation2 + $0x130] sm:$0xff]
    %v287 = vld [vmem:[#allocation2 + $0x138] sm:$0xff]
    %v288 = vld [vmem:[#allocation2 + $0x140] sm:$0xff]
    %v289 = vld [vmem:[#allocation2 + $0x148] sm:$0xff]
    %v290 = vld [vmem:[#allocation2 + $0x150] sm:$0xff]
    %v291 = vld [vmem:[#allocation2 + $0x158] sm:$0xff]
    %v292 = vld [vmem:[#allocation2 + $0x160] sm:$0xff]
    %v293 = vld [vmem:[#allocation2 + $0x168] sm:$0xff]
    %v294 = vld [vmem:[#allocation2 + $0x170] sm:$0xff]
    %v295 = vld [vmem:[#allocation2 + $0x178] sm:$0xff]
    %v296 = vld [vmem:[#allocation2 + $0x180] sm:$0xff]
    %v297 = vld [vmem:[#allocation2 + $0x188] sm:$0xff]
    %v298 = vld [vmem:[#allocation2 + $0x190] sm:$0xff]
    %v299 = vld [vmem:[#allocation2 + $0x198] sm:$0xff]
    %v300 = vld [vmem:[#allocation2 + $0x1a0] sm:$0xff]
    %v301 = vld [vmem:[#allocation2 + $0x1a8] sm:$0xff]
    %v302 = vld [vmem:[#allocation2 + $0x1b0] sm:$0xff]
    %v303 = vld [vmem:[#allocation2 + $0x1b8] sm:$0xff]
    %v304 = vld [vmem:[#allocation2 + $0x1c0] sm:$0xff]
    %v305 = vld [vmem:[#allocation2 + $0x1c8] sm:$0xff]
    %v306 = vld [vmem:[#allocation2 + $0x1d0] sm:$0xff]
    %v307 = vld [vmem:[#allocation2 + $0x1d8] sm:$0xff]
    %v308 = vld [vmem:[#allocation2 + $0x1e0] sm:$0xff]
    %v309 = vld [vmem:[#allocation2 + $0x1e8] sm:$0xff]
    %v310 = vld [vmem:[#allocation2 + $0x1f0] sm:$0xff]
    %v311 = vld [vmem:[#allocation2 + $0x1f8] sm:$0xff]
    %v312 = vld [vmem:[#allocation2 + $0x200] sm:$0xff]
    %v313 = vld [vmem:[#allocation2 + $0x208] sm:$0xff]
    %v314 = vld [vmem:[#allocation2 + $0x210] sm:$0xff]
    %v315 = vld [vmem:[#allocation2 + $0x218] sm:$0xff]
    %v316 = vld [vmem:[#allocation2 + $0x220] sm:$0xff]
    %v317 = vld [vmem:[#allocation2 + $0x228] sm:$0xff]
    %v318 = vld [vmem:[#allocation2 + $0x230] sm:$0xff]
    %v319 = vld [vmem:[#allocation2 + $0x238] sm:$0xff]
    %v320 = vld [vmem:[#allocation2 + $0x240] sm:$0xff]
    %v321 = vld [vmem:[#allocation2 + $0x248] sm:$0xff]
    %v322 = vld [vmem:[#allocation2 + $0x250] sm:$0xff]
    %v323 = vld [vmem:[#allocation2 + $0x258] sm:$0xff]
    %v324 = vld [vmem:[#allocation2 + $0x260] sm:$0xff]
    %v325 = vld [vmem:[#allocation2 + $0x268] sm:$0xff]
    %v326 = vld [vmem:[#allocation2 + $0x270] sm:$0xff]
    %v327 = vld [vmem:[#allocation2 + $0x278] sm:$0xff]
    %v328 = vld [vmem:[#allocation2 + $0x280] sm:$0xff]
    %v329 = vld [vmem:[#allocation2 + $0x288] sm:$0xff]
    %v330 = vld [vmem:[#allocation2 + $0x290] sm:$0xff]
    %v331 = vld [vmem:[#allocation2 + $0x298] sm:$0xff]
    %v332 = vld [vmem:[#allocation2 + $0x2a0] sm:$0xff]
    %v333 = vld [vmem:[#allocation2 + $0x2a8] sm:$0xff]
    %v334 = vld [vmem:[#allocation2 + $0x2b0] sm:$0xff]
    %v335 = vld [vmem:[#allocation2 + $0x2b8] sm:$0xff]
    %v336 = vld [vmem:[#allocation2 + $0x2c0] sm:$0xff]
    %v337 = vld [vmem:[#allocation2 + $0x2c8] sm:$0xff]
    %v338 = vld [vmem:[#allocation2 + $0x2d0] sm:$0xff]
    %v339 = vld [vmem:[#allocation2 + $0x2d8] sm:$0xff]
    %v340 = vld [vmem:[#allocation2 + $0x2e0] sm:$0xff]
    %v341 = vld [vmem:[#allocation2 + $0x2e8] sm:$0xff]
    %v342 = vld [vmem:[#allocation2 + $0x2f0] sm:$0xff]
    %v343 = vld [vmem:[#allocation2 + $0x2f8] sm:$0xff]
    %v344 = vld [vmem:[#allocation2 + $0x300] sm:$0xff]
    %v345 = vld [vmem:[#allocation2 + $0x308] sm:$0xff]
    %v346 = vld [vmem:[#allocation2 + $0x310] sm:$0xff]
    %v347 = vld [vmem:[#allocation2 + $0x318] sm:$0xff]
    %v348 = vld [vmem:[#allocation2 + $0x320] sm:$0xff]
    %v349 = vld [vmem:[#allocation2 + $0x328] sm:$0xff]
    %v350 = vld [vmem:[#allocation2 + $0x330] sm:$0xff]
    %v351 = vld [vmem:[#allocation2 + $0x338] sm:$0xff]
    %v352 = vld [vmem:[#allocation2 + $0x340] sm:$0xff]
    %v353 = vld [vmem:[#allocation2 + $0x348] sm:$0xff]
    %v354 = vld [vmem:[#allocation2 + $0x350] sm:$0xff]
    %v355 = vld [vmem:[#allocation2 + $0x358] sm:$0xff]
    %v356 = vld [vmem:[#allocation2 + $0x360] sm:$0xff]
    %v357 = vld [vmem:[#allocation2 + $0x368] sm:$0xff]
    %v358 = vld [vmem:[#allocation2 + $0x370] sm:$0xff]
    %v359 = vld [vmem:[#allocation2 + $0x378] sm:$0xff]
    %v360 = vld [vmem:[#allocation2 + $0x380] sm:$0xff]
    %v361 = vld [vmem:[#allocation2 + $0x388] sm:$0xff]
    %v362 = vld [vmem:[#allocation2 + $0x390] sm:$0xff]
    %v363 = vld [vmem:[#allocation2 + $0x398] sm:$0xff]
    %v364 = vld [vmem:[#allocation2 + $0x3a0] sm:$0xff]
    %v365 = vld [vmem:[#allocation2 + $0x3a8] sm:$0xff]
    %v366 = vld [vmem:[#allocation2 + $0x3b0] sm:$0xff]
    %v367 = vld [vmem:[#allocation2 + $0x3b8] sm:$0xff]
    %v368 = vld [vmem:[#allocation2 + $0x3c0] sm:$0xff]
    %v369 = vld [vmem:[#allocation2 + $0x3c8] sm:$0xff]
    %v370 = vld [vmem:[#allocation2 + $0x3d0] sm:$0xff]
    %v371 = vld [vmem:[#allocation2 + $0x3d8] sm:$0xff]
    %v372 = vld [vmem:[#allocation2 + $0x3e0] sm:$0xff]
    %v373 = vld [vmem:[#allocation2 + $0x3e8] sm:$0xff]
    %v374 = vld [vmem:[#allocation2 + $0x3f0] sm:$0xff]
    %v375 = vld [vmem:[#allocation2 + $0x3f8] sm:$0xff]
    %v408 = vunpack.c.l.b16 %v175
    %v409 = vunpack.c.h.b16 %v175
    %v410 = vunpack.c.l.b16 %v176
    %v411 = vunpack.c.h.b16 %v176
    %v412 = vunpack.c.l.b16 %v177
    %v413 = vunpack.c.h.b16 %v177
    %v414 = vunpack.c.l.b16 %v178
    %v415 = vunpack.c.h.b16 %v178
    %v416 = vunpack.c.l.b16 %v179
    %v417 = vunpack.c.h.b16 %v179
    %v418 = vunpack.c.l.b16 %v180
    %v419 = vunpack.c.h.b16 %v180
    %v420 = vunpack.c.l.b16 %v181
    %v421 = vunpack.c.h.b16 %v181
    %v422 = vunpack.c.l.b16 %v182
    %v423 = vunpack.c.h.b16 %v182
    %v424 = vunpack.c.l.b16 %v183
    %v425 = vunpack.c.h.b16 %v183
    %v426 = vunpack.c.l.b16 %v184
    %v427 = vunpack.c.h.b16 %v184
    %v428 = vunpack.c.l.b16 %v185
    %v429 = vunpack.c.h.b16 %v185
    %v430 = vunpack.c.l.b16 %v186
    %v431 = vunpack.c.h.b16 %v186
    %v432 = vunpack.c.l.b16 %v187
    %v433 = vunpack.c.h.b16 %v187
    %v434 = vunpack.c.l.b16 %v188
    %v435 = vunpack.c.h.b16 %v188
    %v436 = vunpack.c.l.b16 %v189
    %v437 = vunpack.c.h.b16 %v189
    %v438 = vunpack.c.l.b16 %v190
    %v439 = vunpack.c.h.b16 %v190
    %v440 = vunpack.c.l.b16 %v191
    %v441 = vunpack.c.h.b16 %v191
    %v442 = vunpack.c.l.b16 %v192
    %v443 = vunpack.c.h.b16 %v192
    %v444 = vunpack.c.l.b16 %v193
    %v445 = vunpack.c.h.b16 %v193
    %v446 = vunpack.c.l.b16 %v194
    %v447 = vunpack.c.h.b16 %v194
    %v448 = vunpack.c.l.b16 %v195
    %v449 = vunpack.c.h.b16 %v195
    %v450 = vunpack.c.l.b16 %v196
    %v451 = vunpack.c.h.b16 %v196
    %v452 = vunpack.c.l.b16 %v197
    %v453 = vunpack.c.h.b16 %v197
    %v454 = vunpack.c.l.b16 %v198
    %v455 = vunpack.c.h.b16 %v198
    %v456 = vunpack.c.l.b16 %v199
    %v457 = vunpack.c.h.b16 %v199
    %v458 = vunpack.c.l.b16 %v200
    %v459 = vunpack.c.h.b16 %v200
    %v460 = vunpack.c.l.b16 %v201
    %v461 = vunpack.c.h.b16 %v201
    %v462 = vunpack.c.l.b16 %v202
    %v463 = vunpack.c.h.b16 %v202
    %v464 = vunpack.c.l.b16 %v203
    %v465 = vunpack.c.h.b16 %v203
    %v466 = vunpack.c.l.b16 %v204
    %v467 = vunpack.c.h.b16 %v204
    %v468 = vunpack.c.l.b16 %v205
    %v469 = vunpack.c.h.b16 %v205
    %v470 = vunpack.c.l.b16 %v206
    %v471 = vunpack.c.h.b16 %v206
    %v472 = vpack.c.b16 %v412, %v408
    %v473 = vpack.c.b16 %v413, %v409
    %v474 = vpack.c.b16 %v414, %v410
    %v475 = vpack.c.b16 %v415, %v411
    %v476 = vpack.c.b16 %v420, %v416
    %v477 = vpack.c.b16 %v421, %v417
    %v478 = vpack.c.b16 %v422, %v418
    %v479 = vpack.c.b16 %v423, %v419
    %v480 = vpack.c.b16 %v428, %v424
    %v481 = vpack.c.b16 %v429, %v425
    %v482 = vpack.c.b16 %v430, %v426
    %v483 = vpack.c.b16 %v431, %v427
    %v484 = vpack.c.b16 %v436, %v432
    %v485 = vpack.c.b16 %v437, %v433
    %v486 = vpack.c.b16 %v438, %v434
    %v487 = vpack.c.b16 %v439, %v435
    %v488 = vpack.c.b16 %v444, %v440
    %v489 = vpack.c.b16 %v445, %v441
    %v490 = vpack.c.b16 %v446, %v442
    %v491 = vpack.c.b16 %v447, %v443
    %v492 = vpack.c.b16 %v452, %v448
    %v493 = vpack.c.b16 %v453, %v449
    %v494 = vpack.c.b16 %v454, %v450
    %v495 = vpack.c.b16 %v455, %v451
    %v496 = vpack.c.b16 %v460, %v456
    %v497 = vpack.c.b16 %v461, %v457
    %v498 = vpack.c.b16 %v462, %v458
    %v499 = vpack.c.b16 %v463, %v459
    %v500 = vpack.c.b16 %v468, %v464
    %v501 = vpack.c.b16 %v469, %v465
    %v502 = vpack.c.b16 %v470, %v466
    %v503 = vpack.c.b16 %v471, %v467
    %536 = vmatprep.subr.bf16.mxu0 %v249
    %537 = vmatpush1.bf16.msra.mxu0 %v248
    %538 = vmatprep.subr.bf16.mxu0 %v253
    %539 = vmatpush1.bf16.msra.mxu0 %v252
    %540 = vmatprep.subr.bf16.mxu0 %v257
    %541 = vmatpush1.bf16.msra.mxu0 %v256
    %542 = vmatprep.subr.bf16.mxu0 %v261
    %543 = vmatpush1.bf16.msra.mxu0 %v260
    %544 = vmatprep.subr.bf16.mxu0 %v265
    %545 = vmatpush1.bf16.msra.mxu0 %v264
    %546 = vmatprep.subr.bf16.mxu0 %v269
    %547 = vmatpush1.bf16.msra.mxu0 %v268
    %548 = vmatprep.subr.bf16.mxu0 %v273
    %549 = vmatpush1.bf16.msra.mxu0 %v272
    %550 = vmatprep.subr.bf16.mxu0 %v277
    %551 = vmatpush1.bf16.msra.mxu0 %v276
    %552 = vmatprep.subr.bf16.mxu0 %v281
    %553 = vmatpush1.bf16.msra.mxu0 %v280
    %554 = vmatprep.subr.bf16.mxu0 %v285
    %555 = vmatpush1.bf16.msra.mxu0 %v284
    %556 = vmatprep.subr.bf16.mxu0 %v289
    %557 = vmatpush1.bf16.msra.mxu0 %v288
    %558 = vmatprep.subr.bf16.mxu0 %v293
    %559 = vmatpush1.bf16.msra.mxu0 %v292
    %560 = vmatprep.subr.bf16.mxu0 %v297
    %561 = vmatpush1.bf16.msra.mxu0 %v296
    %562 = vmatprep.subr.bf16.mxu0 %v301
    %563 = vmatpush1.bf16.msra.mxu0 %v300
    %564 = vmatprep.subr.bf16.mxu0 %v305
    %565 = vmatpush1.bf16.msra.mxu0 %v304
    %566 = vmatprep.subr.bf16.mxu0 %v309
    %567 = vmatpush1.bf16.msra.mxu0 %v308
    %568 = vmatprep.mubr.bf16.mxu0 %v473
    %569 = vmatmul.mubr.bf16.gmra.mrb[0].mxu0 %v472
    %v570 = vpop.f32.mrb[0].mxu0
    %v571 = vadd.f32 0.0, %v570
    %v572 = vpop.f32.mrb[0].mxu0
    %v573 = vadd.f32 0.0, %v572
    %v574 = vpop.f32.mrb[0].mxu0
    %v575 = vadd.f32 0.0, %v574
    %v576 = vpop.f32.mrb[0].mxu0
    %v577 = vadd.f32 0.0, %v576
    %578 = vmatprep.mubr.bf16.mxu0 %v477
    %579 = vmatmul.mubr.bf16.gmra.mrb[0].mxu0 %v476
    %v580 = vpop.f32.mrb[0].mxu0
    %v581 = vadd.f32 0.0, %v580
    %v582 = vpop.f32.mrb[0].mxu0
    %v583 = vadd.f32 0.0, %v582
    %v584 = vpop.f32.mrb[0].mxu0
    %v585 = vadd.f32 0.0, %v584
    %v586 = vpop.f32.mrb[0].mxu0
    %v587 = vadd.f32 0.0, %v586
    %588 = vmatprep.mubr.bf16.mxu0 %v481
    %589 = vmatmul.mubr.bf16.gmra.mrb[0].mxu0 %v480
    %v590 = vpop.f32.mrb[0].mxu0
    %v591 = vadd.f32 0.0, %v590
    %v592 = vpop.f32.mrb[0].mxu0
    %v593 = vadd.f32 0.0, %v592
    %v594 = vpop.f32.mrb[0].mxu0
    %v595 = vadd.f32 0.0, %v594
    %v596 = vpop.f32.mrb[0].mxu0
    %v597 = vadd.f32 0.0, %v596
    %598 = vmatprep.mubr.bf16.mxu0 %v485
    %599 = vmatmul.mubr.bf16.gmra.mrb[0].mxu0 %v484
    %v600 = vpop.f32.mrb[0].mxu0
    %v601 = vadd.f32 0.0, %v600
    %v602 = vpop.f32.mrb[0].mxu0
    %v603 = vadd.f32 0.0, %v602
    %v604 = vpop.f32.mrb[0].mxu0
    %v605 = vadd.f32 0.0, %v604
    %v606 = vpop.f32.mrb[0].mxu0
    %v607 = vadd.f32 0.0, %v606
    %608 = vmatprep.mubr.bf16.mxu0 %v489
    %609 = vmatmul.mubr.bf16.gmra.mrb[0].mxu0 %v488
    %v610 = vpop.f32.mrb[0].mxu0
    %v611 = vadd.f32 0.0, %v610
    %v612 = vpop.f32.mrb[0].mxu0
    %v613 = vadd.f32 0.0, %v612
    %v614 = vpop.f32.mrb[0].mxu0
    %v615 = vadd.f32 0.0, %v614
    %v616 = vpop.f32.mrb[0].mxu0
    %v617 = vadd.f32 0.0, %v616
    %618 = vmatprep.mubr.bf16.mxu0 %v493
    %619 = vmatmul.mubr.bf16.gmra.mrb[0].mxu0 %v492
    %v620 = vpop.f32.mrb[0].mxu0
    %v621 = vadd.f32 0.0, %v620
    %v622 = vpop.f32.mrb[0].mxu0
    %v623 = vadd.f32 0.0, %v622
    %v624 = vpop.f32.mrb[0].mxu0
    %v625 = vadd.f32 0.0, %v624
    %v626 = vpop.f32.mrb[0].mxu0
    %v627 = vadd.f32 0.0, %v626
    %628 = vmatprep.mubr.bf16.mxu0 %v497
    %629 = vmatmul.mubr.bf16.gmra.mrb[0].mxu0 %v496
    %v630 = vpop.f32.mrb[0].mxu0
    %v631 = vadd.f32 0.0, %v630
    %v632 = vpop.f32.mrb[0].mxu0
    %v633 = vadd.f32 0.0, %v632
    %v634 = vpop.f32.mrb[0].mxu0
    %v635 = vadd.f32 0.0, %v634
    %v636 = vpop.f32.mrb[0].mxu0
    %v637 = vadd.f32 0.0, %v636
    %638 = vmatprep.mubr.bf16.mxu0 %v501
    %639 = vmatmul.mubr.bf16.gmra.mrb[0].mxu0 %v500
    %v640 = vpop.f32.mrb[0].mxu0
    %v641 = vadd.f32 0.0, %v640
    %v642 = vpop.f32.mrb[0].mxu0
    %v643 = vadd.f32 0.0, %v642
    %v644 = vpop.f32.mrb[0].mxu0
    %v645 = vadd.f32 0.0, %v644
    %v646 = vpop.f32.mrb[0].mxu0
    %v647 = vadd.f32 0.0, %v646
    %648 = vdwg.mxu0
    %649 = vmatprep.subr.bf16.mxu0 %v313
    %650 = vmatpush1.bf16.msra.mxu0 %v312
    %651 = vmatprep.subr.bf16.mxu0 %v317
    %652 = vmatpush1.bf16.msra.mxu0 %v316
    %653 = vmatprep.subr.bf16.mxu0 %v321
    %654 = vmatpush1.bf16.msra.mxu0 %v320
    %655 = vmatprep.subr.bf16.mxu0 %v325
    %656 = vmatpush1.bf16.msra.mxu0 %v324
    %657 = vmatprep.subr.bf16.mxu0 %v329
    %658 = vmatpush1.bf16.msra.mxu0 %v328
    %659 = vmatprep.subr.bf16.mxu0 %v333
    %660 = vmatpush1.bf16.msra.mxu0 %v332
    %661 = vmatprep.subr.bf16.mxu0 %v337
    %662 = vmatpush1.bf16.msra.mxu0 %v336
    %663 = vmatprep.subr.bf16.mxu0 %v341
    %664 = vmatpush1.bf16.msra.mxu0 %v340
    %665 = vmatprep.subr.bf16.mxu0 %v345
    %666 = vmatpush1.bf16.msra.mxu0 %v344
    %667 = vmatprep.subr.bf16.mxu0 %v349
    %668 = vmatpush1.bf16.msra.mxu0 %v348
    %669 = vmatprep.subr.bf16.mxu0 %v353
    %670 = vmatpush1.bf16.msra.mxu0 %v352
    %671 = vmatprep.subr.bf16.mxu0 %v357
    %672 = vmatpush1.bf16.msra.mxu0 %v356
    %673 = vmatprep.subr.bf16.mxu0 %v361
    %674 = vmatpush1.bf16.msra.mxu0 %v360
    %675 = vmatprep.subr.bf16.mxu0 %v365
    %676 = vmatpush1.bf16.msra.mxu0 %v364
    %677 = vmatprep.subr.bf16.mxu0 %v369
    %678 = vmatpush1.bf16.msra.mxu0 %v368
    %679 = vmatprep.subr.bf16.mxu0 %v373
    %680 = vmatpush1.bf16.msra.mxu0 %v372
    %681 = vmatprep.mubr.bf16.mxu0 %v475
    %682 = vmatmul.mubr.bf16.gmra.mrb[0].mxu0 %v474
    %v683 = vpop.f32.mrb[0].mxu0
    %v684 = vadd.f32 %v571, %v683
    %v685 = vpop.f32.mrb[0].mxu0
    %v686 = vadd.f32 %v573, %v685
    %v687 = vpop.f32.mrb[0].mxu0
    %v688 = vadd.f32 %v575, %v687
    %v689 = vpop.f32.mrb[0].mxu0
    %v690 = vadd.f32 %v577, %v689
    %691 = vmatprep.mubr.bf16.mxu0 %v479
    %692 = vmatmul.mubr.bf16.gmra.mrb[0].mxu0 %v478
    %v693 = vpop.f32.mrb[0].mxu0
    %v694 = vadd.f32 %v581, %v693
    %v695 = vpop.f32.mrb[0].mxu0
    %v696 = vadd.f32 %v583, %v695
    %v697 = vpop.f32.mrb[0].mxu0
    %v698 = vadd.f32 %v585, %v697
    %v699 = vpop.f32.mrb[0].mxu0
    %v700 = vadd.f32 %v587, %v699
    %701 = vmatprep.mubr.bf16.mxu0 %v483
    %702 = vmatmul.mubr.bf16.gmra.mrb[0].mxu0 %v482
    %v703 = vpop.f32.mrb[0].mxu0
    %v704 = vadd.f32 %v591, %v703
    %v705 = vpop.f32.mrb[0].mxu0
    %v706 = vadd.f32 %v593, %v705
    %v707 = vpop.f32.mrb[0].mxu0
    %v708 = vadd.f32 %v595, %v707
    %v709 = vpop.f32.mrb[0].mxu0
    %v710 = vadd.f32 %v597, %v709
    %711 = vmatprep.mubr.bf16.mxu0 %v487
    %712 = vmatmul.mubr.bf16.gmra.mrb[0].mxu0 %v486
    %v713 = vpop.f32.mrb[0].mxu0
    %v714 = vadd.f32 %v601, %v713
    %v715 = vpop.f32.mrb[0].mxu0
    %v716 = vadd.f32 %v603, %v715
    %v717 = vpop.f32.mrb[0].mxu0
    %v718 = vadd.f32 %v605, %v717
    %v719 = vpop.f32.mrb[0].mxu0
    %v720 = vadd.f32 %v607, %v719
    %721 = vmatprep.mubr.bf16.mxu0 %v491
    %722 = vmatmul.mubr.bf16.gmra.mrb[0].mxu0 %v490
    %v723 = vpop.f32.mrb[0].mxu0
    %v724 = vadd.f32 %v611, %v723
    %v725 = vpop.f32.mrb[0].mxu0
    %v726 = vadd.f32 %v613, %v725
    %v727 = vpop.f32.mrb[0].mxu0
    %v728 = vadd.f32 %v615, %v727
    %v729 = vpop.f32.mrb[0].mxu0
    %v730 = vadd.f32 %v617, %v729
    %731 = vmatprep.mubr.bf16.mxu0 %v495
    %732 = vmatmul.mubr.bf16.gmra.mrb[0].mxu0 %v494
    %v733 = vpop.f32.mrb[0].mxu0
    %v734 = vadd.f32 %v621, %v733
    %v735 = vpop.f32.mrb[0].mxu0
    %v736 = vadd.f32 %v623, %v735
    %v737 = vpop.f32.mrb[0].mxu0
    %v738 = vadd.f32 %v625, %v737
    %v739 = vpop.f32.mrb[0].mxu0
    %v740 = vadd.f32 %v627, %v739
    %741 = vmatprep.mubr.bf16.mxu0 %v499
    %742 = vmatmul.mubr.bf16.gmra.mrb[0].mxu0 %v498
    %v743 = vpop.f32.mrb[0].mxu0
    %v744 = vadd.f32 %v631, %v743
    %v745 = vpop.f32.mrb[0].mxu0
    %v746 = vadd.f32 %v633, %v745
    %v747 = vpop.f32.mrb[0].mxu0
    %v748 = vadd.f32 %v635, %v747
    %v749 = vpop.f32.mrb[0].mxu0
    %v750 = vadd.f32 %v637, %v749
    %751 = vmatprep.mubr.bf16.mxu0 %v503
    %752 = vmatmul.mubr.bf16.gmra.mrb[0].mxu0 %v502
    %v753 = vpop.f32.mrb[0].mxu0
    %v754 = vadd.f32 %v641, %v753
    %v755 = vpop.f32.mrb[0].mxu0
    %v756 = vadd.f32 %v643, %v755
    %v757 = vpop.f32.mrb[0].mxu0
    %v758 = vadd.f32 %v645, %v757
    %v759 = vpop.f32.mrb[0].mxu0
    %v760 = vadd.f32 %v647, %v759
    %761 = vdwg.mxu0
    %762 = vmatprep.subr.bf16.mxu0 %v251
    %763 = vmatpush1.bf16.msra.mxu0 %v250
    %764 = vmatprep.subr.bf16.mxu0 %v255
    %765 = vmatpush1.bf16.msra.mxu0 %v254
    %766 = vmatprep.subr.bf16.mxu0 %v259
    %767 = vmatpush1.bf16.msra.mxu0 %v258
    %768 = vmatprep.subr.bf16.mxu0 %v263
    %769 = vmatpush1.bf16.msra.mxu0 %v262
    %770 = vmatprep.subr.bf16.mxu0 %v267
    %771 = vmatpush1.bf16.msra.mxu0 %v266
    %772 = vmatprep.subr.bf16.mxu0 %v271
    %773 = vmatpush1.bf16.msra.mxu0 %v270
    %774 = vmatprep.subr.bf16.mxu0 %v275
    %775 = vmatpush1.bf16.msra.mxu0 %v274
    %776 = vmatprep.subr.bf16.mxu0 %v279
    %777 = vmatpush1.bf16.msra.mxu0 %v278
    %778 = vmatprep.subr.bf16.mxu0 %v283
    %779 = vmatpush1.bf16.msra.mxu0 %v282
    %780 = vmatprep.subr.bf16.mxu0 %v287
    %781 = vmatpush1.bf16.msra.mxu0 %v286
    %782 = vmatprep.subr.bf16.mxu0 %v291
    %783 = vmatpush1.bf16.msra.mxu0 %v290
    %784 = vmatprep.subr.bf16.mxu0 %v295
    %785 = vmatpush1.bf16.msra.mxu0 %v294
    %786 = vmatprep.subr.bf16.mxu0 %v299
    %787 = vmatpush1.bf16.msra.mxu0 %v298
    %788 = vmatprep.subr.bf16.mxu0 %v303
    %789 = vmatpush1.bf16.msra.mxu0 %v302
    %790 = vmatprep.subr.bf16.mxu0 %v307
    %791 = vmatpush1.bf16.msra.mxu0 %v306
    %792 = vmatprep.subr.bf16.mxu0 %v311
    %793 = vmatpush1.bf16.msra.mxu0 %v310
    %794 = vmatprep.mubr.bf16.mxu0 %v473
    %795 = vmatmul.mubr.bf16.gmra.mrb[0].mxu0 %v472
    %v796 = vpop.f32.mrb[0].mxu0
    %v797 = vadd.f32 0.0, %v796
    %v798 = vpop.f32.mrb[0].mxu0
    %v799 = vadd.f32 0.0, %v798
    %v800 = vpop.f32.mrb[0].mxu0
    %v801 = vadd.f32 0.0, %v800
    %v802 = vpop.f32.mrb[0].mxu0
    %v803 = vadd.f32 0.0, %v802
    %804 = vmatprep.mubr.bf16.mxu0 %v477
    %805 = vmatmul.mubr.bf16.gmra.mrb[0].mxu0 %v476
    %v806 = vpop.f32.mrb[0].mxu0
    %v807 = vadd.f32 0.0, %v806
    %v808 = vpop.f32.mrb[0].mxu0
    %v809 = vadd.f32 0.0, %v808
    %v810 = vpop.f32.mrb[0].mxu0
    %v811 = vadd.f32 0.0, %v810
    %v812 = vpop.f32.mrb[0].mxu0
    %v813 = vadd.f32 0.0, %v812
    %814 = vmatprep.mubr.bf16.mxu0 %v481
    %815 = vmatmul.mubr.bf16.gmra.mrb[0].mxu0 %v480
    %v816 = vpop.f32.mrb[0].mxu0
    %v817 = vadd.f32 0.0, %v816
    %v818 = vpop.f32.mrb[0].mxu0
    %v819 = vadd.f32 0.0, %v818
    %v820 = vpop.f32.mrb[0].mxu0
    %v821 = vadd.f32 0.0, %v820
    %v822 = vpop.f32.mrb[0].mxu0
    %v823 = vadd.f32 0.0, %v822
    %824 = vmatprep.mubr.bf16.mxu0 %v485
    %825 = vmatmul.mubr.bf16.gmra.mrb[0].mxu0 %v484
    %v826 = vpop.f32.mrb[0].mxu0
    %v827 = vadd.f32 0.0, %v826
    %v828 = vpop.f32.mrb[0].mxu0
    %v829 = vadd.f32 0.0, %v828
    %v830 = vpop.f32.mrb[0].mxu0
    %v831 = vadd.f32 0.0, %v830
    %v832 = vpop.f32.mrb[0].mxu0
    %v833 = vadd.f32 0.0, %v832
    %834 = vmatprep.mubr.bf16.mxu0 %v489
    %835 = vmatmul.mubr.bf16.gmra.mrb[0].mxu0 %v488
    %v836 = vpop.f32.mrb[0].mxu0
    %v837 = vadd.f32 0.0, %v836
    %v838 = vpop.f32.mrb[0].mxu0
    %v839 = vadd.f32 0.0, %v838
    %v840 = vpop.f32.mrb[0].mxu0
    %v841 = vadd.f32 0.0, %v840
    %v842 = vpop.f32.mrb[0].mxu0
    %v843 = vadd.f32 0.0, %v842
    %844 = vmatprep.mubr.bf16.mxu0 %v493
    %845 = vmatmul.mubr.bf16.gmra.mrb[0].mxu0 %v492
    %v846 = vpop.f32.mrb[0].mxu0
    %v847 = vadd.f32 0.0, %v846
    %v848 = vpop.f32.mrb[0].mxu0
    %v849 = vadd.f32 0.0, %v848
    %v850 = vpop.f32.mrb[0].mxu0
    %v851 = vadd.f32 0.0, %v850
    %v852 = vpop.f32.mrb[0].mxu0
    %v853 = vadd.f32 0.0, %v852
    %854 = vmatprep.mubr.bf16.mxu0 %v497
    %855 = vmatmul.mubr.bf16.gmra.mrb[0].mxu0 %v496
    %v856 = vpop.f32.mrb[0].mxu0
    %v857 = vadd.f32 0.0, %v856
    %v858 = vpop.f32.mrb[0].mxu0
    %v859 = vadd.f32 0.0, %v858
    %v860 = vpop.f32.mrb[0].mxu0
    %v861 = vadd.f32 0.0, %v860
    %v862 = vpop.f32.mrb[0].mxu0
    %v863 = vadd.f32 0.0, %v862
    %864 = vmatprep.mubr.bf16.mxu0 %v501
    %865 = vmatmul.mubr.bf16.gmra.mrb[0].mxu0 %v500
    %v866 = vpop.f32.mrb[0].mxu0
    %v867 = vadd.f32 0.0, %v866
    %v868 = vpop.f32.mrb[0].mxu0
    %v869 = vadd.f32 0.0, %v868
    %v870 = vpop.f32.mrb[0].mxu0
    %v871 = vadd.f32 0.0, %v870
    %v872 = vpop.f32.mrb[0].mxu0
    %v873 = vadd.f32 0.0, %v872
    %874 = vdwg.mxu0
    %875 = vmatprep.subr.bf16.mxu0 %v315
    %876 = vmatpush1.bf16.msra.mxu0 %v314
    %877 = vmatprep.subr.bf16.mxu0 %v319
    %878 = vmatpush1.bf16.msra.mxu0 %v318
    %879 = vmatprep.subr.bf16.mxu0 %v323
    %880 = vmatpush1.bf16.msra.mxu0 %v322
    %881 = vmatprep.subr.bf16.mxu0 %v327
    %882 = vmatpush1.bf16.msra.mxu0 %v326
    %883 = vmatprep.subr.bf16.mxu0 %v331
    %884 = vmatpush1.bf16.msra.mxu0 %v330
    %885 = vmatprep.subr.bf16.mxu0 %v335
    %886 = vmatpush1.bf16.msra.mxu0 %v334
    %887 = vmatprep.subr.bf16.mxu0 %v339
    %888 = vmatpush1.bf16.msra.mxu0 %v338
    %889 = vmatprep.subr.bf16.mxu0 %v343
    %890 = vmatpush1.bf16.msra.mxu0 %v342
    %891 = vmatprep.subr.bf16.mxu0 %v347
    %892 = vmatpush1.bf16.msra.mxu0 %v346
    %893 = vmatprep.subr.bf16.mxu0 %v351
    %894 = vmatpush1.bf16.msra.mxu0 %v350
    %895 = vmatprep.subr.bf16.mxu0 %v355
    %896 = vmatpush1.bf16.msra.mxu0 %v354
    %897 = vmatprep.subr.bf16.mxu0 %v359
    %898 = vmatpush1.bf16.msra.mxu0 %v358
    %899 = vmatprep.subr.bf16.mxu0 %v363
    %900 = vmatpush1.bf16.msra.mxu0 %v362
    %901 = vmatprep.subr.bf16.mxu0 %v367
    %902 = vmatpush1.bf16.msra.mxu0 %v366
    %903 = vmatprep.subr.bf16.mxu0 %v371
    %904 = vmatpush1.bf16.msra.mxu0 %v370
    %905 = vmatprep.subr.bf16.mxu0 %v375
    %906 = vmatpush1.bf16.msra.mxu0 %v374
    %907 = vmatprep.mubr.bf16.mxu0 %v475
    %908 = vmatmul.mubr.bf16.gmra.mrb[0].mxu0 %v474
    %v909 = vpop.f32.mrb[0].mxu0
    %v910 = vadd.f32 %v797, %v909
    %v911 = vpop.f32.mrb[0].mxu0
    %v912 = vadd.f32 %v799, %v911
    %v913 = vpop.f32.mrb[0].mxu0
    %v914 = vadd.f32 %v801, %v913
    %v915 = vpop.f32.mrb[0].mxu0
    %v916 = vadd.f32 %v803, %v915
    %917 = vmatprep.mubr.bf16.mxu0 %v479
    %918 = vmatmul.mubr.bf16.gmra.mrb[0].mxu0 %v478
    %v919 = vpop.f32.mrb[0].mxu0
    %v920 = vadd.f32 %v807, %v919
    %v921 = vpop.f32.mrb[0].mxu0
    %v922 = vadd.f32 %v809, %v921
    %v923 = vpop.f32.mrb[0].mxu0
    %v924 = vadd.f32 %v811, %v923
    %v925 = vpop.f32.mrb[0].mxu0
    %v926 = vadd.f32 %v813, %v925
    %927 = vmatprep.mubr.bf16.mxu0 %v483
    %928 = vmatmul.mubr.bf16.gmra.mrb[0].mxu0 %v482
    %v929 = vpop.f32.mrb[0].mxu0
    %v930 = vadd.f32 %v817, %v929
    %v931 = vpop.f32.mrb[0].mxu0
    %v932 = vadd.f32 %v819, %v931
    %v933 = vpop.f32.mrb[0].mxu0
    %v934 = vadd.f32 %v821, %v933
    %v935 = vpop.f32.mrb[0].mxu0
    %v936 = vadd.f32 %v823, %v935
    %937 = vmatprep.mubr.bf16.mxu0 %v487
    %938 = vmatmul.mubr.bf16.gmra.mrb[0].mxu0 %v486
    %v939 = vpop.f32.mrb[0].mxu0
    %v940 = vadd.f32 %v827, %v939
    %v941 = vpop.f32.mrb[0].mxu0
    %v942 = vadd.f32 %v829, %v941
    %v943 = vpop.f32.mrb[0].mxu0
    %v944 = vadd.f32 %v831, %v943
    %v945 = vpop.f32.mrb[0].mxu0
    %v946 = vadd.f32 %v833, %v945
    %947 = vmatprep.mubr.bf16.mxu0 %v491
    %948 = vmatmul.mubr.bf16.gmra.mrb[0].mxu0 %v490
    %v949 = vpop.f32.mrb[0].mxu0
    %v950 = vadd.f32 %v837, %v949
    %v951 = vpop.f32.mrb[0].mxu0
    %v952 = vadd.f32 %v839, %v951
    %v953 = vpop.f32.mrb[0].mxu0
    %v954 = vadd.f32 %v841, %v953
    %v955 = vpop.f32.mrb[0].mxu0
    %v956 = vadd.f32 %v843, %v955
    %957 = vmatprep.mubr.bf16.mxu0 %v495
    %958 = vmatmul.mubr.bf16.gmra.mrb[0].mxu0 %v494
    %v959 = vpop.f32.mrb[0].mxu0
    %v960 = vadd.f32 %v847, %v959
    %v961 = vpop.f32.mrb[0].mxu0
    %v962 = vadd.f32 %v849, %v961
    %v963 = vpop.f32.mrb[0].mxu0
    %v964 = vadd.f32 %v851, %v963
    %v965 = vpop.f32.mrb[0].mxu0
    %v966 = vadd.f32 %v853, %v965
    %967 = vmatprep.mubr.bf16.mxu0 %v499
    %968 = vmatmul.mubr.bf16.gmra.mrb[0].mxu0 %v498
    %v969 = vpop.f32.mrb[0].mxu0
    %v970 = vadd.f32 %v857, %v969
    %v971 = vpop.f32.mrb[0].mxu0
    %v972 = vadd.f32 %v859, %v971
    %v973 = vpop.f32.mrb[0].mxu0
    %v974 = vadd.f32 %v861, %v973
    %v975 = vpop.f32.mrb[0].mxu0
    %v976 = vadd.f32 %v863, %v975
    %977 = vmatprep.mubr.bf16.mxu0 %v503
    %978 = vmatmul.mubr.bf16.gmra.mrb[0].mxu0 %v502
    %v979 = vpop.f32.mrb[0].mxu0
    %v980 = vadd.f32 %v867, %v979
    %v981 = vpop.f32.mrb[0].mxu0
    %v982 = vadd.f32 %v869, %v981
    %v983 = vpop.f32.mrb[0].mxu0
    %v984 = vadd.f32 %v871, %v983
    %v985 = vpop.f32.mrb[0].mxu0
    %v986 = vadd.f32 %v873, %v985
    %987 = vdwg.mxu0
    %v988 = vld [vmem:[#allocation7] sm:$0xf]
    %v989 = vld [vmem:[#allocation9] sm:$0xf]
    %v990 = vadd.f32 %v684, %v688
    %v991 = vadd.f32 %v990, %v694
    %v992 = vadd.f32 %v991, %v698
    %v993 = vadd.f32 %v992, %v704
    %v994 = vadd.f32 %v993, %v708
    %v995 = vadd.f32 %v994, %v714
    %v996 = vadd.f32 %v995, %v718
    %v997 = vadd.f32 %v996, %v724
    %v998 = vadd.f32 %v997, %v728
    %v999 = vadd.f32 %v998, %v734
    %v1000 = vadd.f32 %v999, %v738
    %v1001 = vadd.f32 %v1000, %v744
    %v1002 = vadd.f32 %v1001, %v748
    %v1003 = vadd.f32 %v1002, %v754
    %v1004 = vadd.f32 %v1003, %v758
    %v1005 = vrot.slane %v1004, 4
    %v1006 = vadd.f32 %v1004, %v1005
    %v1007 = vrot.slane %v1006, 2
    %v1008 = vadd.f32 %v1006, %v1007
    %v1009 = vrot.slane %v1008, 1
    %v1010 = vadd.f32 %v1008, %v1009
    %v1011 = vadd.f32 %v686, %v690
    %v1012 = vadd.f32 %v1011, %v696
    %v1013 = vadd.f32 %v1012, %v700
    %v1014 = vadd.f32 %v1013, %v706
    %v1015 = vadd.f32 %v1014, %v710
    %v1016 = vadd.f32 %v1015, %v716
    %v1017 = vadd.f32 %v1016, %v720
    %v1018 = vadd.f32 %v1017, %v726
    %v1019 = vadd.f32 %v1018, %v730
    %v1020 = vadd.f32 %v1019, %v736
    %v1021 = vadd.f32 %v1020, %v740
    %v1022 = vadd.f32 %v1021, %v746
    %v1023 = vadd.f32 %v1022, %v750
    %v1024 = vadd.f32 %v1023, %v756
    %v1025 = vadd.f32 %v1024, %v760
    %v1026 = vrot.slane %v1025, 4
    %v1027 = vadd.f32 %v1025, %v1026
    %v1028 = vrot.slane %v1027, 2
    %v1029 = vadd.f32 %v1027, %v1028
    %v1030 = vrot.slane %v1029, 1
    %v1031 = vadd.f32 %v1029, %v1030
    %v1032 = vadd.f32 %v910, %v914
    %v1033 = vadd.f32 %v1032, %v920
    %v1034 = vadd.f32 %v1033, %v924
    %v1035 = vadd.f32 %v1034, %v930
    %v1036 = vadd.f32 %v1035, %v934
    %v1037 = vadd.f32 %v1036, %v940
    %v1038 = vadd.f32 %v1037, %v944
    %v1039 = vadd.f32 %v1038, %v950
    %v1040 = vadd.f32 %v1039, %v954
    %v1041 = vadd.f32 %v1040, %v960
    %v1042 = vadd.f32 %v1041, %v964
    %v1043 = vadd.f32 %v1042, %v970
    %v1044 = vadd.f32 %v1043, %v974
    %v1045 = vadd.f32 %v1044, %v980
    %v1046 = vadd.f32 %v1045, %v984
    %v1047 = vrot.slane %v1046, 4
    %v1048 = vadd.f32 %v1046, %v1047
    %v1049 = vrot.slane %v1048, 2
    %v1050 = vadd.f32 %v1048, %v1049
    %v1051 = vrot.slane %v1050, 1
    %v1052 = vadd.f32 %v1050, %v1051
    %v1053 = vadd.f32 %v912, %v916
    %v1054 = vadd.f32 %v1053, %v922
    %v1055 = vadd.f32 %v1054, %v926
    %v1056 = vadd.f32 %v1055, %v932
    %v1057 = vadd.f32 %v1056, %v936
    %v1058 = vadd.f32 %v1057, %v942
    %v1059 = vadd.f32 %v1058, %v946
    %v1060 = vadd.f32 %v1059, %v952
    %v1061 = vadd.f32 %v1060, %v956
    %v1062 = vadd.f32 %v1061, %v962
    %v1063 = vadd.f32 %v1062, %v966
    %v1064 = vadd.f32 %v1063, %v972
    %v1065 = vadd.f32 %v1064, %v976
    %v1066 = vadd.f32 %v1065, %v982
    %v1067 = vadd.f32 %v1066, %v986
    %v1068 = vrot.slane %v1067, 4
    %v1069 = vadd.f32 %v1067, %v1068
    %v1070 = vrot.slane %v1069, 2
    %v1071 = vadd.f32 %v1069, %v1070
    %v1072 = vrot.slane %v1071, 1
    %v1073 = vadd.f32 %v1071, %v1072
    %v1074 = vrcp.pop 128.0
    %v1075 = vmul.f32 %v1010, %v1074
    %v1076 = vmul.f32 %v1031, %v1074
    %v1077 = vmul.f32 %v1052, %v1074
    %v1078 = vmul.f32 %v1073, %v1074
    %v1079 = vmul.f32 %v684, %v684
    %v1080 = vmul.f32 %v686, %v686
    %v1081 = vmul.f32 %v910, %v910
    %v1082 = vmul.f32 %v912, %v912
    %v1083 = vmul.f32 %v688, %v688
    %v1084 = vmul.f32 %v690, %v690
    %v1085 = vmul.f32 %v914, %v914
    %v1086 = vmul.f32 %v916, %v916
    %v1087 = vmul.f32 %v694, %v694
    %v1088 = vmul.f32 %v696, %v696
    %v1089 = vmul.f32 %v920, %v920
    %v1090 = vmul.f32 %v922, %v922
    %v1091 = vmul.f32 %v698, %v698
    %v1092 = vmul.f32 %v700, %v700
    %v1093 = vmul.f32 %v924, %v924
    %v1094 = vmul.f32 %v926, %v926
    %v1095 = vmul.f32 %v704, %v704
    %v1096 = vmul.f32 %v706, %v706
    %v1097 = vmul.f32 %v930, %v930
    %v1098 = vmul.f32 %v932, %v932
    %v1099 = vmul.f32 %v708, %v708
    %v1100 = vmul.f32 %v710, %v710
    %v1101 = vmul.f32 %v934, %v934
    %v1102 = vmul.f32 %v936, %v936
    %v1103 = vmul.f32 %v714, %v714
    %v1104 = vmul.f32 %v716, %v716
    %v1105 = vmul.f32 %v940, %v940
    %v1106 = vmul.f32 %v942, %v942
    %v1107 = vmul.f32 %v718, %v718
    %v1108 = vmul.f32 %v720, %v720
    %v1109 = vmul.f32 %v944, %v944
    %v1110 = vmul.f32 %v946, %v946
    %v1111 = vmul.f32 %v724, %v724
    %v1112 = vmul.f32 %v726, %v726
    %v1113 = vmul.f32 %v950, %v950
    %v1114 = vmul.f32 %v952, %v952
    %v1115 = vmul.f32 %v728, %v728
    %v1116 = vmul.f32 %v730, %v730
    %v1117 = vmul.f32 %v954, %v954
    %v1118 = vmul.f32 %v956, %v956
    %v1119 = vmul.f32 %v734, %v734
    %v1120 = vmul.f32 %v736, %v736
    %v1121 = vmul.f32 %v960, %v960
    %v1122 = vmul.f32 %v962, %v962
    %v1123 = vmul.f32 %v738, %v738
    %v1124 = vmul.f32 %v740, %v740
    %v1125 = vmul.f32 %v964, %v964
    %v1126 = vmul.f32 %v966, %v966
    %v1127 = vmul.f32 %v744, %v744
    %v1128 = vmul.f32 %v746, %v746
    %v1129 = vmul.f32 %v970, %v970
    %v1130 = vmul.f32 %v972, %v972
    %v1131 = vmul.f32 %v748, %v748
    %v1132 = vmul.f32 %v750, %v750
    %v1133 = vmul.f32 %v974, %v974
    %v1134 = vmul.f32 %v976, %v976
    %v1135 = vmul.f32 %v754, %v754
    %v1136 = vmul.f32 %v756, %v756
    %v1137 = vmul.f32 %v980, %v980
    %v1138 = vmul.f32 %v982, %v982
    %v1139 = vmul.f32 %v758, %v758
    %v1140 = vmul.f32 %v760, %v760
    %v1141 = vmul.f32 %v984, %v984
    %v1142 = vmul.f32 %v986, %v986
    %v1143 = vadd.f32 %v1079, %v1083
    %v1144 = vadd.f32 %v1143, %v1087
    %v1145 = vadd.f32 %v1144, %v1091
    %v1146 = vadd.f32 %v1145, %v1095
    %v1147 = vadd.f32 %v1146, %v1099
    %v1148 = vadd.f32 %v1147, %v1103
    %v1149 = vadd.f32 %v1148, %v1107
    %v1150 = vadd.f32 %v1149, %v1111
    %v1151 = vadd.f32 %v1150, %v1115
    %v1152 = vadd.f32 %v1151, %v1119
    %v1153 = vadd.f32 %v1152, %v1123
    %v1154 = vadd.f32 %v1153, %v1127
    %v1155 = vadd.f32 %v1154, %v1131
    %v1156 = vadd.f32 %v1155, %v1135
    %v1157 = vadd.f32 %v1156, %v1139
    %v1158 = vrot.slane %v1157, 4
    %v1159 = vadd.f32 %v1157, %v1158
    %v1160 = vrot.slane %v1159, 2
    %v1161 = vadd.f32 %v1159, %v1160
    %v1162 = vrot.slane %v1161, 1
    %v1163 = vadd.f32 %v1161, %v1162
    %v1164 = vadd.f32 %v1080, %v1084
    %v1165 = vadd.f32 %v1164, %v1088
    %v1166 = vadd.f32 %v1165, %v1092
    %v1167 = vadd.f32 %v1166, %v1096
    %v1168 = vadd.f32 %v1167, %v1100
    %v1169 = vadd.f32 %v1168, %v1104
    %v1170 = vadd.f32 %v1169, %v1108
    %v1171 = vadd.f32 %v1170, %v1112
    %v1172 = vadd.f32 %v1171, %v1116
    %v1173 = vadd.f32 %v1172, %v1120
    %v1174 = vadd.f32 %v1173, %v1124
    %v1175 = vadd.f32 %v1174, %v1128
    %v1176 = vadd.f32 %v1175, %v1132
    %v1177 = vadd.f32 %v1176, %v1136
    %v1178 = vadd.f32 %v1177, %v1140
    %v1179 = vrot.slane %v1178, 4
    %v1180 = vadd.f32 %v1178, %v1179
    %v1181 = vrot.slane %v1180, 2
    %v1182 = vadd.f32 %v1180, %v1181
    %v1183 = vrot.slane %v1182, 1
    %v1184 = vadd.f32 %v1182, %v1183
    %v1185 = vadd.f32 %v1081, %v1085
    %v1186 = vadd.f32 %v1185, %v1089
    %v1187 = vadd.f32 %v1186, %v1093
    %v1188 = vadd.f32 %v1187, %v1097
    %v1189 = vadd.f32 %v1188, %v1101
    %v1190 = vadd.f32 %v1189, %v1105
    %v1191 = vadd.f32 %v1190, %v1109
    %v1192 = vadd.f32 %v1191, %v1113
    %v1193 = vadd.f32 %v1192, %v1117
    %v1194 = vadd.f32 %v1193, %v1121
    %v1195 = vadd.f32 %v1194, %v1125
    %v1196 = vadd.f32 %v1195, %v1129
    %v1197 = vadd.f32 %v1196, %v1133
    %v1198 = vadd.f32 %v1197, %v1137
    %v1199 = vadd.f32 %v1198, %v1141
    %v1200 = vrot.slane %v1199, 4
    %v1201 = vadd.f32 %v1199, %v1200
    %v1202 = vrot.slane %v1201, 2
    %v1203 = vadd.f32 %v1201, %v1202
    %v1204 = vrot.slane %v1203, 1
    %v1205 = vadd.f32 %v1203, %v1204
    %v1206 = vadd.f32 %v1082, %v1086
    %v1207 = vadd.f32 %v1206, %v1090
    %v1208 = vadd.f32 %v1207, %v1094
    %v1209 = vadd.f32 %v1208, %v1098
    %v1210 = vadd.f32 %v1209, %v1102
    %v1211 = vadd.f32 %v1210, %v1106
    %v1212 = vadd.f32 %v1211, %v1110
    %v1213 = vadd.f32 %v1212, %v1114
    %v1214 = vadd.f32 %v1213, %v1118
    %v1215 = vadd.f32 %v1214, %v1122
    %v1216 = vadd.f32 %v1215, %v1126
    %v1217 = vadd.f32 %v1216, %v1130
    %v1218 = vadd.f32 %v1217, %v1134
    %v1219 = vadd.f32 %v1218, %v1138
    %v1220 = vadd.f32 %v1219, %v1142
    %v1221 = vrot.slane %v1220, 4
    %v1222 = vadd.f32 %v1220, %v1221
    %v1223 = vrot.slane %v1222, 2
    %v1224 = vadd.f32 %v1222, %v1223
    %v1225 = vrot.slane %v1224, 1
    %v1226 = vadd.f32 %v1224, %v1225
    %v1227 = vmul.f32 %v1163, %v1074
    %v1228 = vmul.f32 %v1184, %v1074
    %v1229 = vmul.f32 %v1205, %v1074
    %v1230 = vmul.f32 %v1226, %v1074
    %v1231 = vmul.f32 %v1075, %v1075
    %v1232 = vmul.f32 %v1076, %v1076
    %v1233 = vmul.f32 %v1077, %v1077
    %v1234 = vmul.f32 %v1078, %v1078
    %v1235 = vsub.f32 %v1227, %v1231
    %v1236 = vsub.f32 %v1228, %v1232
    %v1237 = vsub.f32 %v1229, %v1233
    %v1238 = vsub.f32 %v1230, %v1234
    %v1239 = vadd.f32 %v1235, 1e-05
    %v1240 = vadd.f32 %v1236, 1e-05
    %v1241 = vadd.f32 %v1237, 1e-05
    %v1242 = vadd.f32 %v1238, 1e-05
    %v1243 = vrsqrt.pop %v1239
    %v1244 = vrsqrt.pop %v1240
    %v1245 = vrsqrt.pop %v1241
    %v1246 = vrsqrt.pop %v1242
    %v1251 = vcombine.low %v1243, %v1244
    %v1252 = vcombine.low %v1245, %v1246
    %v1254 = vunpack.c.l.s4 1966171168
    %v1255 = vunpack.c.0.s8 %v1254
    %v1256 = vlaneseq
    %v1257 = vshrl.u32 %v1256, 7
    %v1258 = vsub.s32 %v1255, %v1257
    %v1259 = vrot.slane %v1251, %v1258
    %v1261 = vunpack.c.l.s4 1966171168
    %v1262 = vunpack.c.0.s8 %v1261
    %v1263 = vlaneseq
    %v1264 = vshrl.u32 %v1263, 7
    %v1265 = vsub.s32 %v1262, %v1264
    %v1266 = vrot.slane %v1252, %v1265
    %v1267 = vcombine.low %v1259, %v1266
    %v1269 = vunpack.c.l.s4 1966171168
    %v1270 = vunpack.c.0.s8 %v1269
    %v1271 = vlaneseq
    %v1272 = vshrl.u32 %v1271, 7
    %v1273 = vsub.s32 %v1270, %v1272
    %v1274 = vrot.slane %v1267, %v1273
    %v1276 = vmul.f32 %v988, %v1274
    %v1278 = vlaneseq
    %v1279 = vshrl.u32 %v1278, 7
    %v1280 = vsub.s32 0, %v1279
    %v1281 = vrot.slane %v1276, %v1280
    %v1282 = vlaneseq
    %v1283 = vshrl.u32 %v1282, 7
    %v1284 = vsub.s32 1, %v1283
    %v1285 = vrot.slane %v1276, %v1284
    %v1286 = vlaneseq
    %v1287 = vshrl.u32 %v1286, 7
    %v1288 = vsub.s32 2, %v1287
    %v1289 = vrot.slane %v1276, %v1288
    %v1290 = vlaneseq
    %v1291 = vshrl.u32 %v1290, 7
    %v1292 = vsub.s32 3, %v1291
    %v1293 = vrot.slane %v1276, %v1292
    %v1298 = vmul.f32 %v1075, %v1281
    %v1299 = vmul.f32 %v1076, %v1285
    %v1300 = vmul.f32 %v1077, %v1289
    %v1301 = vmul.f32 %v1078, %v1293
    %v1306 = vcombine.low %v1298, %v1299
    %v1307 = vcombine.low %v1300, %v1301
    %v1309 = vunpack.c.l.s4 1966171168
    %v1310 = vunpack.c.0.s8 %v1309
    %v1311 = vlaneseq
    %v1312 = vshrl.u32 %v1311, 7
    %v1313 = vsub.s32 %v1310, %v1312
    %v1314 = vrot.slane %v1306, %v1313
    %v1316 = vunpack.c.l.s4 1966171168
    %v1317 = vunpack.c.0.s8 %v1316
    %v1318 = vlaneseq
    %v1319 = vshrl.u32 %v1318, 7
    %v1320 = vsub.s32 %v1317, %v1319
    %v1321 = vrot.slane %v1307, %v1320
    %v1322 = vcombine.low %v1314, %v1321
    %v1324 = vunpack.c.l.s4 1966171168
    %v1325 = vunpack.c.0.s8 %v1324
    %v1326 = vlaneseq
    %v1327 = vshrl.u32 %v1326, 7
    %v1328 = vsub.s32 %v1325, %v1327
    %v1329 = vrot.slane %v1322, %v1328
    %v1331 = vsub.f32 %v989, %v1329
    %v1332 = vmul.f32 %v684, %v1281
    %v1333 = vmul.f32 %v686, %v1285
    %v1334 = vmul.f32 %v910, %v1289
    %v1335 = vmul.f32 %v912, %v1293
    %v1336 = vmul.f32 %v688, %v1281
    %v1337 = vmul.f32 %v690, %v1285
    %v1338 = vmul.f32 %v914, %v1289
    %v1339 = vmul.f32 %v916, %v1293
    %v1340 = vmul.f32 %v694, %v1281
    %v1341 = vmul.f32 %v696, %v1285
    %v1342 = vmul.f32 %v920, %v1289
    %v1343 = vmul.f32 %v922, %v1293
    %v1344 = vmul.f32 %v698, %v1281
    %v1345 = vmul.f32 %v700, %v1285
    %v1346 = vmul.f32 %v924, %v1289
    %v1347 = vmul.f32 %v926, %v1293
    %v1348 = vmul.f32 %v704, %v1281
    %v1349 = vmul.f32 %v706, %v1285
    %v1350 = vmul.f32 %v930, %v1289
    %v1351 = vmul.f32 %v932, %v1293
    %v1352 = vmul.f32 %v708, %v1281
    %v1353 = vmul.f32 %v710, %v1285
    %v1354 = vmul.f32 %v934, %v1289
    %v1355 = vmul.f32 %v936, %v1293
    %v1356 = vmul.f32 %v714, %v1281
    %v1357 = vmul.f32 %v716, %v1285
    %v1358 = vmul.f32 %v940, %v1289
    %v1359 = vmul.f32 %v942, %v1293
    %v1360 = vmul.f32 %v718, %v1281
    %v1361 = vmul.f32 %v720, %v1285
    %v1362 = vmul.f32 %v944, %v1289
    %v1363 = vmul.f32 %v946, %v1293
    %v1364 = vmul.f32 %v724, %v1281
    %v1365 = vmul.f32 %v726, %v1285
    %v1366 = vmul.f32 %v950, %v1289
    %v1367 = vmul.f32 %v952, %v1293
    %v1368 = vmul.f32 %v728, %v1281
    %v1369 = vmul.f32 %v730, %v1285
    %v1370 = vmul.f32 %v954, %v1289
    %v1371 = vmul.f32 %v956, %v1293
    %v1372 = vmul.f32 %v734, %v1281
    %v1373 = vmul.f32 %v736, %v1285
    %v1374 = vmul.f32 %v960, %v1289
    %v1375 = vmul.f32 %v962, %v1293
    %v1376 = vmul.f32 %v738, %v1281
    %v1377 = vmul.f32 %v740, %v1285
    %v1378 = vmul.f32 %v964, %v1289
    %v1379 = vmul.f32 %v966, %v1293
    %v1380 = vmul.f32 %v744, %v1281
    %v1381 = vmul.f32 %v746, %v1285
    %v1382 = vmul.f32 %v970, %v1289
    %v1383 = vmul.f32 %v972, %v1293
    %v1384 = vmul.f32 %v748, %v1281
    %v1385 = vmul.f32 %v750, %v1285
    %v1386 = vmul.f32 %v974, %v1289
    %v1387 = vmul.f32 %v976, %v1293
    %v1388 = vmul.f32 %v754, %v1281
    %v1389 = vmul.f32 %v756, %v1285
    %v1390 = vmul.f32 %v980, %v1289
    %v1391 = vmul.f32 %v982, %v1293
    %v1392 = vmul.f32 %v758, %v1281
    %v1393 = vmul.f32 %v760, %v1285
    %v1394 = vmul.f32 %v984, %v1289
    %v1395 = vmul.f32 %v986, %v1293
    %v1397 = vlaneseq
    %v1398 = vshrl.u32 %v1397, 7
    %v1399 = vsub.s32 0, %v1398
    %v1400 = vrot.slane %v1331, %v1399
    %v1401 = vlaneseq
    %v1402 = vshrl.u32 %v1401, 7
    %v1403 = vsub.s32 1, %v1402
    %v1404 = vrot.slane %v1331, %v1403
    %v1405 = vlaneseq
    %v1406 = vshrl.u32 %v1405, 7
    %v1407 = vsub.s32 2, %v1406
    %v1408 = vrot.slane %v1331, %v1407
    %v1409 = vlaneseq
    %v1410 = vshrl.u32 %v1409, 7
    %v1411 = vsub.s32 3, %v1410
    %v1412 = vrot.slane %v1331, %v1411
    %v1417 = vadd.f32 %v1332, %v1400
    %v1418 = vadd.f32 %v1333, %v1404
    %v1419 = vadd.f32 %v1334, %v1408
    %v1420 = vadd.f32 %v1335, %v1412
    %v1421 = vadd.f32 %v1336, %v1400
    %v1422 = vadd.f32 %v1337, %v1404
    %v1423 = vadd.f32 %v1338, %v1408
    %v1424 = vadd.f32 %v1339, %v1412
    %v1425 = vadd.f32 %v1340, %v1400
    %v1426 = vadd.f32 %v1341, %v1404
    %v1427 = vadd.f32 %v1342, %v1408
    %v1428 = vadd.f32 %v1343, %v1412
    %v1429 = vadd.f32 %v1344, %v1400
    %v1430 = vadd.f32 %v1345, %v1404
    %v1431 = vadd.f32 %v1346, %v1408
    %v1432 = vadd.f32 %v1347, %v1412
    %v1433 = vadd.f32 %v1348, %v1400
    %v1434 = vadd.f32 %v1349, %v1404
    %v1435 = vadd.f32 %v1350, %v1408
    %v1436 = vadd.f32 %v1351, %v1412
    %v1437 = vadd.f32 %v1352, %v1400
    %v1438 = vadd.f32 %v1353, %v1404
    %v1439 = vadd.f32 %v1354, %v1408
    %v1440 = vadd.f32 %v1355, %v1412
    %v1441 = vadd.f32 %v1356, %v1400
    %v1442 = vadd.f32 %v1357, %v1404
    %v1443 = vadd.f32 %v1358, %v1408
    %v1444 = vadd.f32 %v1359, %v1412
    %v1445 = vadd.f32 %v1360, %v1400
    %v1446 = vadd.f32 %v1361, %v1404
    %v1447 = vadd.f32 %v1362, %v1408
    %v1448 = vadd.f32 %v1363, %v1412
    %v1449 = vadd.f32 %v1364, %v1400
    %v1450 = vadd.f32 %v1365, %v1404
    %v1451 = vadd.f32 %v1366, %v1408
    %v1452 = vadd.f32 %v1367, %v1412
    %v1453 = vadd.f32 %v1368, %v1400
    %v1454 = vadd.f32 %v1369, %v1404
    %v1455 = vadd.f32 %v1370, %v1408
    %v1456 = vadd.f32 %v1371, %v1412
    %v1457 = vadd.f32 %v1372, %v1400
    %v1458 = vadd.f32 %v1373, %v1404
    %v1459 = vadd.f32 %v1374, %v1408
    %v1460 = vadd.f32 %v1375, %v1412
    %v1461 = vadd.f32 %v1376, %v1400
    %v1462 = vadd.f32 %v1377, %v1404
    %v1463 = vadd.f32 %v1378, %v1408
    %v1464 = vadd.f32 %v1379, %v1412
    %v1465 = vadd.f32 %v1380, %v1400
    %v1466 = vadd.f32 %v1381, %v1404
    %v1467 = vadd.f32 %v1382, %v1408
    %v1468 = vadd.f32 %v1383, %v1412
    %v1469 = vadd.f32 %v1384, %v1400
    %v1470 = vadd.f32 %v1385, %v1404
    %v1471 = vadd.f32 %v1386, %v1408
    %v1472 = vadd.f32 %v1387, %v1412
    %v1473 = vadd.f32 %v1388, %v1400
    %v1474 = vadd.f32 %v1389, %v1404
    %v1475 = vadd.f32 %v1390, %v1408
    %v1476 = vadd.f32 %v1391, %v1412
    %v1477 = vadd.f32 %v1392, %v1400
    %v1478 = vadd.f32 %v1393, %v1404
    %v1479 = vadd.f32 %v1394, %v1408
    %v1480 = vadd.f32 %v1395, %v1412
    %vm1481 = vcmp.gt.f32.partialorder %v1417, 0.0
    %vm1482 = vcmp.gt.f32.partialorder %v1418, 0.0
    %vm1483 = vcmp.gt.f32.partialorder %v1419, 0.0
    %vm1484 = vcmp.gt.f32.partialorder %v1420, 0.0
    %vm1485 = vcmp.gt.f32.partialorder %v1421, 0.0
    %vm1486 = vcmp.gt.f32.partialorder %v1422, 0.0
    %vm1487 = vcmp.gt.f32.partialorder %v1423, 0.0
    %vm1488 = vcmp.gt.f32.partialorder %v1424, 0.0
    %vm1489 = vcmp.gt.f32.partialorder %v1425, 0.0
    %vm1490 = vcmp.gt.f32.partialorder %v1426, 0.0
    %vm1491 = vcmp.gt.f32.partialorder %v1427, 0.0
    %vm1492 = vcmp.gt.f32.partialorder %v1428, 0.0
    %vm1493 = vcmp.gt.f32.partialorder %v1429, 0.0
    %vm1494 = vcmp.gt.f32.partialorder %v1430, 0.0
    %vm1495 = vcmp.gt.f32.partialorder %v1431, 0.0
    %vm1496 = vcmp.gt.f32.partialorder %v1432, 0.0
    %vm1497 = vcmp.gt.f32.partialorder %v1433, 0.0
    %vm1498 = vcmp.gt.f32.partialorder %v1434, 0.0
    %vm1499 = vcmp.gt.f32.partialorder %v1435, 0.0
    %vm1500 = vcmp.gt.f32.partialorder %v1436, 0.0
    %vm1501 = vcmp.gt.f32.partialorder %v1437, 0.0
    %vm1502 = vcmp.gt.f32.partialorder %v1438, 0.0
    %vm1503 = vcmp.gt.f32.partialorder %v1439, 0.0
    %vm1504 = vcmp.gt.f32.partialorder %v1440, 0.0
    %vm1505 = vcmp.gt.f32.partialorder %v1441, 0.0
    %vm1506 = vcmp.gt.f32.partialorder %v1442, 0.0
    %vm1507 = vcmp.gt.f32.partialorder %v1443, 0.0
    %vm1508 = vcmp.gt.f32.partialorder %v1444, 0.0
    %vm1509 = vcmp.gt.f32.partialorder %v1445, 0.0
    %vm1510 = vcmp.gt.f32.partialorder %v1446, 0.0
    %vm1511 = vcmp.gt.f32.partialorder %v1447, 0.0
    %vm1512 = vcmp.gt.f32.partialorder %v1448, 0.0
    %vm1513 = vcmp.gt.f32.partialorder %v1449, 0.0
    %vm1514 = vcmp.gt.f32.partialorder %v1450, 0.0
    %vm1515 = vcmp.gt.f32.partialorder %v1451, 0.0
    %vm1516 = vcmp.gt.f32.partialorder %v1452, 0.0
    %vm1517 = vcmp.gt.f32.partialorder %v1453, 0.0
    %vm1518 = vcmp.gt.f32.partialorder %v1454, 0.0
    %vm1519 = vcmp.gt.f32.partialorder %v1455, 0.0
    %vm1520 = vcmp.gt.f32.partialorder %v1456, 0.0
    %vm1521 = vcmp.gt.f32.partialorder %v1457, 0.0
    %vm1522 = vcmp.gt.f32.partialorder %v1458, 0.0
    %vm1523 = vcmp.gt.f32.partialorder %v1459, 0.0
    %vm1524 = vcmp.gt.f32.partialorder %v1460, 0.0
    %vm1525 = vcmp.gt.f32.partialorder %v1461, 0.0
    %vm1526 = vcmp.gt.f32.partialorder %v1462, 0.0
    %vm1527 = vcmp.gt.f32.partialorder %v1463, 0.0
    %vm1528 = vcmp.gt.f32.partialorder %v1464, 0.0
    %vm1529 = vcmp.gt.f32.partialorder %v1465, 0.0
    %vm1530 = vcmp.gt.f32.partialorder %v1466, 0.0
    %vm1531 = vcmp.gt.f32.partialorder %v1467, 0.0
    %vm1532 = vcmp.gt.f32.partialorder %v1468, 0.0
    %vm1533 = vcmp.gt.f32.partialorder %v1469, 0.0
    %vm1534 = vcmp.gt.f32.partialorder %v1470, 0.0
    %vm1535 = vcmp.gt.f32.partialorder %v1471, 0.0
    %vm1536 = vcmp.gt.f32.partialorder %v1472, 0.0
    %vm1537 = vcmp.gt.f32.partialorder %v1473, 0.0
    %vm1538 = vcmp.gt.f32.partialorder %v1474, 0.0
    %vm1539 = vcmp.gt.f32.partialorder %v1475, 0.0
    %vm1540 = vcmp.gt.f32.partialorder %v1476, 0.0
    %vm1541 = vcmp.gt.f32.partialorder %v1477, 0.0
    %vm1542 = vcmp.gt.f32.partialorder %v1478, 0.0
    %vm1543 = vcmp.gt.f32.partialorder %v1479, 0.0
    %vm1544 = vcmp.gt.f32.partialorder %v1480, 0.0
    %v1545 = vmul.f32 %v1417, 0.2
    %v1546 = vmul.f32 %v1418, 0.2
    %v1547 = vmul.f32 %v1419, 0.2
    %v1548 = vmul.f32 %v1420, 0.2
    %v1549 = vmul.f32 %v1421, 0.2
    %v1550 = vmul.f32 %v1422, 0.2
    %v1551 = vmul.f32 %v1423, 0.2
    %v1552 = vmul.f32 %v1424, 0.2
    %v1553 = vmul.f32 %v1425, 0.2
    %v1554 = vmul.f32 %v1426, 0.2
    %v1555 = vmul.f32 %v1427, 0.2
    %v1556 = vmul.f32 %v1428, 0.2
    %v1557 = vmul.f32 %v1429, 0.2
    %v1558 = vmul.f32 %v1430, 0.2
    %v1559 = vmul.f32 %v1431, 0.2
    %v1560 = vmul.f32 %v1432, 0.2
    %v1561 = vmul.f32 %v1433, 0.2
    %v1562 = vmul.f32 %v1434, 0.2
    %v1563 = vmul.f32 %v1435, 0.2
    %v1564 = vmul.f32 %v1436, 0.2
    %v1565 = vmul.f32 %v1437, 0.2
    %v1566 = vmul.f32 %v1438, 0.2
    %v1567 = vmul.f32 %v1439, 0.2
    %v1568 = vmul.f32 %v1440, 0.2
    %v1569 = vmul.f32 %v1441, 0.2
    %v1570 = vmul.f32 %v1442, 0.2
    %v1571 = vmul.f32 %v1443, 0.2
    %v1572 = vmul.f32 %v1444, 0.2
    %v1573 = vmul.f32 %v1445, 0.2
    %v1574 = vmul.f32 %v1446, 0.2
    %v1575 = vmul.f32 %v1447, 0.2
    %v1576 = vmul.f32 %v1448, 0.2
    %v1577 = vmul.f32 %v1449, 0.2
    %v1578 = vmul.f32 %v1450, 0.2
    %v1579 = vmul.f32 %v1451, 0.2
    %v1580 = vmul.f32 %v1452, 0.2
    %v1581 = vmul.f32 %v1453, 0.2
    %v1582 = vmul.f32 %v1454, 0.2
    %v1583 = vmul.f32 %v1455, 0.2
    %v1584 = vmul.f32 %v1456, 0.2
    %v1585 = vmul.f32 %v1457, 0.2
    %v1586 = vmul.f32 %v1458, 0.2
    %v1587 = vmul.f32 %v1459, 0.2
    %v1588 = vmul.f32 %v1460, 0.2
    %v1589 = vmul.f32 %v1461, 0.2
    %v1590 = vmul.f32 %v1462, 0.2
    %v1591 = vmul.f32 %v1463, 0.2
    %v1592 = vmul.f32 %v1464, 0.2
    %v1593 = vmul.f32 %v1465, 0.2
    %v1594 = vmul.f32 %v1466, 0.2
    %v1595 = vmul.f32 %v1467, 0.2
    %v1596 = vmul.f32 %v1468, 0.2
    %v1597 = vmul.f32 %v1469, 0.2
    %v1598 = vmul.f32 %v1470, 0.2
    %v1599 = vmul.f32 %v1471, 0.2
    %v1600 = vmul.f32 %v1472, 0.2
    %v1601 = vmul.f32 %v1473, 0.2
    %v1602 = vmul.f32 %v1474, 0.2
    %v1603 = vmul.f32 %v1475, 0.2
    %v1604 = vmul.f32 %v1476, 0.2
    %v1605 = vmul.f32 %v1477, 0.2
    %v1606 = vmul.f32 %v1478, 0.2
    %v1607 = vmul.f32 %v1479, 0.2
    %v1608 = vmul.f32 %v1480, 0.2
    %v1609 = vsel %vm1481, %v1417, %v1545
    %v1610 = vsel %vm1482, %v1418, %v1546
    %v1611 = vsel %vm1483, %v1419, %v1547
    %v1612 = vsel %vm1484, %v1420, %v1548
    %v1613 = vsel %vm1485, %v1421, %v1549
    %v1614 = vsel %vm1486, %v1422, %v1550
    %v1615 = vsel %vm1487, %v1423, %v1551
    %v1616 = vsel %vm1488, %v1424, %v1552
    %v1617 = vsel %vm1489, %v1425, %v1553
    %v1618 = vsel %vm1490, %v1426, %v1554
    %v1619 = vsel %vm1491, %v1427, %v1555
    %v1620 = vsel %vm1492, %v1428, %v1556
    %v1621 = vsel %vm1493, %v1429, %v1557
    %v1622 = vsel %vm1494, %v1430, %v1558
    %v1623 = vsel %vm1495, %v1431, %v1559
    %v1624 = vsel %vm1496, %v1432, %v1560
    %v1625 = vsel %vm1497, %v1433, %v1561
    %v1626 = vsel %vm1498, %v1434, %v1562
    %v1627 = vsel %vm1499, %v1435, %v1563
    %v1628 = vsel %vm1500, %v1436, %v1564
    %v1629 = vsel %vm1501, %v1437, %v1565
    %v1630 = vsel %vm1502, %v1438, %v1566
    %v1631 = vsel %vm1503, %v1439, %v1567
    %v1632 = vsel %vm1504, %v1440, %v1568
    %v1633 = vsel %vm1505, %v1441, %v1569
    %v1634 = vsel %vm1506, %v1442, %v1570
    %v1635 = vsel %vm1507, %v1443, %v1571
    %v1636 = vsel %vm1508, %v1444, %v1572
    %v1637 = vsel %vm1509, %v1445, %v1573
    %v1638 = vsel %vm1510, %v1446, %v1574
    %v1639 = vsel %vm1511, %v1447, %v1575
    %v1640 = vsel %vm1512, %v1448, %v1576
    %v1641 = vsel %vm1513, %v1449, %v1577
    %v1642 = vsel %vm1514, %v1450, %v1578
    %v1643 = vsel %vm1515, %v1451, %v1579
    %v1644 = vsel %vm1516, %v1452, %v1580
    %v1645 = vsel %vm1517, %v1453, %v1581
    %v1646 = vsel %vm1518, %v1454, %v1582
    %v1647 = vsel %vm1519, %v1455, %v1583
    %v1648 = vsel %vm1520, %v1456, %v1584
    %v1649 = vsel %vm1521, %v1457, %v1585
    %v1650 = vsel %vm1522, %v1458, %v1586
    %v1651 = vsel %vm1523, %v1459, %v1587
    %v1652 = vsel %vm1524, %v1460, %v1588
    %v1653 = vsel %vm1525, %v1461, %v1589
    %v1654 = vsel %vm1526, %v1462, %v1590
    %v1655 = vsel %vm1527, %v1463, %v1591
    %v1656 = vsel %vm1528, %v1464, %v1592
    %v1657 = vsel %vm1529, %v1465, %v1593
    %v1658 = vsel %vm1530, %v1466, %v1594
    %v1659 = vsel %vm1531, %v1467, %v1595
    %v1660 = vsel %vm1532, %v1468, %v1596
    %v1661 = vsel %vm1533, %v1469, %v1597
    %v1662 = vsel %vm1534, %v1470, %v1598
    %v1663 = vsel %vm1535, %v1471, %v1599
    %v1664 = vsel %vm1536, %v1472, %v1600
    %v1665 = vsel %vm1537, %v1473, %v1601
    %v1666 = vsel %vm1538, %v1474, %v1602
    %v1667 = vsel %vm1539, %v1475, %v1603
    %v1668 = vsel %vm1540, %v1476, %v1604
    %v1669 = vsel %vm1541, %v1477, %v1605
    %v1670 = vsel %vm1542, %v1478, %v1606
    %v1671 = vsel %vm1543, %v1479, %v1607
    %v1672 = vsel %vm1544, %v1480, %v1608
    %s1673 = sshll.u32 %s208, 4
    %1674 = dma.done %s213, %s1673
    %s1675 = scalar_lea.hbm %s1, 32768
    %s1677 = sshll.u32 1, 14
    %s1678 = sxor.u32 4294967295, %s1677
    %s1680 = sadd.s32 2, %s144
    %s1682 = sshll.u32 7, 26
    %s1683 = sxor.u32 4294967295, %s1682
    %s1684 = sand.u32 0, %s1683
    %s1685 = sshll.u32 %s1680, 26
    %s1686 = sor.u32 %s1684, %s1685
    %s1687 = sshll.u32 [#allocation2], 4
    %s1688 = int_to_ptr.vmem [resolvable:$true] %s1687
    %1691 = sst [smem:[#allocation25]] 512
    %s1692 = scalar_lea.smem [#allocation25], 1
    %1693 = sst [smem:[%s1692]] 512
    %s1694 = scalar_lea.smem [#allocation25], 2
    %1695 = sst [smem:[%s1694]] 4
    %s1696 = scalar_lea.smem [#allocation25], 3
    %1697 = sst [smem:[%s1696]] 64
    %s1698 = scalar_lea.smem [#allocation25], 4
    %1699 = sst [smem:[%s1698]] 128
    %s1700 = scalar_lea.smem [#allocation25], 5
    %1701 = sst [smem:[%s1700]] 2
    %s1702 = scalar_lea.smem [#allocation25], 6
    %1703 = sst [smem:[%s1702]] 256
    %s1704 = scalar_lea.smem [#allocation25], 7
    %1705 = sst [smem:[%s1704]] 64
    %s1706 = scalar_lea.smem [#allocation25], 8
    %1707 = sst [smem:[%s1706]] 4
    %1709 = dma.general %s1675, 16384, %s1688, [#allocation3], [#allocation24], [#allocation25], %s1686, 0
    %v1710 = vpack.c.bf16 %v1613, %v1609
    %v1711 = vpack.c.bf16 %v1614, %v1610
    %v1712 = vpack.c.bf16 %v1615, %v1611
    %v1713 = vpack.c.bf16 %v1616, %v1612
    %v1714 = vpack.c.bf16 %v1621, %v1617
    %v1715 = vpack.c.bf16 %v1622, %v1618
    %v1716 = vpack.c.bf16 %v1623, %v1619
    %v1717 = vpack.c.bf16 %v1624, %v1620
    %v1718 = vpack.c.bf16 %v1629, %v1625
    %v1719 = vpack.c.bf16 %v1630, %v1626
    %v1720 = vpack.c.bf16 %v1631, %v1627
    %v1721 = vpack.c.bf16 %v1632, %v1628
    %v1722 = vpack.c.bf16 %v1637, %v1633
    %v1723 = vpack.c.bf16 %v1638, %v1634
    %v1724 = vpack.c.bf16 %v1639, %v1635
    %v1725 = vpack.c.bf16 %v1640, %v1636
    %v1726 = vpack.c.bf16 %v1645, %v1641
    %v1727 = vpack.c.bf16 %v1646, %v1642
    %v1728 = vpack.c.bf16 %v1647, %v1643
    %v1729 = vpack.c.bf16 %v1648, %v1644
    %v1730 = vpack.c.bf16 %v1653, %v1649
    %v1731 = vpack.c.bf16 %v1654, %v1650
    %v1732 = vpack.c.bf16 %v1655, %v1651
    %v1733 = vpack.c.bf16 %v1656, %v1652
    %v1734 = vpack.c.bf16 %v1661, %v1657
    %v1735 = vpack.c.bf16 %v1662, %v1658
    %v1736 = vpack.c.bf16 %v1663, %v1659
    %v1737 = vpack.c.bf16 %v1664, %v1660
    %v1738 = vpack.c.bf16 %v1669, %v1665
    %v1739 = vpack.c.bf16 %v1670, %v1666
    %v1740 = vpack.c.bf16 %v1671, %v1667
    %v1741 = vpack.c.bf16 %v1672, %v1668
    %v1742 = vld [vmem:[%s212] sm:$0xff]
    %v1743 = vld [vmem:[%s212 + $0x8] sm:$0xff]
    %v1744 = vld [vmem:[%s212 + $0x10] sm:$0xff]
    %v1745 = vld [vmem:[%s212 + $0x18] sm:$0xff]
    %v1746 = vld [vmem:[%s212 + $0x20] sm:$0xff]
    %v1747 = vld [vmem:[%s212 + $0x28] sm:$0xff]
    %v1748 = vld [vmem:[%s212 + $0x30] sm:$0xff]
    %v1749 = vld [vmem:[%s212 + $0x38] sm:$0xff]
    %v1750 = vld [vmem:[%s212 + $0x40] sm:$0xff]
    %v1751 = vld [vmem:[%s212 + $0x48] sm:$0xff]
    %v1752 = vld [vmem:[%s212 + $0x50] sm:$0xff]
    %v1753 = vld [vmem:[%s212 + $0x58] sm:$0xff]
    %v1754 = vld [vmem:[%s212 + $0x60] sm:$0xff]
    %v1755 = vld [vmem:[%s212 + $0x68] sm:$0xff]
    %v1756 = vld [vmem:[%s212 + $0x70] sm:$0xff]
    %v1757 = vld [vmem:[%s212 + $0x78] sm:$0xff]
    %v1758 = vld [vmem:[%s212 + $0x80] sm:$0xff]
    %v1759 = vld [vmem:[%s212 + $0x88] sm:$0xff]
    %v1760 = vld [vmem:[%s212 + $0x90] sm:$0xff]
    %v1761 = vld [vmem:[%s212 + $0x98] sm:$0xff]
    %v1762 = vld [vmem:[%s212 + $0xa0] sm:$0xff]
    %v1763 = vld [vmem:[%s212 + $0xa8] sm:$0xff]
    %v1764 = vld [vmem:[%s212 + $0xb0] sm:$0xff]
    %v1765 = vld [vmem:[%s212 + $0xb8] sm:$0xff]
    %v1766 = vld [vmem:[%s212 + $0xc0] sm:$0xff]
    %v1767 = vld [vmem:[%s212 + $0xc8] sm:$0xff]
    %v1768 = vld [vmem:[%s212 + $0xd0] sm:$0xff]
    %v1769 = vld [vmem:[%s212 + $0xd8] sm:$0xff]
    %v1770 = vld [vmem:[%s212 + $0xe0] sm:$0xff]
    %v1771 = vld [vmem:[%s212 + $0xe8] sm:$0xff]
    %v1772 = vld [vmem:[%s212 + $0xf0] sm:$0xff]
    %v1773 = vld [vmem:[%s212 + $0xf8] sm:$0xff]
    %v1774 = vld [vmem:[%s212 + $0x100] sm:$0xff]
    %v1775 = vld [vmem:[%s212 + $0x108] sm:$0xff]
    %v1776 = vld [vmem:[%s212 + $0x110] sm:$0xff]
    %v1777 = vld [vmem:[%s212 + $0x118] sm:$0xff]
    %v1778 = vld [vmem:[%s212 + $0x120] sm:$0xff]
    %v1779 = vld [vmem:[%s212 + $0x128] sm:$0xff]
    %v1780 = vld [vmem:[%s212 + $0x130] sm:$0xff]
    %v1781 = vld [vmem:[%s212 + $0x138] sm:$0xff]
    %v1782 = vld [vmem:[%s212 + $0x140] sm:$0xff]
    %v1783 = vld [vmem:[%s212 + $0x148] sm:$0xff]
    %v1784 = vld [vmem:[%s212 + $0x150] sm:$0xff]
    %v1785 = vld [vmem:[%s212 + $0x158] sm:$0xff]
    %v1786 = vld [vmem:[%s212 + $0x160] sm:$0xff]
    %v1787 = vld [vmem:[%s212 + $0x168] sm:$0xff]
    %v1788 = vld [vmem:[%s212 + $0x170] sm:$0xff]
    %v1789 = vld [vmem:[%s212 + $0x178] sm:$0xff]
    %v1790 = vld [vmem:[%s212 + $0x180] sm:$0xff]
    %v1791 = vld [vmem:[%s212 + $0x188] sm:$0xff]
    %v1792 = vld [vmem:[%s212 + $0x190] sm:$0xff]
    %v1793 = vld [vmem:[%s212 + $0x198] sm:$0xff]
    %v1794 = vld [vmem:[%s212 + $0x1a0] sm:$0xff]
    %v1795 = vld [vmem:[%s212 + $0x1a8] sm:$0xff]
    %v1796 = vld [vmem:[%s212 + $0x1b0] sm:$0xff]
    %v1797 = vld [vmem:[%s212 + $0x1b8] sm:$0xff]
    %v1798 = vld [vmem:[%s212 + $0x1c0] sm:$0xff]
    %v1799 = vld [vmem:[%s212 + $0x1c8] sm:$0xff]
    %v1800 = vld [vmem:[%s212 + $0x1d0] sm:$0xff]
    %v1801 = vld [vmem:[%s212 + $0x1d8] sm:$0xff]
    %v1802 = vld [vmem:[%s212 + $0x1e0] sm:$0xff]
    %v1803 = vld [vmem:[%s212 + $0x1e8] sm:$0xff]
    %v1804 = vld [vmem:[%s212 + $0x1f0] sm:$0xff]
    %v1805 = vld [vmem:[%s212 + $0x1f8] sm:$0xff]
    %v1806 = vld [vmem:[%s212 + $0x200] sm:$0xff]
    %v1807 = vld [vmem:[%s212 + $0x208] sm:$0xff]
    %v1808 = vld [vmem:[%s212 + $0x210] sm:$0xff]
    %v1809 = vld [vmem:[%s212 + $0x218] sm:$0xff]
    %v1810 = vld [vmem:[%s212 + $0x220] sm:$0xff]
    %v1811 = vld [vmem:[%s212 + $0x228] sm:$0xff]
    %v1812 = vld [vmem:[%s212 + $0x230] sm:$0xff]
    %v1813 = vld [vmem:[%s212 + $0x238] sm:$0xff]
    %v1814 = vld [vmem:[%s212 + $0x240] sm:$0xff]
    %v1815 = vld [vmem:[%s212 + $0x248] sm:$0xff]
    %v1816 = vld [vmem:[%s212 + $0x250] sm:$0xff]
    %v1817 = vld [vmem:[%s212 + $0x258] sm:$0xff]
    %v1818 = vld [vmem:[%s212 + $0x260] sm:$0xff]
    %v1819 = vld [vmem:[%s212 + $0x268] sm:$0xff]
    %v1820 = vld [vmem:[%s212 + $0x270] sm:$0xff]
    %v1821 = vld [vmem:[%s212 + $0x278] sm:$0xff]
    %v1822 = vld [vmem:[%s212 + $0x280] sm:$0xff]
    %v1823 = vld [vmem:[%s212 + $0x288] sm:$0xff]
    %v1824 = vld [vmem:[%s212 + $0x290] sm:$0xff]
    %v1825 = vld [vmem:[%s212 + $0x298] sm:$0xff]
    %v1826 = vld [vmem:[%s212 + $0x2a0] sm:$0xff]
    %v1827 = vld [vmem:[%s212 + $0x2a8] sm:$0xff]
    %v1828 = vld [vmem:[%s212 + $0x2b0] sm:$0xff]
    %v1829 = vld [vmem:[%s212 + $0x2b8] sm:$0xff]
    %v1830 = vld [vmem:[%s212 + $0x2c0] sm:$0xff]
    %v1831 = vld [vmem:[%s212 + $0x2c8] sm:$0xff]
    %v1832 = vld [vmem:[%s212 + $0x2d0] sm:$0xff]
    %v1833 = vld [vmem:[%s212 + $0x2d8] sm:$0xff]
    %v1834 = vld [vmem:[%s212 + $0x2e0] sm:$0xff]
    %v1835 = vld [vmem:[%s212 + $0x2e8] sm:$0xff]
    %v1836 = vld [vmem:[%s212 + $0x2f0] sm:$0xff]
    %v1837 = vld [vmem:[%s212 + $0x2f8] sm:$0xff]
    %v1838 = vld [vmem:[%s212 + $0x300] sm:$0xff]
    %v1839 = vld [vmem:[%s212 + $0x308] sm:$0xff]
    %v1840 = vld [vmem:[%s212 + $0x310] sm:$0xff]
    %v1841 = vld [vmem:[%s212 + $0x318] sm:$0xff]
    %v1842 = vld [vmem:[%s212 + $0x320] sm:$0xff]
    %v1843 = vld [vmem:[%s212 + $0x328] sm:$0xff]
    %v1844 = vld [vmem:[%s212 + $0x330] sm:$0xff]
    %v1845 = vld [vmem:[%s212 + $0x338] sm:$0xff]
    %v1846 = vld [vmem:[%s212 + $0x340] sm:$0xff]
    %v1847 = vld [vmem:[%s212 + $0x348] sm:$0xff]
    %v1848 = vld [vmem:[%s212 + $0x350] sm:$0xff]
    %v1849 = vld [vmem:[%s212 + $0x358] sm:$0xff]
    %v1850 = vld [vmem:[%s212 + $0x360] sm:$0xff]
    %v1851 = vld [vmem:[%s212 + $0x368] sm:$0xff]
    %v1852 = vld [vmem:[%s212 + $0x370] sm:$0xff]
    %v1853 = vld [vmem:[%s212 + $0x378] sm:$0xff]
    %v1854 = vld [vmem:[%s212 + $0x380] sm:$0xff]
    %v1855 = vld [vmem:[%s212 + $0x388] sm:$0xff]
    %v1856 = vld [vmem:[%s212 + $0x390] sm:$0xff]
    %v1857 = vld [vmem:[%s212 + $0x398] sm:$0xff]
    %v1858 = vld [vmem:[%s212 + $0x3a0] sm:$0xff]
    %v1859 = vld [vmem:[%s212 + $0x3a8] sm:$0xff]
    %v1860 = vld [vmem:[%s212 + $0x3b0] sm:$0xff]
    %v1861 = vld [vmem:[%s212 + $0x3b8] sm:$0xff]
    %v1862 = vld [vmem:[%s212 + $0x3c0] sm:$0xff]
    %v1863 = vld [vmem:[%s212 + $0x3c8] sm:$0xff]
    %v1864 = vld [vmem:[%s212 + $0x3d0] sm:$0xff]
    %v1865 = vld [vmem:[%s212 + $0x3d8] sm:$0xff]
    %v1866 = vld [vmem:[%s212 + $0x3e0] sm:$0xff]
    %v1867 = vld [vmem:[%s212 + $0x3e8] sm:$0xff]
    %v1868 = vld [vmem:[%s212 + $0x3f0] sm:$0xff]
    %v1869 = vld [vmem:[%s212 + $0x3f8] sm:$0xff]
    %1870 = vmatprep.subr.bf16.mxu0 %v1743
    %1871 = vmatpush1.bf16.msra.mxu0 %v1742
    %1872 = vmatprep.subr.bf16.mxu0 %v1747
    %1873 = vmatpush1.bf16.msra.mxu0 %v1746
    %1874 = vmatprep.subr.bf16.mxu0 %v1751
    %1875 = vmatpush1.bf16.msra.mxu0 %v1750
    %1876 = vmatprep.subr.bf16.mxu0 %v1755
    %1877 = vmatpush1.bf16.msra.mxu0 %v1754
    %1878 = vmatprep.subr.bf16.mxu0 %v1759
    %1879 = vmatpush1.bf16.msra.mxu0 %v1758
    %1880 = vmatprep.subr.bf16.mxu0 %v1763
    %1881 = vmatpush1.bf16.msra.mxu0 %v1762
    %1882 = vmatprep.subr.bf16.mxu0 %v1767
    %1883 = vmatpush1.bf16.msra.mxu0 %v1766
    %1884 = vmatprep.subr.bf16.mxu0 %v1771
    %1885 = vmatpush1.bf16.msra.mxu0 %v1770
    %1886 = vmatprep.subr.bf16.mxu0 %v1775
    %1887 = vmatpush1.bf16.msra.mxu0 %v1774
    %1888 = vmatprep.subr.bf16.mxu0 %v1779
    %1889 = vmatpush1.bf16.msra.mxu0 %v1778
    %1890 = vmatprep.subr.bf16.mxu0 %v1783
    %1891 = vmatpush1.bf16.msra.mxu0 %v1782
    %1892 = vmatprep.subr.bf16.mxu0 %v1787
    %1893 = vmatpush1.bf16.msra.mxu0 %v1786
    %1894 = vmatprep.subr.bf16.mxu0 %v1791
    %1895 = vmatpush1.bf16.msra.mxu0 %v1790
    %1896 = vmatprep.subr.bf16.mxu0 %v1795
    %1897 = vmatpush1.bf16.msra.mxu0 %v1794
    %1898 = vmatprep.subr.bf16.mxu0 %v1799
    %1899 = vmatpush1.bf16.msra.mxu0 %v1798
    %1900 = vmatprep.subr.bf16.mxu0 %v1803
    %1901 = vmatpush1.bf16.msra.mxu0 %v1802
    %1902 = vmatprep.mubr.bf16.mxu0 %v1711
    %1903 = vmatmul.mubr.bf16.gmra.mrb[0].mxu0 %v1710
    %v1904 = vpop.f32.mrb[0].mxu0
    %v1905 = vadd.f32 0.0, %v1904
    %v1906 = vpop.f32.mrb[0].mxu0
    %v1907 = vadd.f32 0.0, %v1906
    %v1908 = vpop.f32.mrb[0].mxu0
    %v1909 = vadd.f32 0.0, %v1908
    %v1910 = vpop.f32.mrb[0].mxu0
    %v1911 = vadd.f32 0.0, %v1910
    %1912 = vmatprep.mubr.bf16.mxu0 %v1715
    %1913 = vmatmul.mubr.bf16.gmra.mrb[0].mxu0 %v1714
    %v1914 = vpop.f32.mrb[0].mxu0
    %v1915 = vadd.f32 0.0, %v1914
    %v1916 = vpop.f32.mrb[0].mxu0
    %v1917 = vadd.f32 0.0, %v1916
    %v1918 = vpop.f32.mrb[0].mxu0
    %v1919 = vadd.f32 0.0, %v1918
    %v1920 = vpop.f32.mrb[0].mxu0
    %v1921 = vadd.f32 0.0, %v1920
    %1922 = vmatprep.mubr.bf16.mxu0 %v1719
    %1923 = vmatmul.mubr.bf16.gmra.mrb[0].mxu0 %v1718
    %v1924 = vpop.f32.mrb[0].mxu0
    %v1925 = vadd.f32 0.0, %v1924
    %v1926 = vpop.f32.mrb[0].mxu0
    %v1927 = vadd.f32 0.0, %v1926
    %v1928 = vpop.f32.mrb[0].mxu0
    %v1929 = vadd.f32 0.0, %v1928
    %v1930 = vpop.f32.mrb[0].mxu0
    %v1931 = vadd.f32 0.0, %v1930
    %1932 = vmatprep.mubr.bf16.mxu0 %v1723
    %1933 = vmatmul.mubr.bf16.gmra.mrb[0].mxu0 %v1722
    %v1934 = vpop.f32.mrb[0].mxu0
    %v1935 = vadd.f32 0.0, %v1934
    %v1936 = vpop.f32.mrb[0].mxu0
    %v1937 = vadd.f32 0.0, %v1936
    %v1938 = vpop.f32.mrb[0].mxu0
    %v1939 = vadd.f32 0.0, %v1938
    %v1940 = vpop.f32.mrb[0].mxu0
    %v1941 = vadd.f32 0.0, %v1940
    %1942 = vmatprep.mubr.bf16.mxu0 %v1727
    %1943 = vmatmul.mubr.bf16.gmra.mrb[0].mxu0 %v1726
    %v1944 = vpop.f32.mrb[0].mxu0
    %v1945 = vadd.f32 0.0, %v1944
    %v1946 = vpop.f32.mrb[0].mxu0
    %v1947 = vadd.f32 0.0, %v1946
    %v1948 = vpop.f32.mrb[0].mxu0
    %v1949 = vadd.f32 0.0, %v1948
    %v1950 = vpop.f32.mrb[0].mxu0
    %v1951 = vadd.f32 0.0, %v1950
    %1952 = vmatprep.mubr.bf16.mxu0 %v1731
    %1953 = vmatmul.mubr.bf16.gmra.mrb[0].mxu0 %v1730
    %v1954 = vpop.f32.mrb[0].mxu0
    %v1955 = vadd.f32 0.0, %v1954
    %v1956 = vpop.f32.mrb[0].mxu0
    %v1957 = vadd.f32 0.0, %v1956
    %v1958 = vpop.f32.mrb[0].mxu0
    %v1959 = vadd.f32 0.0, %v1958
    %v1960 = vpop.f32.mrb[0].mxu0
    %v1961 = vadd.f32 0.0, %v1960
    %1962 = vmatprep.mubr.bf16.mxu0 %v1735
    %1963 = vmatmul.mubr.bf16.gmra.mrb[0].mxu0 %v1734
    %v1964 = vpop.f32.mrb[0].mxu0
    %v1965 = vadd.f32 0.0, %v1964
    %v1966 = vpop.f32.mrb[0].mxu0
    %v1967 = vadd.f32 0.0, %v1966
    %v1968 = vpop.f32.mrb[0].mxu0
    %v1969 = vadd.f32 0.0, %v1968
    %v1970 = vpop.f32.mrb[0].mxu0
    %v1971 = vadd.f32 0.0, %v1970
    %1972 = vmatprep.mubr.bf16.mxu0 %v1739
    %1973 = vmatmul.mubr.bf16.gmra.mrb[0].mxu0 %v1738
    %v1974 = vpop.f32.mrb[0].mxu0
    %v1975 = vadd.f32 0.0, %v1974
    %v1976 = vpop.f32.mrb[0].mxu0
    %v1977 = vadd.f32 0.0, %v1976
    %v1978 = vpop.f32.mrb[0].mxu0
    %v1979 = vadd.f32 0.0, %v1978
    %v1980 = vpop.f32.mrb[0].mxu0
    %v1981 = vadd.f32 0.0, %v1980
    %1982 = vdwg.mxu0
    %1983 = vmatprep.subr.bf16.mxu0 %v1807
    %1984 = vmatpush1.bf16.msra.mxu0 %v1806
    %1985 = vmatprep.subr.bf16.mxu0 %v1811
    %1986 = vmatpush1.bf16.msra.mxu0 %v1810
    %1987 = vmatprep.subr.bf16.mxu0 %v1815
    %1988 = vmatpush1.bf16.msra.mxu0 %v1814
    %1989 = vmatprep.subr.bf16.mxu0 %v1819
    %1990 = vmatpush1.bf16.msra.mxu0 %v1818
    %1991 = vmatprep.subr.bf16.mxu0 %v1823
    %1992 = vmatpush1.bf16.msra.mxu0 %v1822
    %1993 = vmatprep.subr.bf16.mxu0 %v1827
    %1994 = vmatpush1.bf16.msra.mxu0 %v1826
    %1995 = vmatprep.subr.bf16.mxu0 %v1831
    %1996 = vmatpush1.bf16.msra.mxu0 %v1830
    %1997 = vmatprep.subr.bf16.mxu0 %v1835
    %1998 = vmatpush1.bf16.msra.mxu0 %v1834
    %1999 = vmatprep.subr.bf16.mxu0 %v1839
    %2000 = vmatpush1.bf16.msra.mxu0 %v1838
    %2001 = vmatprep.subr.bf16.mxu0 %v1843
    %2002 = vmatpush1.bf16.msra.mxu0 %v1842
    %2003 = vmatprep.subr.bf16.mxu0 %v1847
    %2004 = vmatpush1.bf16.msra.mxu0 %v1846
    %2005 = vmatprep.subr.bf16.mxu0 %v1851
    %2006 = vmatpush1.bf16.msra.mxu0 %v1850
    %2007 = vmatprep.subr.bf16.mxu0 %v1855
    %2008 = vmatpush1.bf16.msra.mxu0 %v1854
    %2009 = vmatprep.subr.bf16.mxu0 %v1859
    %2010 = vmatpush1.bf16.msra.mxu0 %v1858
    %2011 = vmatprep.subr.bf16.mxu0 %v1863
    %2012 = vmatpush1.bf16.msra.mxu0 %v1862
    %2013 = vmatprep.subr.bf16.mxu0 %v1867
    %2014 = vmatpush1.bf16.msra.mxu0 %v1866
    %2015 = vmatprep.mubr.bf16.mxu0 %v1713
    %2016 = vmatmul.mubr.bf16.gmra.mrb[0].mxu0 %v1712
    %v2017 = vpop.f32.mrb[0].mxu0
    %v2018 = vadd.f32 %v1905, %v2017
    %v2019 = vpop.f32.mrb[0].mxu0
    %v2020 = vadd.f32 %v1907, %v2019
    %v2021 = vpop.f32.mrb[0].mxu0
    %v2022 = vadd.f32 %v1909, %v2021
    %v2023 = vpop.f32.mrb[0].mxu0
    %v2024 = vadd.f32 %v1911, %v2023
    %2025 = vmatprep.mubr.bf16.mxu0 %v1717
    %2026 = vmatmul.mubr.bf16.gmra.mrb[0].mxu0 %v1716
    %v2027 = vpop.f32.mrb[0].mxu0
    %v2028 = vadd.f32 %v1915, %v2027
    %v2029 = vpop.f32.mrb[0].mxu0
    %v2030 = vadd.f32 %v1917, %v2029
    %v2031 = vpop.f32.mrb[0].mxu0
    %v2032 = vadd.f32 %v1919, %v2031
    %v2033 = vpop.f32.mrb[0].mxu0
    %v2034 = vadd.f32 %v1921, %v2033
    %2035 = vmatprep.mubr.bf16.mxu0 %v1721
    %2036 = vmatmul.mubr.bf16.gmra.mrb[0].mxu0 %v1720
    %v2037 = vpop.f32.mrb[0].mxu0
    %v2038 = vadd.f32 %v1925, %v2037
    %v2039 = vpop.f32.mrb[0].mxu0
    %v2040 = vadd.f32 %v1927, %v2039
    %v2041 = vpop.f32.mrb[0].mxu0
    %v2042 = vadd.f32 %v1929, %v2041
    %v2043 = vpop.f32.mrb[0].mxu0
    %v2044 = vadd.f32 %v1931, %v2043
    %2045 = vmatprep.mubr.bf16.mxu0 %v1725
    %2046 = vmatmul.mubr.bf16.gmra.mrb[0].mxu0 %v1724
    %v2047 = vpop.f32.mrb[0].mxu0
    %v2048 = vadd.f32 %v1935, %v2047
    %v2049 = vpop.f32.mrb[0].mxu0
    %v2050 = vadd.f32 %v1937, %v2049
    %v2051 = vpop.f32.mrb[0].mxu0
    %v2052 = vadd.f32 %v1939, %v2051
    %v2053 = vpop.f32.mrb[0].mxu0
    %v2054 = vadd.f32 %v1941, %v2053
    %2055 = vmatprep.mubr.bf16.mxu0 %v1729
    %2056 = vmatmul.mubr.bf16.gmra.mrb[0].mxu0 %v1728
    %v2057 = vpop.f32.mrb[0].mxu0
    %v2058 = vadd.f32 %v1945, %v2057
    %v2059 = vpop.f32.mrb[0].mxu0
    %v2060 = vadd.f32 %v1947, %v2059
    %v2061 = vpop.f32.mrb[0].mxu0
    %v2062 = vadd.f32 %v1949, %v2061
    %v2063 = vpop.f32.mrb[0].mxu0
    %v2064 = vadd.f32 %v1951, %v2063
    %2065 = vmatprep.mubr.bf16.mxu0 %v1733
    %2066 = vmatmul.mubr.bf16.gmra.mrb[0].mxu0 %v1732
    %v2067 = vpop.f32.mrb[0].mxu0
    %v2068 = vadd.f32 %v1955, %v2067
    %v2069 = vpop.f32.mrb[0].mxu0
    %v2070 = vadd.f32 %v1957, %v2069
    %v2071 = vpop.f32.mrb[0].mxu0
    %v2072 = vadd.f32 %v1959, %v2071
    %v2073 = vpop.f32.mrb[0].mxu0
    %v2074 = vadd.f32 %v1961, %v2073
    %2075 = vmatprep.mubr.bf16.mxu0 %v1737
    %2076 = vmatmul.mubr.bf16.gmra.mrb[0].mxu0 %v1736
    %v2077 = vpop.f32.mrb[0].mxu0
    %v2078 = vadd.f32 %v1965, %v2077
    %v2079 = vpop.f32.mrb[0].mxu0
    %v2080 = vadd.f32 %v1967, %v2079
    %v2081 = vpop.f32.mrb[0].mxu0
    %v2082 = vadd.f32 %v1969, %v2081
    %v2083 = vpop.f32.mrb[0].mxu0
    %v2084 = vadd.f32 %v1971, %v2083
    %2085 = vmatprep.mubr.bf16.mxu0 %v1741
    %2086 = vmatmul.mubr.bf16.gmra.mrb[0].mxu0 %v1740
    %v2087 = vpop.f32.mrb[0].mxu0
    %v2088 = vadd.f32 %v1975, %v2087
    %v2089 = vpop.f32.mrb[0].mxu0
    %v2090 = vadd.f32 %v1977, %v2089
    %v2091 = vpop.f32.mrb[0].mxu0
    %v2092 = vadd.f32 %v1979, %v2091
    %v2093 = vpop.f32.mrb[0].mxu0
    %v2094 = vadd.f32 %v1981, %v2093
    %2095 = vdwg.mxu0
    %2096 = vmatprep.subr.bf16.mxu0 %v1745
    %2097 = vmatpush1.bf16.msra.mxu0 %v1744
    %2098 = vmatprep.subr.bf16.mxu0 %v1749
    %2099 = vmatpush1.bf16.msra.mxu0 %v1748
    %2100 = vmatprep.subr.bf16.mxu0 %v1753
    %2101 = vmatpush1.bf16.msra.mxu0 %v1752
    %2102 = vmatprep.subr.bf16.mxu0 %v1757
    %2103 = vmatpush1.bf16.msra.mxu0 %v1756
    %2104 = vmatprep.subr.bf16.mxu0 %v1761
    %2105 = vmatpush1.bf16.msra.mxu0 %v1760
    %2106 = vmatprep.subr.bf16.mxu0 %v1765
    %2107 = vmatpush1.bf16.msra.mxu0 %v1764
    %2108 = vmatprep.subr.bf16.mxu0 %v1769
    %2109 = vmatpush1.bf16.msra.mxu0 %v1768
    %2110 = vmatprep.subr.bf16.mxu0 %v1773
    %2111 = vmatpush1.bf16.msra.mxu0 %v1772
    %2112 = vmatprep.subr.bf16.mxu0 %v1777
    %2113 = vmatpush1.bf16.msra.mxu0 %v1776
    %2114 = vmatprep.subr.bf16.mxu0 %v1781
    %2115 = vmatpush1.bf16.msra.mxu0 %v1780
    %2116 = vmatprep.subr.bf16.mxu0 %v1785
    %2117 = vmatpush1.bf16.msra.mxu0 %v1784
    %2118 = vmatprep.subr.bf16.mxu0 %v1789
    %2119 = vmatpush1.bf16.msra.mxu0 %v1788
    %2120 = vmatprep.subr.bf16.mxu0 %v1793
    %2121 = vmatpush1.bf16.msra.mxu0 %v1792
    %2122 = vmatprep.subr.bf16.mxu0 %v1797
    %2123 = vmatpush1.bf16.msra.mxu0 %v1796
    %2124 = vmatprep.subr.bf16.mxu0 %v1801
    %2125 = vmatpush1.bf16.msra.mxu0 %v1800
    %2126 = vmatprep.subr.bf16.mxu0 %v1805
    %2127 = vmatpush1.bf16.msra.mxu0 %v1804
    %2128 = vmatprep.mubr.bf16.mxu0 %v1711
    %2129 = vmatmul.mubr.bf16.gmra.mrb[0].mxu0 %v1710
    %v2130 = vpop.f32.mrb[0].mxu0
    %v2131 = vadd.f32 0.0, %v2130
    %v2132 = vpop.f32.mrb[0].mxu0
    %v2133 = vadd.f32 0.0, %v2132
    %v2134 = vpop.f32.mrb[0].mxu0
    %v2135 = vadd.f32 0.0, %v2134
    %v2136 = vpop.f32.mrb[0].mxu0
    %v2137 = vadd.f32 0.0, %v2136
    %2138 = vmatprep.mubr.bf16.mxu0 %v1715
    %2139 = vmatmul.mubr.bf16.gmra.mrb[0].mxu0 %v1714
    %v2140 = vpop.f32.mrb[0].mxu0
    %v2141 = vadd.f32 0.0, %v2140
    %v2142 = vpop.f32.mrb[0].mxu0
    %v2143 = vadd.f32 0.0, %v2142
    %v2144 = vpop.f32.mrb[0].mxu0
    %v2145 = vadd.f32 0.0, %v2144
    %v2146 = vpop.f32.mrb[0].mxu0
    %v2147 = vadd.f32 0.0, %v2146
    %2148 = vmatprep.mubr.bf16.mxu0 %v1719
    %2149 = vmatmul.mubr.bf16.gmra.mrb[0].mxu0 %v1718
    %v2150 = vpop.f32.mrb[0].mxu0
    %v2151 = vadd.f32 0.0, %v2150
    %v2152 = vpop.f32.mrb[0].mxu0
    %v2153 = vadd.f32 0.0, %v2152
    %v2154 = vpop.f32.mrb[0].mxu0
    %v2155 = vadd.f32 0.0, %v2154
    %v2156 = vpop.f32.mrb[0].mxu0
    %v2157 = vadd.f32 0.0, %v2156
    %2158 = vmatprep.mubr.bf16.mxu0 %v1723
    %2159 = vmatmul.mubr.bf16.gmra.mrb[0].mxu0 %v1722
    %v2160 = vpop.f32.mrb[0].mxu0
    %v2161 = vadd.f32 0.0, %v2160
    %v2162 = vpop.f32.mrb[0].mxu0
    %v2163 = vadd.f32 0.0, %v2162
    %v2164 = vpop.f32.mrb[0].mxu0
    %v2165 = vadd.f32 0.0, %v2164
    %v2166 = vpop.f32.mrb[0].mxu0
    %v2167 = vadd.f32 0.0, %v2166
    %2168 = vmatprep.mubr.bf16.mxu0 %v1727
    %2169 = vmatmul.mubr.bf16.gmra.mrb[0].mxu0 %v1726
    %v2170 = vpop.f32.mrb[0].mxu0
    %v2171 = vadd.f32 0.0, %v2170
    %v2172 = vpop.f32.mrb[0].mxu0
    %v2173 = vadd.f32 0.0, %v2172
    %v2174 = vpop.f32.mrb[0].mxu0
    %v2175 = vadd.f32 0.0, %v2174
    %v2176 = vpop.f32.mrb[0].mxu0
    %v2177 = vadd.f32 0.0, %v2176
    %2178 = vmatprep.mubr.bf16.mxu0 %v1731
    %2179 = vmatmul.mubr.bf16.gmra.mrb[0].mxu0 %v1730
    %v2180 = vpop.f32.mrb[0].mxu0
    %v2181 = vadd.f32 0.0, %v2180
    %v2182 = vpop.f32.mrb[0].mxu0
    %v2183 = vadd.f32 0.0, %v2182
    %v2184 = vpop.f32.mrb[0].mxu0
    %v2185 = vadd.f32 0.0, %v2184
    %v2186 = vpop.f32.mrb[0].mxu0
    %v2187 = vadd.f32 0.0, %v2186
    %2188 = vmatprep.mubr.bf16.mxu0 %v1735
    %2189 = vmatmul.mubr.bf16.gmra.mrb[0].mxu0 %v1734
    %v2190 = vpop.f32.mrb[0].mxu0
    %v2191 = vadd.f32 0.0, %v2190
    %v2192 = vpop.f32.mrb[0].mxu0
    %v2193 = vadd.f32 0.0, %v2192
    %v2194 = vpop.f32.mrb[0].mxu0
    %v2195 = vadd.f32 0.0, %v2194
    %v2196 = vpop.f32.mrb[0].mxu0
    %v2197 = vadd.f32 0.0, %v2196
    %2198 = vmatprep.mubr.bf16.mxu0 %v1739
    %2199 = vmatmul.mubr.bf16.gmra.mrb[0].mxu0 %v1738
    %v2200 = vpop.f32.mrb[0].mxu0
    %v2201 = vadd.f32 0.0, %v2200
    %v2202 = vpop.f32.mrb[0].mxu0
    %v2203 = vadd.f32 0.0, %v2202
    %v2204 = vpop.f32.mrb[0].mxu0
    %v2205 = vadd.f32 0.0, %v2204
    %v2206 = vpop.f32.mrb[0].mxu0
    %v2207 = vadd.f32 0.0, %v2206
    %2208 = vdwg.mxu0
    %2209 = vmatprep.subr.bf16.mxu0 %v1809
    %2210 = vmatpush1.bf16.msra.mxu0 %v1808
    %2211 = vmatprep.subr.bf16.mxu0 %v1813
    %2212 = vmatpush1.bf16.msra.mxu0 %v1812
    %2213 = vmatprep.subr.bf16.mxu0 %v1817
    %2214 = vmatpush1.bf16.msra.mxu0 %v1816
    %2215 = vmatprep.subr.bf16.mxu0 %v1821
    %2216 = vmatpush1.bf16.msra.mxu0 %v1820
    %2217 = vmatprep.subr.bf16.mxu0 %v1825
    %2218 = vmatpush1.bf16.msra.mxu0 %v1824
    %2219 = vmatprep.subr.bf16.mxu0 %v1829
    %2220 = vmatpush1.bf16.msra.mxu0 %v1828
    %2221 = vmatprep.subr.bf16.mxu0 %v1833
    %2222 = vmatpush1.bf16.msra.mxu0 %v1832
    %2223 = vmatprep.subr.bf16.mxu0 %v1837
    %2224 = vmatpush1.bf16.msra.mxu0 %v1836
    %2225 = vmatprep.subr.bf16.mxu0 %v1841
    %2226 = vmatpush1.bf16.msra.mxu0 %v1840
    %2227 = vmatprep.subr.bf16.mxu0 %v1845
    %2228 = vmatpush1.bf16.msra.mxu0 %v1844
    %2229 = vmatprep.subr.bf16.mxu0 %v1849
    %2230 = vmatpush1.bf16.msra.mxu0 %v1848
    %2231 = vmatprep.subr.bf16.mxu0 %v1853
    %2232 = vmatpush1.bf16.msra.mxu0 %v1852
    %2233 = vmatprep.subr.bf16.mxu0 %v1857
    %2234 = vmatpush1.bf16.msra.mxu0 %v1856
    %2235 = vmatprep.subr.bf16.mxu0 %v1861
    %2236 = vmatpush1.bf16.msra.mxu0 %v1860
    %2237 = vmatprep.subr.bf16.mxu0 %v1865
    %2238 = vmatpush1.bf16.msra.mxu0 %v1864
    %2239 = vmatprep.subr.bf16.mxu0 %v1869
    %2240 = vmatpush1.bf16.msra.mxu0 %v1868
    %2241 = vmatprep.mubr.bf16.mxu0 %v1713
    %2242 = vmatmul.mubr.bf16.gmra.mrb[0].mxu0 %v1712
    %v2243 = vpop.f32.mrb[0].mxu0
    %v2244 = vadd.f32 %v2131, %v2243
    %v2245 = vpop.f32.mrb[0].mxu0
    %v2246 = vadd.f32 %v2133, %v2245
    %v2247 = vpop.f32.mrb[0].mxu0
    %v2248 = vadd.f32 %v2135, %v2247
    %v2249 = vpop.f32.mrb[0].mxu0
    %v2250 = vadd.f32 %v2137, %v2249
    %2251 = vmatprep.mubr.bf16.mxu0 %v1717
    %2252 = vmatmul.mubr.bf16.gmra.mrb[0].mxu0 %v1716
    %v2253 = vpop.f32.mrb[0].mxu0
    %v2254 = vadd.f32 %v2141, %v2253
    %v2255 = vpop.f32.mrb[0].mxu0
    %v2256 = vadd.f32 %v2143, %v2255
    %v2257 = vpop.f32.mrb[0].mxu0
    %v2258 = vadd.f32 %v2145, %v2257
    %v2259 = vpop.f32.mrb[0].mxu0
    %v2260 = vadd.f32 %v2147, %v2259
    %2261 = vmatprep.mubr.bf16.mxu0 %v1721
    %2262 = vmatmul.mubr.bf16.gmra.mrb[0].mxu0 %v1720
    %v2263 = vpop.f32.mrb[0].mxu0
    %v2264 = vadd.f32 %v2151, %v2263
    %v2265 = vpop.f32.mrb[0].mxu0
    %v2266 = vadd.f32 %v2153, %v2265
    %v2267 = vpop.f32.mrb[0].mxu0
    %v2268 = vadd.f32 %v2155, %v2267
    %v2269 = vpop.f32.mrb[0].mxu0
    %v2270 = vadd.f32 %v2157, %v2269
    %2271 = vmatprep.mubr.bf16.mxu0 %v1725
    %2272 = vmatmul.mubr.bf16.gmra.mrb[0].mxu0 %v1724
    %v2273 = vpop.f32.mrb[0].mxu0
    %v2274 = vadd.f32 %v2161, %v2273
    %v2275 = vpop.f32.mrb[0].mxu0
    %v2276 = vadd.f32 %v2163, %v2275
    %v2277 = vpop.f32.mrb[0].mxu0
    %v2278 = vadd.f32 %v2165, %v2277
    %v2279 = vpop.f32.mrb[0].mxu0
    %v2280 = vadd.f32 %v2167, %v2279
    %2281 = vmatprep.mubr.bf16.mxu0 %v1729
    %2282 = vmatmul.mubr.bf16.gmra.mrb[0].mxu0 %v1728
    %v2283 = vpop.f32.mrb[0].mxu0
    %v2284 = vadd.f32 %v2171, %v2283
    %v2285 = vpop.f32.mrb[0].mxu0
    %v2286 = vadd.f32 %v2173, %v2285
    %v2287 = vpop.f32.mrb[0].mxu0
    %v2288 = vadd.f32 %v2175, %v2287
    %v2289 = vpop.f32.mrb[0].mxu0
    %v2290 = vadd.f32 %v2177, %v2289
    %2291 = vmatprep.mubr.bf16.mxu0 %v1733
    %2292 = vmatmul.mubr.bf16.gmra.mrb[0].mxu0 %v1732
    %v2293 = vpop.f32.mrb[0].mxu0
    %v2294 = vadd.f32 %v2181, %v2293
    %v2295 = vpop.f32.mrb[0].mxu0
    %v2296 = vadd.f32 %v2183, %v2295
    %v2297 = vpop.f32.mrb[0].mxu0
    %v2298 = vadd.f32 %v2185, %v2297
    %v2299 = vpop.f32.mrb[0].mxu0
    %v2300 = vadd.f32 %v2187, %v2299
    %2301 = vmatprep.mubr.bf16.mxu0 %v1737
    %2302 = vmatmul.mubr.bf16.gmra.mrb[0].mxu0 %v1736
    %v2303 = vpop.f32.mrb[0].mxu0
    %v2304 = vadd.f32 %v2191, %v2303
    %v2305 = vpop.f32.mrb[0].mxu0
    %v2306 = vadd.f32 %v2193, %v2305
    %v2307 = vpop.f32.mrb[0].mxu0
    %v2308 = vadd.f32 %v2195, %v2307
    %v2309 = vpop.f32.mrb[0].mxu0
    %v2310 = vadd.f32 %v2197, %v2309
    %2311 = vmatprep.mubr.bf16.mxu0 %v1741
    %2312 = vmatmul.mubr.bf16.gmra.mrb[0].mxu0 %v1740
    %v2313 = vpop.f32.mrb[0].mxu0
    %v2314 = vadd.f32 %v2201, %v2313
    %v2315 = vpop.f32.mrb[0].mxu0
    %v2316 = vadd.f32 %v2203, %v2315
    %v2317 = vpop.f32.mrb[0].mxu0
    %v2318 = vadd.f32 %v2205, %v2317
    %v2319 = vpop.f32.mrb[0].mxu0
    %v2320 = vadd.f32 %v2207, %v2319
    %2321 = vdwg.mxu0
    %v2322 = vld [vmem:[#allocation10] sm:$0xf]
    %v2323 = vld [vmem:[#allocation12] sm:$0xf]
    %v2324 = vadd.f32 %v2018, %v2022
    %v2325 = vadd.f32 %v2324, %v2028
    %v2326 = vadd.f32 %v2325, %v2032
    %v2327 = vadd.f32 %v2326, %v2038
    %v2328 = vadd.f32 %v2327, %v2042
    %v2329 = vadd.f32 %v2328, %v2048
    %v2330 = vadd.f32 %v2329, %v2052
    %v2331 = vadd.f32 %v2330, %v2058
    %v2332 = vadd.f32 %v2331, %v2062
    %v2333 = vadd.f32 %v2332, %v2068
    %v2334 = vadd.f32 %v2333, %v2072
    %v2335 = vadd.f32 %v2334, %v2078
    %v2336 = vadd.f32 %v2335, %v2082
    %v2337 = vadd.f32 %v2336, %v2088
    %v2338 = vadd.f32 %v2337, %v2092
    %v2339 = vrot.slane %v2338, 4
    %v2340 = vadd.f32 %v2338, %v2339
    %v2341 = vrot.slane %v2340, 2
    %v2342 = vadd.f32 %v2340, %v2341
    %v2343 = vrot.slane %v2342, 1
    %v2344 = vadd.f32 %v2342, %v2343
    %v2345 = vadd.f32 %v2020, %v2024
    %v2346 = vadd.f32 %v2345, %v2030
    %v2347 = vadd.f32 %v2346, %v2034
    %v2348 = vadd.f32 %v2347, %v2040
    %v2349 = vadd.f32 %v2348, %v2044
    %v2350 = vadd.f32 %v2349, %v2050
    %v2351 = vadd.f32 %v2350, %v2054
    %v2352 = vadd.f32 %v2351, %v2060
    %v2353 = vadd.f32 %v2352, %v2064
    %v2354 = vadd.f32 %v2353, %v2070
    %v2355 = vadd.f32 %v2354, %v2074
    %v2356 = vadd.f32 %v2355, %v2080
    %v2357 = vadd.f32 %v2356, %v2084
    %v2358 = vadd.f32 %v2357, %v2090
    %v2359 = vadd.f32 %v2358, %v2094
    %v2360 = vrot.slane %v2359, 4
    %v2361 = vadd.f32 %v2359, %v2360
    %v2362 = vrot.slane %v2361, 2
    %v2363 = vadd.f32 %v2361, %v2362
    %v2364 = vrot.slane %v2363, 1
    %v2365 = vadd.f32 %v2363, %v2364
    %v2366 = vadd.f32 %v2244, %v2248
    %v2367 = vadd.f32 %v2366, %v2254
    %v2368 = vadd.f32 %v2367, %v2258
    %v2369 = vadd.f32 %v2368, %v2264
    %v2370 = vadd.f32 %v2369, %v2268
    %v2371 = vadd.f32 %v2370, %v2274
    %v2372 = vadd.f32 %v2371, %v2278
    %v2373 = vadd.f32 %v2372, %v2284
    %v2374 = vadd.f32 %v2373, %v2288
    %v2375 = vadd.f32 %v2374, %v2294
    %v2376 = vadd.f32 %v2375, %v2298
    %v2377 = vadd.f32 %v2376, %v2304
    %v2378 = vadd.f32 %v2377, %v2308
    %v2379 = vadd.f32 %v2378, %v2314
    %v2380 = vadd.f32 %v2379, %v2318
    %v2381 = vrot.slane %v2380, 4
    %v2382 = vadd.f32 %v2380, %v2381
    %v2383 = vrot.slane %v2382, 2
    %v2384 = vadd.f32 %v2382, %v2383
    %v2385 = vrot.slane %v2384, 1
    %v2386 = vadd.f32 %v2384, %v2385
    %v2387 = vadd.f32 %v2246, %v2250
    %v2388 = vadd.f32 %v2387, %v2256
    %v2389 = vadd.f32 %v2388, %v2260
    %v2390 = vadd.f32 %v2389, %v2266
    %v2391 = vadd.f32 %v2390, %v2270
    %v2392 = vadd.f32 %v2391, %v2276
    %v2393 = vadd.f32 %v2392, %v2280
    %v2394 = vadd.f32 %v2393, %v2286
    %v2395 = vadd.f32 %v2394, %v2290
    %v2396 = vadd.f32 %v2395, %v2296
    %v2397 = vadd.f32 %v2396, %v2300
    %v2398 = vadd.f32 %v2397, %v2306
    %v2399 = vadd.f32 %v2398, %v2310
    %v2400 = vadd.f32 %v2399, %v2316
    %v2401 = vadd.f32 %v2400, %v2320
    %v2402 = vrot.slane %v2401, 4
    %v2403 = vadd.f32 %v2401, %v2402
    %v2404 = vrot.slane %v2403, 2
    %v2405 = vadd.f32 %v2403, %v2404
    %v2406 = vrot.slane %v2405, 1
    %v2407 = vadd.f32 %v2405, %v2406
    %v2408 = vmul.f32 %v2344, %v1074
    %v2409 = vmul.f32 %v2365, %v1074
    %v2410 = vmul.f32 %v2386, %v1074
    %v2411 = vmul.f32 %v2407, %v1074
    %v2412 = vmul.f32 %v2018, %v2018
    %v2413 = vmul.f32 %v2020, %v2020
    %v2414 = vmul.f32 %v2244, %v2244
    %v2415 = vmul.f32 %v2246, %v2246
    %v2416 = vmul.f32 %v2022, %v2022
    %v2417 = vmul.f32 %v2024, %v2024
    %v2418 = vmul.f32 %v2248, %v2248
    %v2419 = vmul.f32 %v2250, %v2250
    %v2420 = vmul.f32 %v2028, %v2028
    %v2421 = vmul.f32 %v2030, %v2030
    %v2422 = vmul.f32 %v2254, %v2254
    %v2423 = vmul.f32 %v2256, %v2256
    %v2424 = vmul.f32 %v2032, %v2032
    %v2425 = vmul.f32 %v2034, %v2034
    %v2426 = vmul.f32 %v2258, %v2258
    %v2427 = vmul.f32 %v2260, %v2260
    %v2428 = vmul.f32 %v2038, %v2038
    %v2429 = vmul.f32 %v2040, %v2040
    %v2430 = vmul.f32 %v2264, %v2264
    %v2431 = vmul.f32 %v2266, %v2266
    %v2432 = vmul.f32 %v2042, %v2042
    %v2433 = vmul.f32 %v2044, %v2044
    %v2434 = vmul.f32 %v2268, %v2268
    %v2435 = vmul.f32 %v2270, %v2270
    %v2436 = vmul.f32 %v2048, %v2048
    %v2437 = vmul.f32 %v2050, %v2050
    %v2438 = vmul.f32 %v2274, %v2274
    %v2439 = vmul.f32 %v2276, %v2276
    %v2440 = vmul.f32 %v2052, %v2052
    %v2441 = vmul.f32 %v2054, %v2054
    %v2442 = vmul.f32 %v2278, %v2278
    %v2443 = vmul.f32 %v2280, %v2280
    %v2444 = vmul.f32 %v2058, %v2058
    %v2445 = vmul.f32 %v2060, %v2060
    %v2446 = vmul.f32 %v2284, %v2284
    %v2447 = vmul.f32 %v2286, %v2286
    %v2448 = vmul.f32 %v2062, %v2062
    %v2449 = vmul.f32 %v2064, %v2064
    %v2450 = vmul.f32 %v2288, %v2288
    %v2451 = vmul.f32 %v2290, %v2290
    %v2452 = vmul.f32 %v2068, %v2068
    %v2453 = vmul.f32 %v2070, %v2070
    %v2454 = vmul.f32 %v2294, %v2294
    %v2455 = vmul.f32 %v2296, %v2296
    %v2456 = vmul.f32 %v2072, %v2072
    %v2457 = vmul.f32 %v2074, %v2074
    %v2458 = vmul.f32 %v2298, %v2298
    %v2459 = vmul.f32 %v2300, %v2300
    %v2460 = vmul.f32 %v2078, %v2078
    %v2461 = vmul.f32 %v2080, %v2080
    %v2462 = vmul.f32 %v2304, %v2304
    %v2463 = vmul.f32 %v2306, %v2306
    %v2464 = vmul.f32 %v2082, %v2082
    %v2465 = vmul.f32 %v2084, %v2084
    %v2466 = vmul.f32 %v2308, %v2308
    %v2467 = vmul.f32 %v2310, %v2310
    %v2468 = vmul.f32 %v2088, %v2088
    %v2469 = vmul.f32 %v2090, %v2090
    %v2470 = vmul.f32 %v2314, %v2314
    %v2471 = vmul.f32 %v2316, %v2316
    %v2472 = vmul.f32 %v2092, %v2092
    %v2473 = vmul.f32 %v2094, %v2094
    %v2474 = vmul.f32 %v2318, %v2318
    %v2475 = vmul.f32 %v2320, %v2320
    %v2476 = vadd.f32 %v2412, %v2416
    %v2477 = vadd.f32 %v2476, %v2420
    %v2478 = vadd.f32 %v2477, %v2424
    %v2479 = vadd.f32 %v2478, %v2428
    %v2480 = vadd.f32 %v2479, %v2432
    %v2481 = vadd.f32 %v2480, %v2436
    %v2482 = vadd.f32 %v2481, %v2440
    %v2483 = vadd.f32 %v2482, %v2444
    %v2484 = vadd.f32 %v2483, %v2448
    %v2485 = vadd.f32 %v2484, %v2452
    %v2486 = vadd.f32 %v2485, %v2456
    %v2487 = vadd.f32 %v2486, %v2460
    %v2488 = vadd.f32 %v2487, %v2464
    %v2489 = vadd.f32 %v2488, %v2468
    %v2490 = vadd.f32 %v2489, %v2472
    %v2491 = vrot.slane %v2490, 4
    %v2492 = vadd.f32 %v2490, %v2491
    %v2493 = vrot.slane %v2492, 2
    %v2494 = vadd.f32 %v2492, %v2493
    %v2495 = vrot.slane %v2494, 1
    %v2496 = vadd.f32 %v2494, %v2495
    %v2497 = vadd.f32 %v2413, %v2417
    %v2498 = vadd.f32 %v2497, %v2421
    %v2499 = vadd.f32 %v2498, %v2425
    %v2500 = vadd.f32 %v2499, %v2429
    %v2501 = vadd.f32 %v2500, %v2433
    %v2502 = vadd.f32 %v2501, %v2437
    %v2503 = vadd.f32 %v2502, %v2441
    %v2504 = vadd.f32 %v2503, %v2445
    %v2505 = vadd.f32 %v2504, %v2449
    %v2506 = vadd.f32 %v2505, %v2453
    %v2507 = vadd.f32 %v2506, %v2457
    %v2508 = vadd.f32 %v2507, %v2461
    %v2509 = vadd.f32 %v2508, %v2465
    %v2510 = vadd.f32 %v2509, %v2469
    %v2511 = vadd.f32 %v2510, %v2473
    %v2512 = vrot.slane %v2511, 4
    %v2513 = vadd.f32 %v2511, %v2512
    %v2514 = vrot.slane %v2513, 2
    %v2515 = vadd.f32 %v2513, %v2514
    %v2516 = vrot.slane %v2515, 1
    %v2517 = vadd.f32 %v2515, %v2516
    %v2518 = vadd.f32 %v2414, %v2418
    %v2519 = vadd.f32 %v2518, %v2422
    %v2520 = vadd.f32 %v2519, %v2426
    %v2521 = vadd.f32 %v2520, %v2430
    %v2522 = vadd.f32 %v2521, %v2434
    %v2523 = vadd.f32 %v2522, %v2438
    %v2524 = vadd.f32 %v2523, %v2442
    %v2525 = vadd.f32 %v2524, %v2446
    %v2526 = vadd.f32 %v2525, %v2450
    %v2527 = vadd.f32 %v2526, %v2454
    %v2528 = vadd.f32 %v2527, %v2458
    %v2529 = vadd.f32 %v2528, %v2462
    %v2530 = vadd.f32 %v2529, %v2466
    %v2531 = vadd.f32 %v2530, %v2470
    %v2532 = vadd.f32 %v2531, %v2474
    %v2533 = vrot.slane %v2532, 4
    %v2534 = vadd.f32 %v2532, %v2533
    %v2535 = vrot.slane %v2534, 2
    %v2536 = vadd.f32 %v2534, %v2535
    %v2537 = vrot.slane %v2536, 1
    %v2538 = vadd.f32 %v2536, %v2537
    %v2539 = vadd.f32 %v2415, %v2419
    %v2540 = vadd.f32 %v2539, %v2423
    %v2541 = vadd.f32 %v2540, %v2427
    %v2542 = vadd.f32 %v2541, %v2431
    %v2543 = vadd.f32 %v2542, %v2435
    %v2544 = vadd.f32 %v2543, %v2439
    %v2545 = vadd.f32 %v2544, %v2443
    %v2546 = vadd.f32 %v2545, %v2447
    %v2547 = vadd.f32 %v2546, %v2451
    %v2548 = vadd.f32 %v2547, %v2455
    %v2549 = vadd.f32 %v2548, %v2459
    %v2550 = vadd.f32 %v2549, %v2463
    %v2551 = vadd.f32 %v2550, %v2467
    %v2552 = vadd.f32 %v2551, %v2471
    %v2553 = vadd.f32 %v2552, %v2475
    %v2554 = vrot.slane %v2553, 4
    %v2555 = vadd.f32 %v2553, %v2554
    %v2556 = vrot.slane %v2555, 2
    %v2557 = vadd.f32 %v2555, %v2556
    %v2558 = vrot.slane %v2557, 1
    %v2559 = vadd.f32 %v2557, %v2558
    %v2560 = vmul.f32 %v2496, %v1074
    %v2561 = vmul.f32 %v2517, %v1074
    %v2562 = vmul.f32 %v2538, %v1074
    %v2563 = vmul.f32 %v2559, %v1074
    %v2564 = vmul.f32 %v2408, %v2408
    %v2565 = vmul.f32 %v2409, %v2409
    %v2566 = vmul.f32 %v2410, %v2410
    %v2567 = vmul.f32 %v2411, %v2411
    %v2568 = vsub.f32 %v2560, %v2564
    %v2569 = vsub.f32 %v2561, %v2565
    %v2570 = vsub.f32 %v2562, %v2566
    %v2571 = vsub.f32 %v2563, %v2567
    %v2572 = vadd.f32 %v2568, 1e-05
    %v2573 = vadd.f32 %v2569, 1e-05
    %v2574 = vadd.f32 %v2570, 1e-05
    %v2575 = vadd.f32 %v2571, 1e-05
    %v2576 = vrsqrt.pop %v2572
    %v2577 = vrsqrt.pop %v2573
    %v2578 = vrsqrt.pop %v2574
    %v2579 = vrsqrt.pop %v2575
    %v2584 = vcombine.low %v2576, %v2577
    %v2585 = vcombine.low %v2578, %v2579
    %v2587 = vunpack.c.l.s4 1966171168
    %v2588 = vunpack.c.0.s8 %v2587
    %v2589 = vlaneseq
    %v2590 = vshrl.u32 %v2589, 7
    %v2591 = vsub.s32 %v2588, %v2590
    %v2592 = vrot.slane %v2584, %v2591
    %v2594 = vunpack.c.l.s4 1966171168
    %v2595 = vunpack.c.0.s8 %v2594
    %v2596 = vlaneseq
    %v2597 = vshrl.u32 %v2596, 7
    %v2598 = vsub.s32 %v2595, %v2597
    %v2599 = vrot.slane %v2585, %v2598
    %v2600 = vcombine.low %v2592, %v2599
    %v2602 = vunpack.c.l.s4 1966171168
    %v2603 = vunpack.c.0.s8 %v2602
    %v2604 = vlaneseq
    %v2605 = vshrl.u32 %v2604, 7
    %v2606 = vsub.s32 %v2603, %v2605
    %v2607 = vrot.slane %v2600, %v2606
    %v2609 = vmul.f32 %v2322, %v2607
    %v2611 = vlaneseq
    %v2612 = vshrl.u32 %v2611, 7
    %v2613 = vsub.s32 0, %v2612
    %v2614 = vrot.slane %v2609, %v2613
    %v2615 = vlaneseq
    %v2616 = vshrl.u32 %v2615, 7
    %v2617 = vsub.s32 1, %v2616
    %v2618 = vrot.slane %v2609, %v2617
    %v2619 = vlaneseq
    %v2620 = vshrl.u32 %v2619, 7
    %v2621 = vsub.s32 2, %v2620
    %v2622 = vrot.slane %v2609, %v2621
    %v2623 = vlaneseq
    %v2624 = vshrl.u32 %v2623, 7
    %v2625 = vsub.s32 3, %v2624
    %v2626 = vrot.slane %v2609, %v2625
    %v2631 = vmul.f32 %v2408, %v2614
    %v2632 = vmul.f32 %v2409, %v2618
    %v2633 = vmul.f32 %v2410, %v2622
    %v2634 = vmul.f32 %v2411, %v2626
    %v2639 = vcombine.low %v2631, %v2632
    %v2640 = vcombine.low %v2633, %v2634
    %v2642 = vunpack.c.l.s4 1966171168
    %v2643 = vunpack.c.0.s8 %v2642
    %v2644 = vlaneseq
    %v2645 = vshrl.u32 %v2644, 7
    %v2646 = vsub.s32 %v2643, %v2645
    %v2647 = vrot.slane %v2639, %v2646
    %v2649 = vunpack.c.l.s4 1966171168
    %v2650 = vunpack.c.0.s8 %v2649
    %v2651 = vlaneseq
    %v2652 = vshrl.u32 %v2651, 7
    %v2653 = vsub.s32 %v2650, %v2652
    %v2654 = vrot.slane %v2640, %v2653
    %v2655 = vcombine.low %v2647, %v2654
    %v2657 = vunpack.c.l.s4 1966171168
    %v2658 = vunpack.c.0.s8 %v2657
    %v2659 = vlaneseq
    %v2660 = vshrl.u32 %v2659, 7
    %v2661 = vsub.s32 %v2658, %v2660
    %v2662 = vrot.slane %v2655, %v2661
    %v2664 = vsub.f32 %v2323, %v2662
    %v2665 = vmul.f32 %v2018, %v2614
    %v2666 = vmul.f32 %v2020, %v2618
    %v2667 = vmul.f32 %v2244, %v2622
    %v2668 = vmul.f32 %v2246, %v2626
    %v2669 = vmul.f32 %v2022, %v2614
    %v2670 = vmul.f32 %v2024, %v2618
    %v2671 = vmul.f32 %v2248, %v2622
    %v2672 = vmul.f32 %v2250, %v2626
    %v2673 = vmul.f32 %v2028, %v2614
    %v2674 = vmul.f32 %v2030, %v2618
    %v2675 = vmul.f32 %v2254, %v2622
    %v2676 = vmul.f32 %v2256, %v2626
    %v2677 = vmul.f32 %v2032, %v2614
    %v2678 = vmul.f32 %v2034, %v2618
    %v2679 = vmul.f32 %v2258, %v2622
    %v2680 = vmul.f32 %v2260, %v2626
    %v2681 = vmul.f32 %v2038, %v2614
    %v2682 = vmul.f32 %v2040, %v2618
    %v2683 = vmul.f32 %v2264, %v2622
    %v2684 = vmul.f32 %v2266, %v2626
    %v2685 = vmul.f32 %v2042, %v2614
    %v2686 = vmul.f32 %v2044, %v2618
    %v2687 = vmul.f32 %v2268, %v2622
    %v2688 = vmul.f32 %v2270, %v2626
    %v2689 = vmul.f32 %v2048, %v2614
    %v2690 = vmul.f32 %v2050, %v2618
    %v2691 = vmul.f32 %v2274, %v2622
    %v2692 = vmul.f32 %v2276, %v2626
    %v2693 = vmul.f32 %v2052, %v2614
    %v2694 = vmul.f32 %v2054, %v2618
    %v2695 = vmul.f32 %v2278, %v2622
    %v2696 = vmul.f32 %v2280, %v2626
    %v2697 = vmul.f32 %v2058, %v2614
    %v2698 = vmul.f32 %v2060, %v2618
    %v2699 = vmul.f32 %v2284, %v2622
    %v2700 = vmul.f32 %v2286, %v2626
    %v2701 = vmul.f32 %v2062, %v2614
    %v2702 = vmul.f32 %v2064, %v2618
    %v2703 = vmul.f32 %v2288, %v2622
    %v2704 = vmul.f32 %v2290, %v2626
    %v2705 = vmul.f32 %v2068, %v2614
    %v2706 = vmul.f32 %v2070, %v2618
    %v2707 = vmul.f32 %v2294, %v2622
    %v2708 = vmul.f32 %v2296, %v2626
    %v2709 = vmul.f32 %v2072, %v2614
    %v2710 = vmul.f32 %v2074, %v2618
    %v2711 = vmul.f32 %v2298, %v2622
    %v2712 = vmul.f32 %v2300, %v2626
    %v2713 = vmul.f32 %v2078, %v2614
    %v2714 = vmul.f32 %v2080, %v2618
    %v2715 = vmul.f32 %v2304, %v2622
    %v2716 = vmul.f32 %v2306, %v2626
    %v2717 = vmul.f32 %v2082, %v2614
    %v2718 = vmul.f32 %v2084, %v2618
    %v2719 = vmul.f32 %v2308, %v2622
    %v2720 = vmul.f32 %v2310, %v2626
    %v2721 = vmul.f32 %v2088, %v2614
    %v2722 = vmul.f32 %v2090, %v2618
    %v2723 = vmul.f32 %v2314, %v2622
    %v2724 = vmul.f32 %v2316, %v2626
    %v2725 = vmul.f32 %v2092, %v2614
    %v2726 = vmul.f32 %v2094, %v2618
    %v2727 = vmul.f32 %v2318, %v2622
    %v2728 = vmul.f32 %v2320, %v2626
    %v2730 = vlaneseq
    %v2731 = vshrl.u32 %v2730, 7
    %v2732 = vsub.s32 0, %v2731
    %v2733 = vrot.slane %v2664, %v2732
    %v2734 = vlaneseq
    %v2735 = vshrl.u32 %v2734, 7
    %v2736 = vsub.s32 1, %v2735
    %v2737 = vrot.slane %v2664, %v2736
    %v2738 = vlaneseq
    %v2739 = vshrl.u32 %v2738, 7
    %v2740 = vsub.s32 2, %v2739
    %v2741 = vrot.slane %v2664, %v2740
    %v2742 = vlaneseq
    %v2743 = vshrl.u32 %v2742, 7
    %v2744 = vsub.s32 3, %v2743
    %v2745 = vrot.slane %v2664, %v2744
    %v2750 = vadd.f32 %v2665, %v2733
    %v2751 = vadd.f32 %v2666, %v2737
    %v2752 = vadd.f32 %v2667, %v2741
    %v2753 = vadd.f32 %v2668, %v2745
    %v2754 = vadd.f32 %v2669, %v2733
    %v2755 = vadd.f32 %v2670, %v2737
    %v2756 = vadd.f32 %v2671, %v2741
    %v2757 = vadd.f32 %v2672, %v2745
    %v2758 = vadd.f32 %v2673, %v2733
    %v2759 = vadd.f32 %v2674, %v2737
    %v2760 = vadd.f32 %v2675, %v2741
    %v2761 = vadd.f32 %v2676, %v2745
    %v2762 = vadd.f32 %v2677, %v2733
    %v2763 = vadd.f32 %v2678, %v2737
    %v2764 = vadd.f32 %v2679, %v2741
    %v2765 = vadd.f32 %v2680, %v2745
    %v2766 = vadd.f32 %v2681, %v2733
    %v2767 = vadd.f32 %v2682, %v2737
    %v2768 = vadd.f32 %v2683, %v2741
    %v2769 = vadd.f32 %v2684, %v2745
    %v2770 = vadd.f32 %v2685, %v2733
    %v2771 = vadd.f32 %v2686, %v2737
    %v2772 = vadd.f32 %v2687, %v2741
    %v2773 = vadd.f32 %v2688, %v2745
    %v2774 = vadd.f32 %v2689, %v2733
    %v2775 = vadd.f32 %v2690, %v2737
    %v2776 = vadd.f32 %v2691, %v2741
    %v2777 = vadd.f32 %v2692, %v2745
    %v2778 = vadd.f32 %v2693, %v2733
    %v2779 = vadd.f32 %v2694, %v2737
    %v2780 = vadd.f32 %v2695, %v2741
    %v2781 = vadd.f32 %v2696, %v2745
    %v2782 = vadd.f32 %v2697, %v2733
    %v2783 = vadd.f32 %v2698, %v2737
    %v2784 = vadd.f32 %v2699, %v2741
    %v2785 = vadd.f32 %v2700, %v2745
    %v2786 = vadd.f32 %v2701, %v2733
    %v2787 = vadd.f32 %v2702, %v2737
    %v2788 = vadd.f32 %v2703, %v2741
    %v2789 = vadd.f32 %v2704, %v2745
    %v2790 = vadd.f32 %v2705, %v2733
    %v2791 = vadd.f32 %v2706, %v2737
    %v2792 = vadd.f32 %v2707, %v2741
    %v2793 = vadd.f32 %v2708, %v2745
    %v2794 = vadd.f32 %v2709, %v2733
    %v2795 = vadd.f32 %v2710, %v2737
    %v2796 = vadd.f32 %v2711, %v2741
    %v2797 = vadd.f32 %v2712, %v2745
    %v2798 = vadd.f32 %v2713, %v2733
    %v2799 = vadd.f32 %v2714, %v2737
    %v2800 = vadd.f32 %v2715, %v2741
    %v2801 = vadd.f32 %v2716, %v2745
    %v2802 = vadd.f32 %v2717, %v2733
    %v2803 = vadd.f32 %v2718, %v2737
    %v2804 = vadd.f32 %v2719, %v2741
    %v2805 = vadd.f32 %v2720, %v2745
    %v2806 = vadd.f32 %v2721, %v2733
    %v2807 = vadd.f32 %v2722, %v2737
    %v2808 = vadd.f32 %v2723, %v2741
    %v2809 = vadd.f32 %v2724, %v2745
    %v2810 = vadd.f32 %v2725, %v2733
    %v2811 = vadd.f32 %v2726, %v2737
    %v2812 = vadd.f32 %v2727, %v2741
    %v2813 = vadd.f32 %v2728, %v2745
    %vm2814 = vcmp.gt.f32.partialorder %v2750, 0.0
    %vm2815 = vcmp.gt.f32.partialorder %v2751, 0.0
    %vm2816 = vcmp.gt.f32.partialorder %v2752, 0.0
    %vm2817 = vcmp.gt.f32.partialorder %v2753, 0.0
    %vm2818 = vcmp.gt.f32.partialorder %v2754, 0.0
    %vm2819 = vcmp.gt.f32.partialorder %v2755, 0.0
    %vm2820 = vcmp.gt.f32.partialorder %v2756, 0.0
    %vm2821 = vcmp.gt.f32.partialorder %v2757, 0.0
    %vm2822 = vcmp.gt.f32.partialorder %v2758, 0.0
    %vm2823 = vcmp.gt.f32.partialorder %v2759, 0.0
    %vm2824 = vcmp.gt.f32.partialorder %v2760, 0.0
    %vm2825 = vcmp.gt.f32.partialorder %v2761, 0.0
    %vm2826 = vcmp.gt.f32.partialorder %v2762, 0.0
    %vm2827 = vcmp.gt.f32.partialorder %v2763, 0.0
    %vm2828 = vcmp.gt.f32.partialorder %v2764, 0.0
    %vm2829 = vcmp.gt.f32.partialorder %v2765, 0.0
    %vm2830 = vcmp.gt.f32.partialorder %v2766, 0.0
    %vm2831 = vcmp.gt.f32.partialorder %v2767, 0.0
    %vm2832 = vcmp.gt.f32.partialorder %v2768, 0.0
    %vm2833 = vcmp.gt.f32.partialorder %v2769, 0.0
    %vm2834 = vcmp.gt.f32.partialorder %v2770, 0.0
    %vm2835 = vcmp.gt.f32.partialorder %v2771, 0.0
    %vm2836 = vcmp.gt.f32.partialorder %v2772, 0.0
    %vm2837 = vcmp.gt.f32.partialorder %v2773, 0.0
    %vm2838 = vcmp.gt.f32.partialorder %v2774, 0.0
    %vm2839 = vcmp.gt.f32.partialorder %v2775, 0.0
    %vm2840 = vcmp.gt.f32.partialorder %v2776, 0.0
    %vm2841 = vcmp.gt.f32.partialorder %v2777, 0.0
    %vm2842 = vcmp.gt.f32.partialorder %v2778, 0.0
    %vm2843 = vcmp.gt.f32.partialorder %v2779, 0.0
    %vm2844 = vcmp.gt.f32.partialorder %v2780, 0.0
    %vm2845 = vcmp.gt.f32.partialorder %v2781, 0.0
    %vm2846 = vcmp.gt.f32.partialorder %v2782, 0.0
    %vm2847 = vcmp.gt.f32.partialorder %v2783, 0.0
    %vm2848 = vcmp.gt.f32.partialorder %v2784, 0.0
    %vm2849 = vcmp.gt.f32.partialorder %v2785, 0.0
    %vm2850 = vcmp.gt.f32.partialorder %v2786, 0.0
    %vm2851 = vcmp.gt.f32.partialorder %v2787, 0.0
    %vm2852 = vcmp.gt.f32.partialorder %v2788, 0.0
    %vm2853 = vcmp.gt.f32.partialorder %v2789, 0.0
    %vm2854 = vcmp.gt.f32.partialorder %v2790, 0.0
    %vm2855 = vcmp.gt.f32.partialorder %v2791, 0.0
    %vm2856 = vcmp.gt.f32.partialorder %v2792, 0.0
    %vm2857 = vcmp.gt.f32.partialorder %v2793, 0.0
    %vm2858 = vcmp.gt.f32.partialorder %v2794, 0.0
    %vm2859 = vcmp.gt.f32.partialorder %v2795, 0.0
    %vm2860 = vcmp.gt.f32.partialorder %v2796, 0.0
    %vm2861 = vcmp.gt.f32.partialorder %v2797, 0.0
    %vm2862 = vcmp.gt.f32.partialorder %v2798, 0.0
    %vm2863 = vcmp.gt.f32.partialorder %v2799, 0.0
    %vm2864 = vcmp.gt.f32.partialorder %v2800, 0.0
    %vm2865 = vcmp.gt.f32.partialorder %v2801, 0.0
    %vm2866 = vcmp.gt.f32.partialorder %v2802, 0.0
    %vm2867 = vcmp.gt.f32.partialorder %v2803, 0.0
    %vm2868 = vcmp.gt.f32.partialorder %v2804, 0.0
    %vm2869 = vcmp.gt.f32.partialorder %v2805, 0.0
    %vm2870 = vcmp.gt.f32.partialorder %v2806, 0.0
    %vm2871 = vcmp.gt.f32.partialorder %v2807, 0.0
    %vm2872 = vcmp.gt.f32.partialorder %v2808, 0.0
    %vm2873 = vcmp.gt.f32.partialorder %v2809, 0.0
    %vm2874 = vcmp.gt.f32.partialorder %v2810, 0.0
    %vm2875 = vcmp.gt.f32.partialorder %v2811, 0.0
    %vm2876 = vcmp.gt.f32.partialorder %v2812, 0.0
    %vm2877 = vcmp.gt.f32.partialorder %v2813, 0.0
    %v2878 = vmul.f32 %v2750, 0.2
    %v2879 = vmul.f32 %v2751, 0.2
    %v2880 = vmul.f32 %v2752, 0.2
    %v2881 = vmul.f32 %v2753, 0.2
    %v2882 = vmul.f32 %v2754, 0.2
    %v2883 = vmul.f32 %v2755, 0.2
    %v2884 = vmul.f32 %v2756, 0.2
    %v2885 = vmul.f32 %v2757, 0.2
    %v2886 = vmul.f32 %v2758, 0.2
    %v2887 = vmul.f32 %v2759, 0.2
    %v2888 = vmul.f32 %v2760, 0.2
    %v2889 = vmul.f32 %v2761, 0.2
    %v2890 = vmul.f32 %v2762, 0.2
    %v2891 = vmul.f32 %v2763, 0.2
    %v2892 = vmul.f32 %v2764, 0.2
    %v2893 = vmul.f32 %v2765, 0.2
    %v2894 = vmul.f32 %v2766, 0.2
    %v2895 = vmul.f32 %v2767, 0.2
    %v2896 = vmul.f32 %v2768, 0.2
    %v2897 = vmul.f32 %v2769, 0.2
    %v2898 = vmul.f32 %v2770, 0.2
    %v2899 = vmul.f32 %v2771, 0.2
    %v2900 = vmul.f32 %v2772, 0.2
    %v2901 = vmul.f32 %v2773, 0.2
    %v2902 = vmul.f32 %v2774, 0.2
    %v2903 = vmul.f32 %v2775, 0.2
    %v2904 = vmul.f32 %v2776, 0.2
    %v2905 = vmul.f32 %v2777, 0.2
    %v2906 = vmul.f32 %v2778, 0.2
    %v2907 = vmul.f32 %v2779, 0.2
    %v2908 = vmul.f32 %v2780, 0.2
    %v2909 = vmul.f32 %v2781, 0.2
    %v2910 = vmul.f32 %v2782, 0.2
    %v2911 = vmul.f32 %v2783, 0.2
    %v2912 = vmul.f32 %v2784, 0.2
    %v2913 = vmul.f32 %v2785, 0.2
    %v2914 = vmul.f32 %v2786, 0.2
    %v2915 = vmul.f32 %v2787, 0.2
    %v2916 = vmul.f32 %v2788, 0.2
    %v2917 = vmul.f32 %v2789, 0.2
    %v2918 = vmul.f32 %v2790, 0.2
    %v2919 = vmul.f32 %v2791, 0.2
    %v2920 = vmul.f32 %v2792, 0.2
    %v2921 = vmul.f32 %v2793, 0.2
    %v2922 = vmul.f32 %v2794, 0.2
    %v2923 = vmul.f32 %v2795, 0.2
    %v2924 = vmul.f32 %v2796, 0.2
    %v2925 = vmul.f32 %v2797, 0.2
    %v2926 = vmul.f32 %v2798, 0.2
    %v2927 = vmul.f32 %v2799, 0.2
    %v2928 = vmul.f32 %v2800, 0.2
    %v2929 = vmul.f32 %v2801, 0.2
    %v2930 = vmul.f32 %v2802, 0.2
    %v2931 = vmul.f32 %v2803, 0.2
    %v2932 = vmul.f32 %v2804, 0.2
    %v2933 = vmul.f32 %v2805, 0.2
    %v2934 = vmul.f32 %v2806, 0.2
    %v2935 = vmul.f32 %v2807, 0.2
    %v2936 = vmul.f32 %v2808, 0.2
    %v2937 = vmul.f32 %v2809, 0.2
    %v2938 = vmul.f32 %v2810, 0.2
    %v2939 = vmul.f32 %v2811, 0.2
    %v2940 = vmul.f32 %v2812, 0.2
    %v2941 = vmul.f32 %v2813, 0.2
    %v2942 = vsel %vm2814, %v2750, %v2878
    %v2943 = vsel %vm2815, %v2751, %v2879
    %v2944 = vsel %vm2816, %v2752, %v2880
    %v2945 = vsel %vm2817, %v2753, %v2881
    %v2946 = vsel %vm2818, %v2754, %v2882
    %v2947 = vsel %vm2819, %v2755, %v2883
    %v2948 = vsel %vm2820, %v2756, %v2884
    %v2949 = vsel %vm2821, %v2757, %v2885
    %v2950 = vsel %vm2822, %v2758, %v2886
    %v2951 = vsel %vm2823, %v2759, %v2887
    %v2952 = vsel %vm2824, %v2760, %v2888
    %v2953 = vsel %vm2825, %v2761, %v2889
    %v2954 = vsel %vm2826, %v2762, %v2890
    %v2955 = vsel %vm2827, %v2763, %v2891
    %v2956 = vsel %vm2828, %v2764, %v2892
    %v2957 = vsel %vm2829, %v2765, %v2893
    %v2958 = vsel %vm2830, %v2766, %v2894
    %v2959 = vsel %vm2831, %v2767, %v2895
    %v2960 = vsel %vm2832, %v2768, %v2896
    %v2961 = vsel %vm2833, %v2769, %v2897
    %v2962 = vsel %vm2834, %v2770, %v2898
    %v2963 = vsel %vm2835, %v2771, %v2899
    %v2964 = vsel %vm2836, %v2772, %v2900
    %v2965 = vsel %vm2837, %v2773, %v2901
    %v2966 = vsel %vm2838, %v2774, %v2902
    %v2967 = vsel %vm2839, %v2775, %v2903
    %v2968 = vsel %vm2840, %v2776, %v2904
    %v2969 = vsel %vm2841, %v2777, %v2905
    %v2970 = vsel %vm2842, %v2778, %v2906
    %v2971 = vsel %vm2843, %v2779, %v2907
    %v2972 = vsel %vm2844, %v2780, %v2908
    %v2973 = vsel %vm2845, %v2781, %v2909
    %v2974 = vsel %vm2846, %v2782, %v2910
    %v2975 = vsel %vm2847, %v2783, %v2911
    %v2976 = vsel %vm2848, %v2784, %v2912
    %v2977 = vsel %vm2849, %v2785, %v2913
    %v2978 = vsel %vm2850, %v2786, %v2914
    %v2979 = vsel %vm2851, %v2787, %v2915
    %v2980 = vsel %vm2852, %v2788, %v2916
    %v2981 = vsel %vm2853, %v2789, %v2917
    %v2982 = vsel %vm2854, %v2790, %v2918
    %v2983 = vsel %vm2855, %v2791, %v2919
    %v2984 = vsel %vm2856, %v2792, %v2920
    %v2985 = vsel %vm2857, %v2793, %v2921
    %v2986 = vsel %vm2858, %v2794, %v2922
    %v2987 = vsel %vm2859, %v2795, %v2923
    %v2988 = vsel %vm2860, %v2796, %v2924
    %v2989 = vsel %vm2861, %v2797, %v2925
    %v2990 = vsel %vm2862, %v2798, %v2926
    %v2991 = vsel %vm2863, %v2799, %v2927
    %v2992 = vsel %vm2864, %v2800, %v2928
    %v2993 = vsel %vm2865, %v2801, %v2929
    %v2994 = vsel %vm2866, %v2802, %v2930
    %v2995 = vsel %vm2867, %v2803, %v2931
    %v2996 = vsel %vm2868, %v2804, %v2932
    %v2997 = vsel %vm2869, %v2805, %v2933
    %v2998 = vsel %vm2870, %v2806, %v2934
    %v2999 = vsel %vm2871, %v2807, %v2935
    %v3000 = vsel %vm2872, %v2808, %v2936
    %v3001 = vsel %vm2873, %v2809, %v2937
    %v3002 = vsel %vm2874, %v2810, %v2938
    %v3003 = vsel %vm2875, %v2811, %v2939
    %v3004 = vsel %vm2876, %v2812, %v2940
    %v3005 = vsel %vm2877, %v2813, %v2941
    %s3006 = sshll.u32 %s208, 4
    %3007 = dma.done [#allocation3], %s3006
    %s3008 = scalar_lea.hbm %s1, 49152
    %s3010 = sshll.u32 1, 14
    %s3011 = sxor.u32 4294967295, %s3010
    %s3013 = sadd.s32 2, %s144
    %s3015 = sshll.u32 7, 26
    %s3016 = sxor.u32 4294967295, %s3015
    %s3017 = sand.u32 0, %s3016
    %s3018 = sshll.u32 %s3013, 26
    %s3019 = sor.u32 %s3017, %s3018
    %s3020 = sshll.u32 %s212, 4
    %s3021 = int_to_ptr.vmem [resolvable:$true] %s3020
    %3024 = sst [smem:[#allocation27]] 512
    %s3025 = scalar_lea.smem [#allocation27], 1
    %3026 = sst [smem:[%s3025]] 512
    %s3027 = scalar_lea.smem [#allocation27], 2
    %3028 = sst [smem:[%s3027]] 4
    %s3029 = scalar_lea.smem [#allocation27], 3
    %3030 = sst [smem:[%s3029]] 64
    %s3031 = scalar_lea.smem [#allocation27], 4
    %3032 = sst [smem:[%s3031]] 128
    %s3033 = scalar_lea.smem [#allocation27], 5
    %3034 = sst [smem:[%s3033]] 2
    %s3035 = scalar_lea.smem [#allocation27], 6
    %3036 = sst [smem:[%s3035]] 256
    %s3037 = scalar_lea.smem [#allocation27], 7
    %3038 = sst [smem:[%s3037]] 64
    %s3039 = scalar_lea.smem [#allocation27], 8
    %3040 = sst [smem:[%s3039]] 4
    %3042 = dma.general %s3008, 16384, %s3021, %s213, [#allocation26], [#allocation27], %s3019, 0
    %v3043 = vpack.c.bf16 %v2946, %v2942
    %v3044 = vpack.c.bf16 %v2947, %v2943
    %v3045 = vpack.c.bf16 %v2948, %v2944
    %v3046 = vpack.c.bf16 %v2949, %v2945
    %v3047 = vpack.c.bf16 %v2954, %v2950
    %v3048 = vpack.c.bf16 %v2955, %v2951
    %v3049 = vpack.c.bf16 %v2956, %v2952
    %v3050 = vpack.c.bf16 %v2957, %v2953
    %v3051 = vpack.c.bf16 %v2962, %v2958
    %v3052 = vpack.c.bf16 %v2963, %v2959
    %v3053 = vpack.c.bf16 %v2964, %v2960
    %v3054 = vpack.c.bf16 %v2965, %v2961
    %v3055 = vpack.c.bf16 %v2970, %v2966
    %v3056 = vpack.c.bf16 %v2971, %v2967
    %v3057 = vpack.c.bf16 %v2972, %v2968
    %v3058 = vpack.c.bf16 %v2973, %v2969
    %v3059 = vpack.c.bf16 %v2978, %v2974
    %v3060 = vpack.c.bf16 %v2979, %v2975
    %v3061 = vpack.c.bf16 %v2980, %v2976
    %v3062 = vpack.c.bf16 %v2981, %v2977
    %v3063 = vpack.c.bf16 %v2986, %v2982
    %v3064 = vpack.c.bf16 %v2987, %v2983
    %v3065 = vpack.c.bf16 %v2988, %v2984
    %v3066 = vpack.c.bf16 %v2989, %v2985
    %v3067 = vpack.c.bf16 %v2994, %v2990
    %v3068 = vpack.c.bf16 %v2995, %v2991
    %v3069 = vpack.c.bf16 %v2996, %v2992
    %v3070 = vpack.c.bf16 %v2997, %v2993
    %v3071 = vpack.c.bf16 %v3002, %v2998
    %v3072 = vpack.c.bf16 %v3003, %v2999
    %v3073 = vpack.c.bf16 %v3004, %v3000
    %v3074 = vpack.c.bf16 %v3005, %v3001
    %v3075 = vld [vmem:[#allocation2] sm:$0xff]
    %v3076 = vld [vmem:[#allocation2 + $0x8] sm:$0xff]
    %v3077 = vld [vmem:[#allocation2 + $0x10] sm:$0xff]
    %v3078 = vld [vmem:[#allocation2 + $0x18] sm:$0xff]
    %v3079 = vld [vmem:[#allocation2 + $0x20] sm:$0xff]
    %v3080 = vld [vmem:[#allocation2 + $0x28] sm:$0xff]
    %v3081 = vld [vmem:[#allocation2 + $0x30] sm:$0xff]
    %v3082 = vld [vmem:[#allocation2 + $0x38] sm:$0xff]
    %v3083 = vld [vmem:[#allocation2 + $0x40] sm:$0xff]
    %v3084 = vld [vmem:[#allocation2 + $0x48] sm:$0xff]
    %v3085 = vld [vmem:[#allocation2 + $0x50] sm:$0xff]
    %v3086 = vld [vmem:[#allocation2 + $0x58] sm:$0xff]
    %v3087 = vld [vmem:[#allocation2 + $0x60] sm:$0xff]
    %v3088 = vld [vmem:[#allocation2 + $0x68] sm:$0xff]
    %v3089 = vld [vmem:[#allocation2 + $0x70] sm:$0xff]
    %v3090 = vld [vmem:[#allocation2 + $0x78] sm:$0xff]
    %v3091 = vld [vmem:[#allocation2 + $0x80] sm:$0xff]
    %v3092 = vld [vmem:[#allocation2 + $0x88] sm:$0xff]
    %v3093 = vld [vmem:[#allocation2 + $0x90] sm:$0xff]
    %v3094 = vld [vmem:[#allocation2 + $0x98] sm:$0xff]
    %v3095 = vld [vmem:[#allocation2 + $0xa0] sm:$0xff]
    %v3096 = vld [vmem:[#allocation2 + $0xa8] sm:$0xff]
    %v3097 = vld [vmem:[#allocation2 + $0xb0] sm:$0xff]
    %v3098 = vld [vmem:[#allocation2 + $0xb8] sm:$0xff]
    %v3099 = vld [vmem:[#allocation2 + $0xc0] sm:$0xff]
    %v3100 = vld [vmem:[#allocation2 + $0xc8] sm:$0xff]
    %v3101 = vld [vmem:[#allocation2 + $0xd0] sm:$0xff]
    %v3102 = vld [vmem:[#allocation2 + $0xd8] sm:$0xff]
    %v3103 = vld [vmem:[#allocation2 + $0xe0] sm:$0xff]
    %v3104 = vld [vmem:[#allocation2 + $0xe8] sm:$0xff]
    %v3105 = vld [vmem:[#allocation2 + $0xf0] sm:$0xff]
    %v3106 = vld [vmem:[#allocation2 + $0xf8] sm:$0xff]
    %v3107 = vld [vmem:[#allocation2 + $0x100] sm:$0xff]
    %v3108 = vld [vmem:[#allocation2 + $0x108] sm:$0xff]
    %v3109 = vld [vmem:[#allocation2 + $0x110] sm:$0xff]
    %v3110 = vld [vmem:[#allocation2 + $0x118] sm:$0xff]
    %v3111 = vld [vmem:[#allocation2 + $0x120] sm:$0xff]
    %v3112 = vld [vmem:[#allocation2 + $0x128] sm:$0xff]
    %v3113 = vld [vmem:[#allocation2 + $0x130] sm:$0xff]
    %v3114 = vld [vmem:[#allocation2 + $0x138] sm:$0xff]
    %v3115 = vld [vmem:[#allocation2 + $0x140] sm:$0xff]
    %v3116 = vld [vmem:[#allocation2 + $0x148] sm:$0xff]
    %v3117 = vld [vmem:[#allocation2 + $0x150] sm:$0xff]
    %v3118 = vld [vmem:[#allocation2 + $0x158] sm:$0xff]
    %v3119 = vld [vmem:[#allocation2 + $0x160] sm:$0xff]
    %v3120 = vld [vmem:[#allocation2 + $0x168] sm:$0xff]
    %v3121 = vld [vmem:[#allocation2 + $0x170] sm:$0xff]
    %v3122 = vld [vmem:[#allocation2 + $0x178] sm:$0xff]
    %v3123 = vld [vmem:[#allocation2 + $0x180] sm:$0xff]
    %v3124 = vld [vmem:[#allocation2 + $0x188] sm:$0xff]
    %v3125 = vld [vmem:[#allocation2 + $0x190] sm:$0xff]
    %v3126 = vld [vmem:[#allocation2 + $0x198] sm:$0xff]
    %v3127 = vld [vmem:[#allocation2 + $0x1a0] sm:$0xff]
    %v3128 = vld [vmem:[#allocation2 + $0x1a8] sm:$0xff]
    %v3129 = vld [vmem:[#allocation2 + $0x1b0] sm:$0xff]
    %v3130 = vld [vmem:[#allocation2 + $0x1b8] sm:$0xff]
    %v3131 = vld [vmem:[#allocation2 + $0x1c0] sm:$0xff]
    %v3132 = vld [vmem:[#allocation2 + $0x1c8] sm:$0xff]
    %v3133 = vld [vmem:[#allocation2 + $0x1d0] sm:$0xff]
    %v3134 = vld [vmem:[#allocation2 + $0x1d8] sm:$0xff]
    %v3135 = vld [vmem:[#allocation2 + $0x1e0] sm:$0xff]
    %v3136 = vld [vmem:[#allocation2 + $0x1e8] sm:$0xff]
    %v3137 = vld [vmem:[#allocation2 + $0x1f0] sm:$0xff]
    %v3138 = vld [vmem:[#allocation2 + $0x1f8] sm:$0xff]
    %v3139 = vld [vmem:[#allocation2 + $0x200] sm:$0xff]
    %v3140 = vld [vmem:[#allocation2 + $0x208] sm:$0xff]
    %v3141 = vld [vmem:[#allocation2 + $0x210] sm:$0xff]
    %v3142 = vld [vmem:[#allocation2 + $0x218] sm:$0xff]
    %v3143 = vld [vmem:[#allocation2 + $0x220] sm:$0xff]
    %v3144 = vld [vmem:[#allocation2 + $0x228] sm:$0xff]
    %v3145 = vld [vmem:[#allocation2 + $0x230] sm:$0xff]
    %v3146 = vld [vmem:[#allocation2 + $0x238] sm:$0xff]
    %v3147 = vld [vmem:[#allocation2 + $0x240] sm:$0xff]
    %v3148 = vld [vmem:[#allocation2 + $0x248] sm:$0xff]
    %v3149 = vld [vmem:[#allocation2 + $0x250] sm:$0xff]
    %v3150 = vld [vmem:[#allocation2 + $0x258] sm:$0xff]
    %v3151 = vld [vmem:[#allocation2 + $0x260] sm:$0xff]
    %v3152 = vld [vmem:[#allocation2 + $0x268] sm:$0xff]
    %v3153 = vld [vmem:[#allocation2 + $0x270] sm:$0xff]
    %v3154 = vld [vmem:[#allocation2 + $0x278] sm:$0xff]
    %v3155 = vld [vmem:[#allocation2 + $0x280] sm:$0xff]
    %v3156 = vld [vmem:[#allocation2 + $0x288] sm:$0xff]
    %v3157 = vld [vmem:[#allocation2 + $0x290] sm:$0xff]
    %v3158 = vld [vmem:[#allocation2 + $0x298] sm:$0xff]
    %v3159 = vld [vmem:[#allocation2 + $0x2a0] sm:$0xff]
    %v3160 = vld [vmem:[#allocation2 + $0x2a8] sm:$0xff]
    %v3161 = vld [vmem:[#allocation2 + $0x2b0] sm:$0xff]
    %v3162 = vld [vmem:[#allocation2 + $0x2b8] sm:$0xff]
    %v3163 = vld [vmem:[#allocation2 + $0x2c0] sm:$0xff]
    %v3164 = vld [vmem:[#allocation2 + $0x2c8] sm:$0xff]
    %v3165 = vld [vmem:[#allocation2 + $0x2d0] sm:$0xff]
    %v3166 = vld [vmem:[#allocation2 + $0x2d8] sm:$0xff]
    %v3167 = vld [vmem:[#allocation2 + $0x2e0] sm:$0xff]
    %v3168 = vld [vmem:[#allocation2 + $0x2e8] sm:$0xff]
    %v3169 = vld [vmem:[#allocation2 + $0x2f0] sm:$0xff]
    %v3170 = vld [vmem:[#allocation2 + $0x2f8] sm:$0xff]
    %v3171 = vld [vmem:[#allocation2 + $0x300] sm:$0xff]
    %v3172 = vld [vmem:[#allocation2 + $0x308] sm:$0xff]
    %v3173 = vld [vmem:[#allocation2 + $0x310] sm:$0xff]
    %v3174 = vld [vmem:[#allocation2 + $0x318] sm:$0xff]
    %v3175 = vld [vmem:[#allocation2 + $0x320] sm:$0xff]
    %v3176 = vld [vmem:[#allocation2 + $0x328] sm:$0xff]
    %v3177 = vld [vmem:[#allocation2 + $0x330] sm:$0xff]
    %v3178 = vld [vmem:[#allocation2 + $0x338] sm:$0xff]
    %v3179 = vld [vmem:[#allocation2 + $0x340] sm:$0xff]
    %v3180 = vld [vmem:[#allocation2 + $0x348] sm:$0xff]
    %v3181 = vld [vmem:[#allocation2 + $0x350] sm:$0xff]
    %v3182 = vld [vmem:[#allocation2 + $0x358] sm:$0xff]
    %v3183 = vld [vmem:[#allocation2 + $0x360] sm:$0xff]
    %v3184 = vld [vmem:[#allocation2 + $0x368] sm:$0xff]
    %v3185 = vld [vmem:[#allocation2 + $0x370] sm:$0xff]
    %v3186 = vld [vmem:[#allocation2 + $0x378] sm:$0xff]
    %v3187 = vld [vmem:[#allocation2 + $0x380] sm:$0xff]
    %v3188 = vld [vmem:[#allocation2 + $0x388] sm:$0xff]
    %v3189 = vld [vmem:[#allocation2 + $0x390] sm:$0xff]
    %v3190 = vld [vmem:[#allocation2 + $0x398] sm:$0xff]
    %v3191 = vld [vmem:[#allocation2 + $0x3a0] sm:$0xff]
    %v3192 = vld [vmem:[#allocation2 + $0x3a8] sm:$0xff]
    %v3193 = vld [vmem:[#allocation2 + $0x3b0] sm:$0xff]
    %v3194 = vld [vmem:[#allocation2 + $0x3b8] sm:$0xff]
    %v3195 = vld [vmem:[#allocation2 + $0x3c0] sm:$0xff]
    %v3196 = vld [vmem:[#allocation2 + $0x3c8] sm:$0xff]
    %v3197 = vld [vmem:[#allocation2 + $0x3d0] sm:$0xff]
    %v3198 = vld [vmem:[#allocation2 + $0x3d8] sm:$0xff]
    %v3199 = vld [vmem:[#allocation2 + $0x3e0] sm:$0xff]
    %v3200 = vld [vmem:[#allocation2 + $0x3e8] sm:$0xff]
    %v3201 = vld [vmem:[#allocation2 + $0x3f0] sm:$0xff]
    %v3202 = vld [vmem:[#allocation2 + $0x3f8] sm:$0xff]
    %3203 = vmatprep.subr.bf16.mxu0 %v3076
    %3204 = vmatpush1.bf16.msra.mxu0 %v3075
    %3205 = vmatprep.subr.bf16.mxu0 %v3080
    %3206 = vmatpush1.bf16.msra.mxu0 %v3079
    %3207 = vmatprep.subr.bf16.mxu0 %v3084
    %3208 = vmatpush1.bf16.msra.mxu0 %v3083
    %3209 = vmatprep.subr.bf16.mxu0 %v3088
    %3210 = vmatpush1.bf16.msra.mxu0 %v3087
    %3211 = vmatprep.subr.bf16.mxu0 %v3092
    %3212 = vmatpush1.bf16.msra.mxu0 %v3091
    %3213 = vmatprep.subr.bf16.mxu0 %v3096
    %3214 = vmatpush1.bf16.msra.mxu0 %v3095
    %3215 = vmatprep.subr.bf16.mxu0 %v3100
    %3216 = vmatpush1.bf16.msra.mxu0 %v3099
    %3217 = vmatprep.subr.bf16.mxu0 %v3104
    %3218 = vmatpush1.bf16.msra.mxu0 %v3103
    %3219 = vmatprep.subr.bf16.mxu0 %v3108
    %3220 = vmatpush1.bf16.msra.mxu0 %v3107
    %3221 = vmatprep.subr.bf16.mxu0 %v3112
    %3222 = vmatpush1.bf16.msra.mxu0 %v3111
    %3223 = vmatprep.subr.bf16.mxu0 %v3116
    %3224 = vmatpush1.bf16.msra.mxu0 %v3115
    %3225 = vmatprep.subr.bf16.mxu0 %v3120
    %3226 = vmatpush1.bf16.msra.mxu0 %v3119
    %3227 = vmatprep.subr.bf16.mxu0 %v3124
    %3228 = vmatpush1.bf16.msra.mxu0 %v3123
    %3229 = vmatprep.subr.bf16.mxu0 %v3128
    %3230 = vmatpush1.bf16.msra.mxu0 %v3127
    %3231 = vmatprep.subr.bf16.mxu0 %v3132
    %3232 = vmatpush1.bf16.msra.mxu0 %v3131
    %3233 = vmatprep.subr.bf16.mxu0 %v3136
    %3234 = vmatpush1.bf16.msra.mxu0 %v3135
    %3235 = vmatprep.mubr.bf16.mxu0 %v3044
    %3236 = vmatmul.mubr.bf16.gmra.mrb[0].mxu0 %v3043
    %v3237 = vpop.f32.mrb[0].mxu0
    %v3238 = vadd.f32 0.0, %v3237
    %v3239 = vpop.f32.mrb[0].mxu0
    %v3240 = vadd.f32 0.0, %v3239
    %v3241 = vpop.f32.mrb[0].mxu0
    %v3242 = vadd.f32 0.0, %v3241
    %v3243 = vpop.f32.mrb[0].mxu0
    %v3244 = vadd.f32 0.0, %v3243
    %3245 = vmatprep.mubr.bf16.mxu0 %v3048
    %3246 = vmatmul.mubr.bf16.gmra.mrb[0].mxu0 %v3047
    %v3247 = vpop.f32.mrb[0].mxu0
    %v3248 = vadd.f32 0.0, %v3247
    %v3249 = vpop.f32.mrb[0].mxu0
    %v3250 = vadd.f32 0.0, %v3249
    %v3251 = vpop.f32.mrb[0].mxu0
    %v3252 = vadd.f32 0.0, %v3251
    %v3253 = vpop.f32.mrb[0].mxu0
    %v3254 = vadd.f32 0.0, %v3253
    %3255 = vmatprep.mubr.bf16.mxu0 %v3052
    %3256 = vmatmul.mubr.bf16.gmra.mrb[0].mxu0 %v3051
    %v3257 = vpop.f32.mrb[0].mxu0
    %v3258 = vadd.f32 0.0, %v3257
    %v3259 = vpop.f32.mrb[0].mxu0
    %v3260 = vadd.f32 0.0, %v3259
    %v3261 = vpop.f32.mrb[0].mxu0
    %v3262 = vadd.f32 0.0, %v3261
    %v3263 = vpop.f32.mrb[0].mxu0
    %v3264 = vadd.f32 0.0, %v3263
    %3265 = vmatprep.mubr.bf16.mxu0 %v3056
    %3266 = vmatmul.mubr.bf16.gmra.mrb[0].mxu0 %v3055
    %v3267 = vpop.f32.mrb[0].mxu0
    %v3268 = vadd.f32 0.0, %v3267
    %v3269 = vpop.f32.mrb[0].mxu0
    %v3270 = vadd.f32 0.0, %v3269
    %v3271 = vpop.f32.mrb[0].mxu0
    %v3272 = vadd.f32 0.0, %v3271
    %v3273 = vpop.f32.mrb[0].mxu0
    %v3274 = vadd.f32 0.0, %v3273
    %3275 = vmatprep.mubr.bf16.mxu0 %v3060
    %3276 = vmatmul.mubr.bf16.gmra.mrb[0].mxu0 %v3059
    %v3277 = vpop.f32.mrb[0].mxu0
    %v3278 = vadd.f32 0.0, %v3277
    %v3279 = vpop.f32.mrb[0].mxu0
    %v3280 = vadd.f32 0.0, %v3279
    %v3281 = vpop.f32.mrb[0].mxu0
    %v3282 = vadd.f32 0.0, %v3281
    %v3283 = vpop.f32.mrb[0].mxu0
    %v3284 = vadd.f32 0.0, %v3283
    %3285 = vmatprep.mubr.bf16.mxu0 %v3064
    %3286 = vmatmul.mubr.bf16.gmra.mrb[0].mxu0 %v3063
    %v3287 = vpop.f32.mrb[0].mxu0
    %v3288 = vadd.f32 0.0, %v3287
    %v3289 = vpop.f32.mrb[0].mxu0
    %v3290 = vadd.f32 0.0, %v3289
    %v3291 = vpop.f32.mrb[0].mxu0
    %v3292 = vadd.f32 0.0, %v3291
    %v3293 = vpop.f32.mrb[0].mxu0
    %v3294 = vadd.f32 0.0, %v3293
    %3295 = vmatprep.mubr.bf16.mxu0 %v3068
    %3296 = vmatmul.mubr.bf16.gmra.mrb[0].mxu0 %v3067
    %v3297 = vpop.f32.mrb[0].mxu0
    %v3298 = vadd.f32 0.0, %v3297
    %v3299 = vpop.f32.mrb[0].mxu0
    %v3300 = vadd.f32 0.0, %v3299
    %v3301 = vpop.f32.mrb[0].mxu0
    %v3302 = vadd.f32 0.0, %v3301
    %v3303 = vpop.f32.mrb[0].mxu0
    %v3304 = vadd.f32 0.0, %v3303
    %3305 = vmatprep.mubr.bf16.mxu0 %v3072
    %3306 = vmatmul.mubr.bf16.gmra.mrb[0].mxu0 %v3071
    %v3307 = vpop.f32.mrb[0].mxu0
    %v3308 = vadd.f32 0.0, %v3307
    %v3309 = vpop.f32.mrb[0].mxu0
    %v3310 = vadd.f32 0.0, %v3309
    %v3311 = vpop.f32.mrb[0].mxu0
    %v3312 = vadd.f32 0.0, %v3311
    %v3313 = vpop.f32.mrb[0].mxu0
    %v3314 = vadd.f32 0.0, %v3313
    %3315 = vdwg.mxu0
    %3316 = vmatprep.subr.bf16.mxu0 %v3140
    %3317 = vmatpush1.bf16.msra.mxu0 %v3139
    %3318 = vmatprep.subr.bf16.mxu0 %v3144
    %3319 = vmatpush1.bf16.msra.mxu0 %v3143
    %3320 = vmatprep.subr.bf16.mxu0 %v3148
    %3321 = vmatpush1.bf16.msra.mxu0 %v3147
    %3322 = vmatprep.subr.bf16.mxu0 %v3152
    %3323 = vmatpush1.bf16.msra.mxu0 %v3151
    %3324 = vmatprep.subr.bf16.mxu0 %v3156
    %3325 = vmatpush1.bf16.msra.mxu0 %v3155
    %3326 = vmatprep.subr.bf16.mxu0 %v3160
    %3327 = vmatpush1.bf16.msra.mxu0 %v3159
    %3328 = vmatprep.subr.bf16.mxu0 %v3164
    %3329 = vmatpush1.bf16.msra.mxu0 %v3163
    %3330 = vmatprep.subr.bf16.mxu0 %v3168
    %3331 = vmatpush1.bf16.msra.mxu0 %v3167
    %3332 = vmatprep.subr.bf16.mxu0 %v3172
    %3333 = vmatpush1.bf16.msra.mxu0 %v3171
    %3334 = vmatprep.subr.bf16.mxu0 %v3176
    %3335 = vmatpush1.bf16.msra.mxu0 %v3175
    %3336 = vmatprep.subr.bf16.mxu0 %v3180
    %3337 = vmatpush1.bf16.msra.mxu0 %v3179
    %3338 = vmatprep.subr.bf16.mxu0 %v3184
    %3339 = vmatpush1.bf16.msra.mxu0 %v3183
    %3340 = vmatprep.subr.bf16.mxu0 %v3188
    %3341 = vmatpush1.bf16.msra.mxu0 %v3187
    %3342 = vmatprep.subr.bf16.mxu0 %v3192
    %3343 = vmatpush1.bf16.msra.mxu0 %v3191
    %3344 = vmatprep.subr.bf16.mxu0 %v3196
    %3345 = vmatpush1.bf16.msra.mxu0 %v3195
    %3346 = vmatprep.subr.bf16.mxu0 %v3200
    %3347 = vmatpush1.bf16.msra.mxu0 %v3199
    %3348 = vmatprep.mubr.bf16.mxu0 %v3046
    %3349 = vmatmul.mubr.bf16.gmra.mrb[0].mxu0 %v3045
    %v3350 = vpop.f32.mrb[0].mxu0
    %v3351 = vadd.f32 %v3238, %v3350
    %v3352 = vpop.f32.mrb[0].mxu0
    %v3353 = vadd.f32 %v3240, %v3352
    %v3354 = vpop.f32.mrb[0].mxu0
    %v3355 = vadd.f32 %v3242, %v3354
    %v3356 = vpop.f32.mrb[0].mxu0
    %v3357 = vadd.f32 %v3244, %v3356
    %3358 = vmatprep.mubr.bf16.mxu0 %v3050
    %3359 = vmatmul.mubr.bf16.gmra.mrb[0].mxu0 %v3049
    %v3360 = vpop.f32.mrb[0].mxu0
    %v3361 = vadd.f32 %v3248, %v3360
    %v3362 = vpop.f32.mrb[0].mxu0
    %v3363 = vadd.f32 %v3250, %v3362
    %v3364 = vpop.f32.mrb[0].mxu0
    %v3365 = vadd.f32 %v3252, %v3364
    %v3366 = vpop.f32.mrb[0].mxu0
    %v3367 = vadd.f32 %v3254, %v3366
    %3368 = vmatprep.mubr.bf16.mxu0 %v3054
    %3369 = vmatmul.mubr.bf16.gmra.mrb[0].mxu0 %v3053
    %v3370 = vpop.f32.mrb[0].mxu0
    %v3371 = vadd.f32 %v3258, %v3370
    %v3372 = vpop.f32.mrb[0].mxu0
    %v3373 = vadd.f32 %v3260, %v3372
    %v3374 = vpop.f32.mrb[0].mxu0
    %v3375 = vadd.f32 %v3262, %v3374
    %v3376 = vpop.f32.mrb[0].mxu0
    %v3377 = vadd.f32 %v3264, %v3376
    %3378 = vmatprep.mubr.bf16.mxu0 %v3058
    %3379 = vmatmul.mubr.bf16.gmra.mrb[0].mxu0 %v3057
    %v3380 = vpop.f32.mrb[0].mxu0
    %v3381 = vadd.f32 %v3268, %v3380
    %v3382 = vpop.f32.mrb[0].mxu0
    %v3383 = vadd.f32 %v3270, %v3382
    %v3384 = vpop.f32.mrb[0].mxu0
    %v3385 = vadd.f32 %v3272, %v3384
    %v3386 = vpop.f32.mrb[0].mxu0
    %v3387 = vadd.f32 %v3274, %v3386
    %3388 = vmatprep.mubr.bf16.mxu0 %v3062
    %3389 = vmatmul.mubr.bf16.gmra.mrb[0].mxu0 %v3061
    %v3390 = vpop.f32.mrb[0].mxu0
    %v3391 = vadd.f32 %v3278, %v3390
    %v3392 = vpop.f32.mrb[0].mxu0
    %v3393 = vadd.f32 %v3280, %v3392
    %v3394 = vpop.f32.mrb[0].mxu0
    %v3395 = vadd.f32 %v3282, %v3394
    %v3396 = vpop.f32.mrb[0].mxu0
    %v3397 = vadd.f32 %v3284, %v3396
    %3398 = vmatprep.mubr.bf16.mxu0 %v3066
    %3399 = vmatmul.mubr.bf16.gmra.mrb[0].mxu0 %v3065
    %v3400 = vpop.f32.mrb[0].mxu0
    %v3401 = vadd.f32 %v3288, %v3400
    %v3402 = vpop.f32.mrb[0].mxu0
    %v3403 = vadd.f32 %v3290, %v3402
    %v3404 = vpop.f32.mrb[0].mxu0
    %v3405 = vadd.f32 %v3292, %v3404
    %v3406 = vpop.f32.mrb[0].mxu0
    %v3407 = vadd.f32 %v3294, %v3406
    %3408 = vmatprep.mubr.bf16.mxu0 %v3070
    %3409 = vmatmul.mubr.bf16.gmra.mrb[0].mxu0 %v3069
    %v3410 = vpop.f32.mrb[0].mxu0
    %v3411 = vadd.f32 %v3298, %v3410
    %v3412 = vpop.f32.mrb[0].mxu0
    %v3413 = vadd.f32 %v3300, %v3412
    %v3414 = vpop.f32.mrb[0].mxu0
    %v3415 = vadd.f32 %v3302, %v3414
    %v3416 = vpop.f32.mrb[0].mxu0
    %v3417 = vadd.f32 %v3304, %v3416
    %3418 = vmatprep.mubr.bf16.mxu0 %v3074
    %3419 = vmatmul.mubr.bf16.gmra.mrb[0].mxu0 %v3073
    %v3420 = vpop.f32.mrb[0].mxu0
    %v3421 = vadd.f32 %v3308, %v3420
    %v3422 = vpop.f32.mrb[0].mxu0
    %v3423 = vadd.f32 %v3310, %v3422
    %v3424 = vpop.f32.mrb[0].mxu0
    %v3425 = vadd.f32 %v3312, %v3424
    %v3426 = vpop.f32.mrb[0].mxu0
    %v3427 = vadd.f32 %v3314, %v3426
    %3428 = vdwg.mxu0
    %3429 = vmatprep.subr.bf16.mxu0 %v3078
    %3430 = vmatpush1.bf16.msra.mxu0 %v3077
    %3431 = vmatprep.subr.bf16.mxu0 %v3082
    %3432 = vmatpush1.bf16.msra.mxu0 %v3081
    %3433 = vmatprep.subr.bf16.mxu0 %v3086
    %3434 = vmatpush1.bf16.msra.mxu0 %v3085
    %3435 = vmatprep.subr.bf16.mxu0 %v3090
    %3436 = vmatpush1.bf16.msra.mxu0 %v3089
    %3437 = vmatprep.subr.bf16.mxu0 %v3094
    %3438 = vmatpush1.bf16.msra.mxu0 %v3093
    %3439 = vmatprep.subr.bf16.mxu0 %v3098
    %3440 = vmatpush1.bf16.msra.mxu0 %v3097
    %3441 = vmatprep.subr.bf16.mxu0 %v3102
    %3442 = vmatpush1.bf16.msra.mxu0 %v3101
    %3443 = vmatprep.subr.bf16.mxu0 %v3106
    %3444 = vmatpush1.bf16.msra.mxu0 %v3105
    %3445 = vmatprep.subr.bf16.mxu0 %v3110
    %3446 = vmatpush1.bf16.msra.mxu0 %v3109
    %3447 = vmatprep.subr.bf16.mxu0 %v3114
    %3448 = vmatpush1.bf16.msra.mxu0 %v3113
    %3449 = vmatprep.subr.bf16.mxu0 %v3118
    %3450 = vmatpush1.bf16.msra.mxu0 %v3117
    %3451 = vmatprep.subr.bf16.mxu0 %v3122
    %3452 = vmatpush1.bf16.msra.mxu0 %v3121
    %3453 = vmatprep.subr.bf16.mxu0 %v3126
    %3454 = vmatpush1.bf16.msra.mxu0 %v3125
    %3455 = vmatprep.subr.bf16.mxu0 %v3130
    %3456 = vmatpush1.bf16.msra.mxu0 %v3129
    %3457 = vmatprep.subr.bf16.mxu0 %v3134
    %3458 = vmatpush1.bf16.msra.mxu0 %v3133
    %3459 = vmatprep.subr.bf16.mxu0 %v3138
    %3460 = vmatpush1.bf16.msra.mxu0 %v3137
    %3461 = vmatprep.mubr.bf16.mxu0 %v3044
    %3462 = vmatmul.mubr.bf16.gmra.mrb[0].mxu0 %v3043
    %v3463 = vpop.f32.mrb[0].mxu0
    %v3464 = vadd.f32 0.0, %v3463
    %v3465 = vpop.f32.mrb[0].mxu0
    %v3466 = vadd.f32 0.0, %v3465
    %v3467 = vpop.f32.mrb[0].mxu0
    %v3468 = vadd.f32 0.0, %v3467
    %v3469 = vpop.f32.mrb[0].mxu0
    %v3470 = vadd.f32 0.0, %v3469
    %3471 = vmatprep.mubr.bf16.mxu0 %v3048
    %3472 = vmatmul.mubr.bf16.gmra.mrb[0].mxu0 %v3047
    %v3473 = vpop.f32.mrb[0].mxu0
    %v3474 = vadd.f32 0.0, %v3473
    %v3475 = vpop.f32.mrb[0].mxu0
    %v3476 = vadd.f32 0.0, %v3475
    %v3477 = vpop.f32.mrb[0].mxu0
    %v3478 = vadd.f32 0.0, %v3477
    %v3479 = vpop.f32.mrb[0].mxu0
    %v3480 = vadd.f32 0.0, %v3479
    %3481 = vmatprep.mubr.bf16.mxu0 %v3052
    %3482 = vmatmul.mubr.bf16.gmra.mrb[0].mxu0 %v3051
    %v3483 = vpop.f32.mrb[0].mxu0
    %v3484 = vadd.f32 0.0, %v3483
    %v3485 = vpop.f32.mrb[0].mxu0
    %v3486 = vadd.f32 0.0, %v3485
    %v3487 = vpop.f32.mrb[0].mxu0
    %v3488 = vadd.f32 0.0, %v3487
    %v3489 = vpop.f32.mrb[0].mxu0
    %v3490 = vadd.f32 0.0, %v3489
    %3491 = vmatprep.mubr.bf16.mxu0 %v3056
    %3492 = vmatmul.mubr.bf16.gmra.mrb[0].mxu0 %v3055
    %v3493 = vpop.f32.mrb[0].mxu0
    %v3494 = vadd.f32 0.0, %v3493
    %v3495 = vpop.f32.mrb[0].mxu0
    %v3496 = vadd.f32 0.0, %v3495
    %v3497 = vpop.f32.mrb[0].mxu0
    %v3498 = vadd.f32 0.0, %v3497
    %v3499 = vpop.f32.mrb[0].mxu0
    %v3500 = vadd.f32 0.0, %v3499
    %3501 = vmatprep.mubr.bf16.mxu0 %v3060
    %3502 = vmatmul.mubr.bf16.gmra.mrb[0].mxu0 %v3059
    %v3503 = vpop.f32.mrb[0].mxu0
    %v3504 = vadd.f32 0.0, %v3503
    %v3505 = vpop.f32.mrb[0].mxu0
    %v3506 = vadd.f32 0.0, %v3505
    %v3507 = vpop.f32.mrb[0].mxu0
    %v3508 = vadd.f32 0.0, %v3507
    %v3509 = vpop.f32.mrb[0].mxu0
    %v3510 = vadd.f32 0.0, %v3509
    %3511 = vmatprep.mubr.bf16.mxu0 %v3064
    %3512 = vmatmul.mubr.bf16.gmra.mrb[0].mxu0 %v3063
    %v3513 = vpop.f32.mrb[0].mxu0
    %v3514 = vadd.f32 0.0, %v3513
    %v3515 = vpop.f32.mrb[0].mxu0
    %v3516 = vadd.f32 0.0, %v3515
    %v3517 = vpop.f32.mrb[0].mxu0
    %v3518 = vadd.f32 0.0, %v3517
    %v3519 = vpop.f32.mrb[0].mxu0
    %v3520 = vadd.f32 0.0, %v3519
    %3521 = vmatprep.mubr.bf16.mxu0 %v3068
    %3522 = vmatmul.mubr.bf16.gmra.mrb[0].mxu0 %v3067
    %v3523 = vpop.f32.mrb[0].mxu0
    %v3524 = vadd.f32 0.0, %v3523
    %v3525 = vpop.f32.mrb[0].mxu0
    %v3526 = vadd.f32 0.0, %v3525
    %v3527 = vpop.f32.mrb[0].mxu0
    %v3528 = vadd.f32 0.0, %v3527
    %v3529 = vpop.f32.mrb[0].mxu0
    %v3530 = vadd.f32 0.0, %v3529
    %3531 = vmatprep.mubr.bf16.mxu0 %v3072
    %3532 = vmatmul.mubr.bf16.gmra.mrb[0].mxu0 %v3071
    %v3533 = vpop.f32.mrb[0].mxu0
    %v3534 = vadd.f32 0.0, %v3533
    %v3535 = vpop.f32.mrb[0].mxu0
    %v3536 = vadd.f32 0.0, %v3535
    %v3537 = vpop.f32.mrb[0].mxu0
    %v3538 = vadd.f32 0.0, %v3537
    %v3539 = vpop.f32.mrb[0].mxu0
    %v3540 = vadd.f32 0.0, %v3539
    %3541 = vdwg.mxu0
    %3542 = vmatprep.subr.bf16.mxu0 %v3142
    %3543 = vmatpush1.bf16.msra.mxu0 %v3141
    %3544 = vmatprep.subr.bf16.mxu0 %v3146
    %3545 = vmatpush1.bf16.msra.mxu0 %v3145
    %3546 = vmatprep.subr.bf16.mxu0 %v3150
    %3547 = vmatpush1.bf16.msra.mxu0 %v3149
    %3548 = vmatprep.subr.bf16.mxu0 %v3154
    %3549 = vmatpush1.bf16.msra.mxu0 %v3153
    %3550 = vmatprep.subr.bf16.mxu0 %v3158
    %3551 = vmatpush1.bf16.msra.mxu0 %v3157
    %3552 = vmatprep.subr.bf16.mxu0 %v3162
    %3553 = vmatpush1.bf16.msra.mxu0 %v3161
    %3554 = vmatprep.subr.bf16.mxu0 %v3166
    %3555 = vmatpush1.bf16.msra.mxu0 %v3165
    %3556 = vmatprep.subr.bf16.mxu0 %v3170
    %3557 = vmatpush1.bf16.msra.mxu0 %v3169
    %3558 = vmatprep.subr.bf16.mxu0 %v3174
    %3559 = vmatpush1.bf16.msra.mxu0 %v3173
    %3560 = vmatprep.subr.bf16.mxu0 %v3178
    %3561 = vmatpush1.bf16.msra.mxu0 %v3177
    %3562 = vmatprep.subr.bf16.mxu0 %v3182
    %3563 = vmatpush1.bf16.msra.mxu0 %v3181
    %3564 = vmatprep.subr.bf16.mxu0 %v3186
    %3565 = vmatpush1.bf16.msra.mxu0 %v3185
    %3566 = vmatprep.subr.bf16.mxu0 %v3190
    %3567 = vmatpush1.bf16.msra.mxu0 %v3189
    %3568 = vmatprep.subr.bf16.mxu0 %v3194
    %3569 = vmatpush1.bf16.msra.mxu0 %v3193
    %3570 = vmatprep.subr.bf16.mxu0 %v3198
    %3571 = vmatpush1.bf16.msra.mxu0 %v3197
    %3572 = vmatprep.subr.bf16.mxu0 %v3202
    %3573 = vmatpush1.bf16.msra.mxu0 %v3201
    %3574 = vmatprep.mubr.bf16.mxu0 %v3046
    %3575 = vmatmul.mubr.bf16.gmra.mrb[0].mxu0 %v3045
    %v3576 = vpop.f32.mrb[0].mxu0
    %v3577 = vadd.f32 %v3464, %v3576
    %v3578 = vpop.f32.mrb[0].mxu0
    %v3579 = vadd.f32 %v3466, %v3578
    %v3580 = vpop.f32.mrb[0].mxu0
    %v3581 = vadd.f32 %v3468, %v3580
    %v3582 = vpop.f32.mrb[0].mxu0
    %v3583 = vadd.f32 %v3470, %v3582
    %3584 = vmatprep.mubr.bf16.mxu0 %v3050
    %3585 = vmatmul.mubr.bf16.gmra.mrb[0].mxu0 %v3049
    %v3586 = vpop.f32.mrb[0].mxu0
    %v3587 = vadd.f32 %v3474, %v3586
    %v3588 = vpop.f32.mrb[0].mxu0
    %v3589 = vadd.f32 %v3476, %v3588
    %v3590 = vpop.f32.mrb[0].mxu0
    %v3591 = vadd.f32 %v3478, %v3590
    %v3592 = vpop.f32.mrb[0].mxu0
    %v3593 = vadd.f32 %v3480, %v3592
    %3594 = vmatprep.mubr.bf16.mxu0 %v3054
    %3595 = vmatmul.mubr.bf16.gmra.mrb[0].mxu0 %v3053
    %v3596 = vpop.f32.mrb[0].mxu0
    %v3597 = vadd.f32 %v3484, %v3596
    %v3598 = vpop.f32.mrb[0].mxu0
    %v3599 = vadd.f32 %v3486, %v3598
    %v3600 = vpop.f32.mrb[0].mxu0
    %v3601 = vadd.f32 %v3488, %v3600
    %v3602 = vpop.f32.mrb[0].mxu0
    %v3603 = vadd.f32 %v3490, %v3602
    %3604 = vmatprep.mubr.bf16.mxu0 %v3058
    %3605 = vmatmul.mubr.bf16.gmra.mrb[0].mxu0 %v3057
    %v3606 = vpop.f32.mrb[0].mxu0
    %v3607 = vadd.f32 %v3494, %v3606
    %v3608 = vpop.f32.mrb[0].mxu0
    %v3609 = vadd.f32 %v3496, %v3608
    %v3610 = vpop.f32.mrb[0].mxu0
    %v3611 = vadd.f32 %v3498, %v3610
    %v3612 = vpop.f32.mrb[0].mxu0
    %v3613 = vadd.f32 %v3500, %v3612
    %3614 = vmatprep.mubr.bf16.mxu0 %v3062
    %3615 = vmatmul.mubr.bf16.gmra.mrb[0].mxu0 %v3061
    %v3616 = vpop.f32.mrb[0].mxu0
    %v3617 = vadd.f32 %v3504, %v3616
    %v3618 = vpop.f32.mrb[0].mxu0
    %v3619 = vadd.f32 %v3506, %v3618
    %v3620 = vpop.f32.mrb[0].mxu0
    %v3621 = vadd.f32 %v3508, %v3620
    %v3622 = vpop.f32.mrb[0].mxu0
    %v3623 = vadd.f32 %v3510, %v3622
    %3624 = vmatprep.mubr.bf16.mxu0 %v3066
    %3625 = vmatmul.mubr.bf16.gmra.mrb[0].mxu0 %v3065
    %v3626 = vpop.f32.mrb[0].mxu0
    %v3627 = vadd.f32 %v3514, %v3626
    %v3628 = vpop.f32.mrb[0].mxu0
    %v3629 = vadd.f32 %v3516, %v3628
    %v3630 = vpop.f32.mrb[0].mxu0
    %v3631 = vadd.f32 %v3518, %v3630
    %v3632 = vpop.f32.mrb[0].mxu0
    %v3633 = vadd.f32 %v3520, %v3632
    %3634 = vmatprep.mubr.bf16.mxu0 %v3070
    %3635 = vmatmul.mubr.bf16.gmra.mrb[0].mxu0 %v3069
    %v3636 = vpop.f32.mrb[0].mxu0
    %v3637 = vadd.f32 %v3524, %v3636
    %v3638 = vpop.f32.mrb[0].mxu0
    %v3639 = vadd.f32 %v3526, %v3638
    %v3640 = vpop.f32.mrb[0].mxu0
    %v3641 = vadd.f32 %v3528, %v3640
    %v3642 = vpop.f32.mrb[0].mxu0
    %v3643 = vadd.f32 %v3530, %v3642
    %3644 = vmatprep.mubr.bf16.mxu0 %v3074
    %3645 = vmatmul.mubr.bf16.gmra.mrb[0].mxu0 %v3073
    %v3646 = vpop.f32.mrb[0].mxu0
    %v3647 = vadd.f32 %v3534, %v3646
    %v3648 = vpop.f32.mrb[0].mxu0
    %v3649 = vadd.f32 %v3536, %v3648
    %v3650 = vpop.f32.mrb[0].mxu0
    %v3651 = vadd.f32 %v3538, %v3650
    %v3652 = vpop.f32.mrb[0].mxu0
    %v3653 = vadd.f32 %v3540, %v3652
    %3654 = vdwg.mxu0
    %v3655 = vld [vmem:[#allocation13] sm:$0xf]
    %v3656 = vld [vmem:[#allocation15] sm:$0xf]
    %v3657 = vadd.f32 %v3351, %v3355
    %v3658 = vadd.f32 %v3657, %v3361
    %v3659 = vadd.f32 %v3658, %v3365
    %v3660 = vadd.f32 %v3659, %v3371
    %v3661 = vadd.f32 %v3660, %v3375
    %v3662 = vadd.f32 %v3661, %v3381
    %v3663 = vadd.f32 %v3662, %v3385
    %v3664 = vadd.f32 %v3663, %v3391
    %v3665 = vadd.f32 %v3664, %v3395
    %v3666 = vadd.f32 %v3665, %v3401
    %v3667 = vadd.f32 %v3666, %v3405
    %v3668 = vadd.f32 %v3667, %v3411
    %v3669 = vadd.f32 %v3668, %v3415
    %v3670 = vadd.f32 %v3669, %v3421
    %v3671 = vadd.f32 %v3670, %v3425
    %v3672 = vrot.slane %v3671, 4
    %v3673 = vadd.f32 %v3671, %v3672
    %v3674 = vrot.slane %v3673, 2
    %v3675 = vadd.f32 %v3673, %v3674
    %v3676 = vrot.slane %v3675, 1
    %v3677 = vadd.f32 %v3675, %v3676
    %v3678 = vadd.f32 %v3353, %v3357
    %v3679 = vadd.f32 %v3678, %v3363
    %v3680 = vadd.f32 %v3679, %v3367
    %v3681 = vadd.f32 %v3680, %v3373
    %v3682 = vadd.f32 %v3681, %v3377
    %v3683 = vadd.f32 %v3682, %v3383
    %v3684 = vadd.f32 %v3683, %v3387
    %v3685 = vadd.f32 %v3684, %v3393
    %v3686 = vadd.f32 %v3685, %v3397
    %v3687 = vadd.f32 %v3686, %v3403
    %v3688 = vadd.f32 %v3687, %v3407
    %v3689 = vadd.f32 %v3688, %v3413
    %v3690 = vadd.f32 %v3689, %v3417
    %v3691 = vadd.f32 %v3690, %v3423
    %v3692 = vadd.f32 %v3691, %v3427
    %v3693 = vrot.slane %v3692, 4
    %v3694 = vadd.f32 %v3692, %v3693
    %v3695 = vrot.slane %v3694, 2
    %v3696 = vadd.f32 %v3694, %v3695
    %v3697 = vrot.slane %v3696, 1
    %v3698 = vadd.f32 %v3696, %v3697
    %v3699 = vadd.f32 %v3577, %v3581
    %v3700 = vadd.f32 %v3699, %v3587
    %v3701 = vadd.f32 %v3700, %v3591
    %v3702 = vadd.f32 %v3701, %v3597
    %v3703 = vadd.f32 %v3702, %v3601
    %v3704 = vadd.f32 %v3703, %v3607
    %v3705 = vadd.f32 %v3704, %v3611
    %v3706 = vadd.f32 %v3705, %v3617
    %v3707 = vadd.f32 %v3706, %v3621
    %v3708 = vadd.f32 %v3707, %v3627
    %v3709 = vadd.f32 %v3708, %v3631
    %v3710 = vadd.f32 %v3709, %v3637
    %v3711 = vadd.f32 %v3710, %v3641
    %v3712 = vadd.f32 %v3711, %v3647
    %v3713 = vadd.f32 %v3712, %v3651
    %v3714 = vrot.slane %v3713, 4
    %v3715 = vadd.f32 %v3713, %v3714
    %v3716 = vrot.slane %v3715, 2
    %v3717 = vadd.f32 %v3715, %v3716
    %v3718 = vrot.slane %v3717, 1
    %v3719 = vadd.f32 %v3717, %v3718
    %v3720 = vadd.f32 %v3579, %v3583
    %v3721 = vadd.f32 %v3720, %v3589
    %v3722 = vadd.f32 %v3721, %v3593
    %v3723 = vadd.f32 %v3722, %v3599
    %v3724 = vadd.f32 %v3723, %v3603
    %v3725 = vadd.f32 %v3724, %v3609
    %v3726 = vadd.f32 %v3725, %v3613
    %v3727 = vadd.f32 %v3726, %v3619
    %v3728 = vadd.f32 %v3727, %v3623
    %v3729 = vadd.f32 %v3728, %v3629
    %v3730 = vadd.f32 %v3729, %v3633
    %v3731 = vadd.f32 %v3730, %v3639
    %v3732 = vadd.f32 %v3731, %v3643
    %v3733 = vadd.f32 %v3732, %v3649
    %v3734 = vadd.f32 %v3733, %v3653
    %v3735 = vrot.slane %v3734, 4
    %v3736 = vadd.f32 %v3734, %v3735
    %v3737 = vrot.slane %v3736, 2
    %v3738 = vadd.f32 %v3736, %v3737
    %v3739 = vrot.slane %v3738, 1
    %v3740 = vadd.f32 %v3738, %v3739
    %v3741 = vmul.f32 %v3677, %v1074
    %v3742 = vmul.f32 %v3698, %v1074
    %v3743 = vmul.f32 %v3719, %v1074
    %v3744 = vmul.f32 %v3740, %v1074
    %v3745 = vmul.f32 %v3351, %v3351
    %v3746 = vmul.f32 %v3353, %v3353
    %v3747 = vmul.f32 %v3577, %v3577
    %v3748 = vmul.f32 %v3579, %v3579
    %v3749 = vmul.f32 %v3355, %v3355
    %v3750 = vmul.f32 %v3357, %v3357
    %v3751 = vmul.f32 %v3581, %v3581
    %v3752 = vmul.f32 %v3583, %v3583
    %v3753 = vmul.f32 %v3361, %v3361
    %v3754 = vmul.f32 %v3363, %v3363
    %v3755 = vmul.f32 %v3587, %v3587
    %v3756 = vmul.f32 %v3589, %v3589
    %v3757 = vmul.f32 %v3365, %v3365
    %v3758 = vmul.f32 %v3367, %v3367
    %v3759 = vmul.f32 %v3591, %v3591
    %v3760 = vmul.f32 %v3593, %v3593
    %v3761 = vmul.f32 %v3371, %v3371
    %v3762 = vmul.f32 %v3373, %v3373
    %v3763 = vmul.f32 %v3597, %v3597
    %v3764 = vmul.f32 %v3599, %v3599
    %v3765 = vmul.f32 %v3375, %v3375
    %v3766 = vmul.f32 %v3377, %v3377
    %v3767 = vmul.f32 %v3601, %v3601
    %v3768 = vmul.f32 %v3603, %v3603
    %v3769 = vmul.f32 %v3381, %v3381
    %v3770 = vmul.f32 %v3383, %v3383
    %v3771 = vmul.f32 %v3607, %v3607
    %v3772 = vmul.f32 %v3609, %v3609
    %v3773 = vmul.f32 %v3385, %v3385
    %v3774 = vmul.f32 %v3387, %v3387
    %v3775 = vmul.f32 %v3611, %v3611
    %v3776 = vmul.f32 %v3613, %v3613
    %v3777 = vmul.f32 %v3391, %v3391
    %v3778 = vmul.f32 %v3393, %v3393
    %v3779 = vmul.f32 %v3617, %v3617
    %v3780 = vmul.f32 %v3619, %v3619
    %v3781 = vmul.f32 %v3395, %v3395
    %v3782 = vmul.f32 %v3397, %v3397
    %v3783 = vmul.f32 %v3621, %v3621
    %v3784 = vmul.f32 %v3623, %v3623
    %v3785 = vmul.f32 %v3401, %v3401
    %v3786 = vmul.f32 %v3403, %v3403
    %v3787 = vmul.f32 %v3627, %v3627
    %v3788 = vmul.f32 %v3629, %v3629
    %v3789 = vmul.f32 %v3405, %v3405
    %v3790 = vmul.f32 %v3407, %v3407
    %v3791 = vmul.f32 %v3631, %v3631
    %v3792 = vmul.f32 %v3633, %v3633
    %v3793 = vmul.f32 %v3411, %v3411
    %v3794 = vmul.f32 %v3413, %v3413
    %v3795 = vmul.f32 %v3637, %v3637
    %v3796 = vmul.f32 %v3639, %v3639
    %v3797 = vmul.f32 %v3415, %v3415
    %v3798 = vmul.f32 %v3417, %v3417
    %v3799 = vmul.f32 %v3641, %v3641
    %v3800 = vmul.f32 %v3643, %v3643
    %v3801 = vmul.f32 %v3421, %v3421
    %v3802 = vmul.f32 %v3423, %v3423
    %v3803 = vmul.f32 %v3647, %v3647
    %v3804 = vmul.f32 %v3649, %v3649
    %v3805 = vmul.f32 %v3425, %v3425
    %v3806 = vmul.f32 %v3427, %v3427
    %v3807 = vmul.f32 %v3651, %v3651
    %v3808 = vmul.f32 %v3653, %v3653
    %v3809 = vadd.f32 %v3745, %v3749
    %v3810 = vadd.f32 %v3809, %v3753
    %v3811 = vadd.f32 %v3810, %v3757
    %v3812 = vadd.f32 %v3811, %v3761
    %v3813 = vadd.f32 %v3812, %v3765
    %v3814 = vadd.f32 %v3813, %v3769
    %v3815 = vadd.f32 %v3814, %v3773
    %v3816 = vadd.f32 %v3815, %v3777
    %v3817 = vadd.f32 %v3816, %v3781
    %v3818 = vadd.f32 %v3817, %v3785
    %v3819 = vadd.f32 %v3818, %v3789
    %v3820 = vadd.f32 %v3819, %v3793
    %v3821 = vadd.f32 %v3820, %v3797
    %v3822 = vadd.f32 %v3821, %v3801
    %v3823 = vadd.f32 %v3822, %v3805
    %v3824 = vrot.slane %v3823, 4
    %v3825 = vadd.f32 %v3823, %v3824
    %v3826 = vrot.slane %v3825, 2
    %v3827 = vadd.f32 %v3825, %v3826
    %v3828 = vrot.slane %v3827, 1
    %v3829 = vadd.f32 %v3827, %v3828
    %v3830 = vadd.f32 %v3746, %v3750
    %v3831 = vadd.f32 %v3830, %v3754
    %v3832 = vadd.f32 %v3831, %v3758
    %v3833 = vadd.f32 %v3832, %v3762
    %v3834 = vadd.f32 %v3833, %v3766
    %v3835 = vadd.f32 %v3834, %v3770
    %v3836 = vadd.f32 %v3835, %v3774
    %v3837 = vadd.f32 %v3836, %v3778
    %v3838 = vadd.f32 %v3837, %v3782
    %v3839 = vadd.f32 %v3838, %v3786
    %v3840 = vadd.f32 %v3839, %v3790
    %v3841 = vadd.f32 %v3840, %v3794
    %v3842 = vadd.f32 %v3841, %v3798
    %v3843 = vadd.f32 %v3842, %v3802
    %v3844 = vadd.f32 %v3843, %v3806
    %v3845 = vrot.slane %v3844, 4
    %v3846 = vadd.f32 %v3844, %v3845
    %v3847 = vrot.slane %v3846, 2
    %v3848 = vadd.f32 %v3846, %v3847
    %v3849 = vrot.slane %v3848, 1
    %v3850 = vadd.f32 %v3848, %v3849
    %v3851 = vadd.f32 %v3747, %v3751
    %v3852 = vadd.f32 %v3851, %v3755
    %v3853 = vadd.f32 %v3852, %v3759
    %v3854 = vadd.f32 %v3853, %v3763
    %v3855 = vadd.f32 %v3854, %v3767
    %v3856 = vadd.f32 %v3855, %v3771
    %v3857 = vadd.f32 %v3856, %v3775
    %v3858 = vadd.f32 %v3857, %v3779
    %v3859 = vadd.f32 %v3858, %v3783
    %v3860 = vadd.f32 %v3859, %v3787
    %v3861 = vadd.f32 %v3860, %v3791
    %v3862 = vadd.f32 %v3861, %v3795
    %v3863 = vadd.f32 %v3862, %v3799
    %v3864 = vadd.f32 %v3863, %v3803
    %v3865 = vadd.f32 %v3864, %v3807
    %v3866 = vrot.slane %v3865, 4
    %v3867 = vadd.f32 %v3865, %v3866
    %v3868 = vrot.slane %v3867, 2
    %v3869 = vadd.f32 %v3867, %v3868
    %v3870 = vrot.slane %v3869, 1
    %v3871 = vadd.f32 %v3869, %v3870
    %v3872 = vadd.f32 %v3748, %v3752
    %v3873 = vadd.f32 %v3872, %v3756
    %v3874 = vadd.f32 %v3873, %v3760
    %v3875 = vadd.f32 %v3874, %v3764
    %v3876 = vadd.f32 %v3875, %v3768
    %v3877 = vadd.f32 %v3876, %v3772
    %v3878 = vadd.f32 %v3877, %v3776
    %v3879 = vadd.f32 %v3878, %v3780
    %v3880 = vadd.f32 %v3879, %v3784
    %v3881 = vadd.f32 %v3880, %v3788
    %v3882 = vadd.f32 %v3881, %v3792
    %v3883 = vadd.f32 %v3882, %v3796
    %v3884 = vadd.f32 %v3883, %v3800
    %v3885 = vadd.f32 %v3884, %v3804
    %v3886 = vadd.f32 %v3885, %v3808
    %v3887 = vrot.slane %v3886, 4
    %v3888 = vadd.f32 %v3886, %v3887
    %v3889 = vrot.slane %v3888, 2
    %v3890 = vadd.f32 %v3888, %v3889
    %v3891 = vrot.slane %v3890, 1
    %v3892 = vadd.f32 %v3890, %v3891
    %v3893 = vmul.f32 %v3829, %v1074
    %v3894 = vmul.f32 %v3850, %v1074
    %v3895 = vmul.f32 %v3871, %v1074
    %v3896 = vmul.f32 %v3892, %v1074
    %v3897 = vmul.f32 %v3741, %v3741
    %v3898 = vmul.f32 %v3742, %v3742
    %v3899 = vmul.f32 %v3743, %v3743
    %v3900 = vmul.f32 %v3744, %v3744
    %v3901 = vsub.f32 %v3893, %v3897
    %v3902 = vsub.f32 %v3894, %v3898
    %v3903 = vsub.f32 %v3895, %v3899
    %v3904 = vsub.f32 %v3896, %v3900
    %v3905 = vadd.f32 %v3901, 1e-05
    %v3906 = vadd.f32 %v3902, 1e-05
    %v3907 = vadd.f32 %v3903, 1e-05
    %v3908 = vadd.f32 %v3904, 1e-05
    %v3909 = vrsqrt.pop %v3905
    %v3910 = vrsqrt.pop %v3906
    %v3911 = vrsqrt.pop %v3907
    %v3912 = vrsqrt.pop %v3908
    %v3917 = vcombine.low %v3909, %v3910
    %v3918 = vcombine.low %v3911, %v3912
    %v3920 = vunpack.c.l.s4 1966171168
    %v3921 = vunpack.c.0.s8 %v3920
    %v3922 = vlaneseq
    %v3923 = vshrl.u32 %v3922, 7
    %v3924 = vsub.s32 %v3921, %v3923
    %v3925 = vrot.slane %v3917, %v3924
    %v3927 = vunpack.c.l.s4 1966171168
    %v3928 = vunpack.c.0.s8 %v3927
    %v3929 = vlaneseq
    %v3930 = vshrl.u32 %v3929, 7
    %v3931 = vsub.s32 %v3928, %v3930
    %v3932 = vrot.slane %v3918, %v3931
    %v3933 = vcombine.low %v3925, %v3932
    %v3935 = vunpack.c.l.s4 1966171168
    %v3936 = vunpack.c.0.s8 %v3935
    %v3937 = vlaneseq
    %v3938 = vshrl.u32 %v3937, 7
    %v3939 = vsub.s32 %v3936, %v3938
    %v3940 = vrot.slane %v3933, %v3939
    %v3942 = vmul.f32 %v3655, %v3940
    %v3944 = vlaneseq
    %v3945 = vshrl.u32 %v3944, 7
    %v3946 = vsub.s32 0, %v3945
    %v3947 = vrot.slane %v3942, %v3946
    %v3948 = vlaneseq
    %v3949 = vshrl.u32 %v3948, 7
    %v3950 = vsub.s32 1, %v3949
    %v3951 = vrot.slane %v3942, %v3950
    %v3952 = vlaneseq
    %v3953 = vshrl.u32 %v3952, 7
    %v3954 = vsub.s32 2, %v3953
    %v3955 = vrot.slane %v3942, %v3954
    %v3956 = vlaneseq
    %v3957 = vshrl.u32 %v3956, 7
    %v3958 = vsub.s32 3, %v3957
    %v3959 = vrot.slane %v3942, %v3958
    %v3964 = vmul.f32 %v3741, %v3947
    %v3965 = vmul.f32 %v3742, %v3951
    %v3966 = vmul.f32 %v3743, %v3955
    %v3967 = vmul.f32 %v3744, %v3959
    %v3972 = vcombine.low %v3964, %v3965
    %v3973 = vcombine.low %v3966, %v3967
    %v3975 = vunpack.c.l.s4 1966171168
    %v3976 = vunpack.c.0.s8 %v3975
    %v3977 = vlaneseq
    %v3978 = vshrl.u32 %v3977, 7
    %v3979 = vsub.s32 %v3976, %v3978
    %v3980 = vrot.slane %v3972, %v3979
    %v3982 = vunpack.c.l.s4 1966171168
    %v3983 = vunpack.c.0.s8 %v3982
    %v3984 = vlaneseq
    %v3985 = vshrl.u32 %v3984, 7
    %v3986 = vsub.s32 %v3983, %v3985
    %v3987 = vrot.slane %v3973, %v3986
    %v3988 = vcombine.low %v3980, %v3987
    %v3990 = vunpack.c.l.s4 1966171168
    %v3991 = vunpack.c.0.s8 %v3990
    %v3992 = vlaneseq
    %v3993 = vshrl.u32 %v3992, 7
    %v3994 = vsub.s32 %v3991, %v3993
    %v3995 = vrot.slane %v3988, %v3994
    %v3997 = vsub.f32 %v3656, %v3995
    %v3998 = vmul.f32 %v3351, %v3947
    %v3999 = vmul.f32 %v3353, %v3951
    %v4000 = vmul.f32 %v3577, %v3955
    %v4001 = vmul.f32 %v3579, %v3959
    %v4002 = vmul.f32 %v3355, %v3947
    %v4003 = vmul.f32 %v3357, %v3951
    %v4004 = vmul.f32 %v3581, %v3955
    %v4005 = vmul.f32 %v3583, %v3959
    %v4006 = vmul.f32 %v3361, %v3947
    %v4007 = vmul.f32 %v3363, %v3951
    %v4008 = vmul.f32 %v3587, %v3955
    %v4009 = vmul.f32 %v3589, %v3959
    %v4010 = vmul.f32 %v3365, %v3947
    %v4011 = vmul.f32 %v3367, %v3951
    %v4012 = vmul.f32 %v3591, %v3955
    %v4013 = vmul.f32 %v3593, %v3959
    %v4014 = vmul.f32 %v3371, %v3947
    %v4015 = vmul.f32 %v3373, %v3951
    %v4016 = vmul.f32 %v3597, %v3955
    %v4017 = vmul.f32 %v3599, %v3959
    %v4018 = vmul.f32 %v3375, %v3947
    %v4019 = vmul.f32 %v3377, %v3951
    %v4020 = vmul.f32 %v3601, %v3955
    %v4021 = vmul.f32 %v3603, %v3959
    %v4022 = vmul.f32 %v3381, %v3947
    %v4023 = vmul.f32 %v3383, %v3951
    %v4024 = vmul.f32 %v3607, %v3955
    %v4025 = vmul.f32 %v3609, %v3959
    %v4026 = vmul.f32 %v3385, %v3947
    %v4027 = vmul.f32 %v3387, %v3951
    %v4028 = vmul.f32 %v3611, %v3955
    %v4029 = vmul.f32 %v3613, %v3959
    %v4030 = vmul.f32 %v3391, %v3947
    %v4031 = vmul.f32 %v3393, %v3951
    %v4032 = vmul.f32 %v3617, %v3955
    %v4033 = vmul.f32 %v3619, %v3959
    %v4034 = vmul.f32 %v3395, %v3947
    %v4035 = vmul.f32 %v3397, %v3951
    %v4036 = vmul.f32 %v3621, %v3955
    %v4037 = vmul.f32 %v3623, %v3959
    %v4038 = vmul.f32 %v3401, %v3947
    %v4039 = vmul.f32 %v3403, %v3951
    %v4040 = vmul.f32 %v3627, %v3955
    %v4041 = vmul.f32 %v3629, %v3959
    %v4042 = vmul.f32 %v3405, %v3947
    %v4043 = vmul.f32 %v3407, %v3951
    %v4044 = vmul.f32 %v3631, %v3955
    %v4045 = vmul.f32 %v3633, %v3959
    %v4046 = vmul.f32 %v3411, %v3947
    %v4047 = vmul.f32 %v3413, %v3951
    %v4048 = vmul.f32 %v3637, %v3955
    %v4049 = vmul.f32 %v3639, %v3959
    %v4050 = vmul.f32 %v3415, %v3947
    %v4051 = vmul.f32 %v3417, %v3951
    %v4052 = vmul.f32 %v3641, %v3955
    %v4053 = vmul.f32 %v3643, %v3959
    %v4054 = vmul.f32 %v3421, %v3947
    %v4055 = vmul.f32 %v3423, %v3951
    %v4056 = vmul.f32 %v3647, %v3955
    %v4057 = vmul.f32 %v3649, %v3959
    %v4058 = vmul.f32 %v3425, %v3947
    %v4059 = vmul.f32 %v3427, %v3951
    %v4060 = vmul.f32 %v3651, %v3955
    %v4061 = vmul.f32 %v3653, %v3959
    %v4063 = vlaneseq
    %v4064 = vshrl.u32 %v4063, 7
    %v4065 = vsub.s32 0, %v4064
    %v4066 = vrot.slane %v3997, %v4065
    %v4067 = vlaneseq
    %v4068 = vshrl.u32 %v4067, 7
    %v4069 = vsub.s32 1, %v4068
    %v4070 = vrot.slane %v3997, %v4069
    %v4071 = vlaneseq
    %v4072 = vshrl.u32 %v4071, 7
    %v4073 = vsub.s32 2, %v4072
    %v4074 = vrot.slane %v3997, %v4073
    %v4075 = vlaneseq
    %v4076 = vshrl.u32 %v4075, 7
    %v4077 = vsub.s32 3, %v4076
    %v4078 = vrot.slane %v3997, %v4077
    %v4083 = vadd.f32 %v3998, %v4066
    %v4084 = vadd.f32 %v3999, %v4070
    %v4085 = vadd.f32 %v4000, %v4074
    %v4086 = vadd.f32 %v4001, %v4078
    %v4087 = vadd.f32 %v4002, %v4066
    %v4088 = vadd.f32 %v4003, %v4070
    %v4089 = vadd.f32 %v4004, %v4074
    %v4090 = vadd.f32 %v4005, %v4078
    %v4091 = vadd.f32 %v4006, %v4066
    %v4092 = vadd.f32 %v4007, %v4070
    %v4093 = vadd.f32 %v4008, %v4074
    %v4094 = vadd.f32 %v4009, %v4078
    %v4095 = vadd.f32 %v4010, %v4066
    %v4096 = vadd.f32 %v4011, %v4070
    %v4097 = vadd.f32 %v4012, %v4074
    %v4098 = vadd.f32 %v4013, %v4078
    %v4099 = vadd.f32 %v4014, %v4066
    %v4100 = vadd.f32 %v4015, %v4070
    %v4101 = vadd.f32 %v4016, %v4074
    %v4102 = vadd.f32 %v4017, %v4078
    %v4103 = vadd.f32 %v4018, %v4066
    %v4104 = vadd.f32 %v4019, %v4070
    %v4105 = vadd.f32 %v4020, %v4074
    %v4106 = vadd.f32 %v4021, %v4078
    %v4107 = vadd.f32 %v4022, %v4066
    %v4108 = vadd.f32 %v4023, %v4070
    %v4109 = vadd.f32 %v4024, %v4074
    %v4110 = vadd.f32 %v4025, %v4078
    %v4111 = vadd.f32 %v4026, %v4066
    %v4112 = vadd.f32 %v4027, %v4070
    %v4113 = vadd.f32 %v4028, %v4074
    %v4114 = vadd.f32 %v4029, %v4078
    %v4115 = vadd.f32 %v4030, %v4066
    %v4116 = vadd.f32 %v4031, %v4070
    %v4117 = vadd.f32 %v4032, %v4074
    %v4118 = vadd.f32 %v4033, %v4078
    %v4119 = vadd.f32 %v4034, %v4066
    %v4120 = vadd.f32 %v4035, %v4070
    %v4121 = vadd.f32 %v4036, %v4074
    %v4122 = vadd.f32 %v4037, %v4078
    %v4123 = vadd.f32 %v4038, %v4066
    %v4124 = vadd.f32 %v4039, %v4070
    %v4125 = vadd.f32 %v4040, %v4074
    %v4126 = vadd.f32 %v4041, %v4078
    %v4127 = vadd.f32 %v4042, %v4066
    %v4128 = vadd.f32 %v4043, %v4070
    %v4129 = vadd.f32 %v4044, %v4074
    %v4130 = vadd.f32 %v4045, %v4078
    %v4131 = vadd.f32 %v4046, %v4066
    %v4132 = vadd.f32 %v4047, %v4070
    %v4133 = vadd.f32 %v4048, %v4074
    %v4134 = vadd.f32 %v4049, %v4078
    %v4135 = vadd.f32 %v4050, %v4066
    %v4136 = vadd.f32 %v4051, %v4070
    %v4137 = vadd.f32 %v4052, %v4074
    %v4138 = vadd.f32 %v4053, %v4078
    %v4139 = vadd.f32 %v4054, %v4066
    %v4140 = vadd.f32 %v4055, %v4070
    %v4141 = vadd.f32 %v4056, %v4074
    %v4142 = vadd.f32 %v4057, %v4078
    %v4143 = vadd.f32 %v4058, %v4066
    %v4144 = vadd.f32 %v4059, %v4070
    %v4145 = vadd.f32 %v4060, %v4074
    %v4146 = vadd.f32 %v4061, %v4078
    %vm4147 = vcmp.gt.f32.partialorder %v4083, 0.0
    %vm4148 = vcmp.gt.f32.partialorder %v4084, 0.0
    %vm4149 = vcmp.gt.f32.partialorder %v4085, 0.0
    %vm4150 = vcmp.gt.f32.partialorder %v4086, 0.0
    %vm4151 = vcmp.gt.f32.partialorder %v4087, 0.0
    %vm4152 = vcmp.gt.f32.partialorder %v4088, 0.0
    %vm4153 = vcmp.gt.f32.partialorder %v4089, 0.0
    %vm4154 = vcmp.gt.f32.partialorder %v4090, 0.0
    %vm4155 = vcmp.gt.f32.partialorder %v4091, 0.0
    %vm4156 = vcmp.gt.f32.partialorder %v4092, 0.0
    %vm4157 = vcmp.gt.f32.partialorder %v4093, 0.0
    %vm4158 = vcmp.gt.f32.partialorder %v4094, 0.0
    %vm4159 = vcmp.gt.f32.partialorder %v4095, 0.0
    %vm4160 = vcmp.gt.f32.partialorder %v4096, 0.0
    %vm4161 = vcmp.gt.f32.partialorder %v4097, 0.0
    %vm4162 = vcmp.gt.f32.partialorder %v4098, 0.0
    %vm4163 = vcmp.gt.f32.partialorder %v4099, 0.0
    %vm4164 = vcmp.gt.f32.partialorder %v4100, 0.0
    %vm4165 = vcmp.gt.f32.partialorder %v4101, 0.0
    %vm4166 = vcmp.gt.f32.partialorder %v4102, 0.0
    %vm4167 = vcmp.gt.f32.partialorder %v4103, 0.0
    %vm4168 = vcmp.gt.f32.partialorder %v4104, 0.0
    %vm4169 = vcmp.gt.f32.partialorder %v4105, 0.0
    %vm4170 = vcmp.gt.f32.partialorder %v4106, 0.0
    %vm4171 = vcmp.gt.f32.partialorder %v4107, 0.0
    %vm4172 = vcmp.gt.f32.partialorder %v4108, 0.0
    %vm4173 = vcmp.gt.f32.partialorder %v4109, 0.0
    %vm4174 = vcmp.gt.f32.partialorder %v4110, 0.0
    %vm4175 = vcmp.gt.f32.partialorder %v4111, 0.0
    %vm4176 = vcmp.gt.f32.partialorder %v4112, 0.0
    %vm4177 = vcmp.gt.f32.partialorder %v4113, 0.0
    %vm4178 = vcmp.gt.f32.partialorder %v4114, 0.0
    %vm4179 = vcmp.gt.f32.partialorder %v4115, 0.0
    %vm4180 = vcmp.gt.f32.partialorder %v4116, 0.0
    %vm4181 = vcmp.gt.f32.partialorder %v4117, 0.0
    %vm4182 = vcmp.gt.f32.partialorder %v4118, 0.0
    %vm4183 = vcmp.gt.f32.partialorder %v4119, 0.0
    %vm4184 = vcmp.gt.f32.partialorder %v4120, 0.0
    %vm4185 = vcmp.gt.f32.partialorder %v4121, 0.0
    %vm4186 = vcmp.gt.f32.partialorder %v4122, 0.0
    %vm4187 = vcmp.gt.f32.partialorder %v4123, 0.0
    %vm4188 = vcmp.gt.f32.partialorder %v4124, 0.0
    %vm4189 = vcmp.gt.f32.partialorder %v4125, 0.0
    %vm4190 = vcmp.gt.f32.partialorder %v4126, 0.0
    %vm4191 = vcmp.gt.f32.partialorder %v4127, 0.0
    %vm4192 = vcmp.gt.f32.partialorder %v4128, 0.0
    %vm4193 = vcmp.gt.f32.partialorder %v4129, 0.0
    %vm4194 = vcmp.gt.f32.partialorder %v4130, 0.0
    %vm4195 = vcmp.gt.f32.partialorder %v4131, 0.0
    %vm4196 = vcmp.gt.f32.partialorder %v4132, 0.0
    %vm4197 = vcmp.gt.f32.partialorder %v4133, 0.0
    %vm4198 = vcmp.gt.f32.partialorder %v4134, 0.0
    %vm4199 = vcmp.gt.f32.partialorder %v4135, 0.0
    %vm4200 = vcmp.gt.f32.partialorder %v4136, 0.0
    %vm4201 = vcmp.gt.f32.partialorder %v4137, 0.0
    %vm4202 = vcmp.gt.f32.partialorder %v4138, 0.0
    %vm4203 = vcmp.gt.f32.partialorder %v4139, 0.0
    %vm4204 = vcmp.gt.f32.partialorder %v4140, 0.0
    %vm4205 = vcmp.gt.f32.partialorder %v4141, 0.0
    %vm4206 = vcmp.gt.f32.partialorder %v4142, 0.0
    %vm4207 = vcmp.gt.f32.partialorder %v4143, 0.0
    %vm4208 = vcmp.gt.f32.partialorder %v4144, 0.0
    %vm4209 = vcmp.gt.f32.partialorder %v4145, 0.0
    %vm4210 = vcmp.gt.f32.partialorder %v4146, 0.0
    %v4211 = vmul.f32 %v4083, 0.2
    %v4212 = vmul.f32 %v4084, 0.2
    %v4213 = vmul.f32 %v4085, 0.2
    %v4214 = vmul.f32 %v4086, 0.2
    %v4215 = vmul.f32 %v4087, 0.2
    %v4216 = vmul.f32 %v4088, 0.2
    %v4217 = vmul.f32 %v4089, 0.2
    %v4218 = vmul.f32 %v4090, 0.2
    %v4219 = vmul.f32 %v4091, 0.2
    %v4220 = vmul.f32 %v4092, 0.2
    %v4221 = vmul.f32 %v4093, 0.2
    %v4222 = vmul.f32 %v4094, 0.2
    %v4223 = vmul.f32 %v4095, 0.2
    %v4224 = vmul.f32 %v4096, 0.2
    %v4225 = vmul.f32 %v4097, 0.2
    %v4226 = vmul.f32 %v4098, 0.2
    %v4227 = vmul.f32 %v4099, 0.2
    %v4228 = vmul.f32 %v4100, 0.2
    %v4229 = vmul.f32 %v4101, 0.2
    %v4230 = vmul.f32 %v4102, 0.2
    %v4231 = vmul.f32 %v4103, 0.2
    %v4232 = vmul.f32 %v4104, 0.2
    %v4233 = vmul.f32 %v4105, 0.2
    %v4234 = vmul.f32 %v4106, 0.2
    %v4235 = vmul.f32 %v4107, 0.2
    %v4236 = vmul.f32 %v4108, 0.2
    %v4237 = vmul.f32 %v4109, 0.2
    %v4238 = vmul.f32 %v4110, 0.2
    %v4239 = vmul.f32 %v4111, 0.2
    %v4240 = vmul.f32 %v4112, 0.2
    %v4241 = vmul.f32 %v4113, 0.2
    %v4242 = vmul.f32 %v4114, 0.2
    %v4243 = vmul.f32 %v4115, 0.2
    %v4244 = vmul.f32 %v4116, 0.2
    %v4245 = vmul.f32 %v4117, 0.2
    %v4246 = vmul.f32 %v4118, 0.2
    %v4247 = vmul.f32 %v4119, 0.2
    %v4248 = vmul.f32 %v4120, 0.2
    %v4249 = vmul.f32 %v4121, 0.2
    %v4250 = vmul.f32 %v4122, 0.2
    %v4251 = vmul.f32 %v4123, 0.2
    %v4252 = vmul.f32 %v4124, 0.2
    %v4253 = vmul.f32 %v4125, 0.2
    %v4254 = vmul.f32 %v4126, 0.2
    %v4255 = vmul.f32 %v4127, 0.2
    %v4256 = vmul.f32 %v4128, 0.2
    %v4257 = vmul.f32 %v4129, 0.2
    %v4258 = vmul.f32 %v4130, 0.2
    %v4259 = vmul.f32 %v4131, 0.2
    %v4260 = vmul.f32 %v4132, 0.2
    %v4261 = vmul.f32 %v4133, 0.2
    %v4262 = vmul.f32 %v4134, 0.2
    %v4263 = vmul.f32 %v4135, 0.2
    %v4264 = vmul.f32 %v4136, 0.2
    %v4265 = vmul.f32 %v4137, 0.2
    %v4266 = vmul.f32 %v4138, 0.2
    %v4267 = vmul.f32 %v4139, 0.2
    %v4268 = vmul.f32 %v4140, 0.2
    %v4269 = vmul.f32 %v4141, 0.2
    %v4270 = vmul.f32 %v4142, 0.2
    %v4271 = vmul.f32 %v4143, 0.2
    %v4272 = vmul.f32 %v4144, 0.2
    %v4273 = vmul.f32 %v4145, 0.2
    %v4274 = vmul.f32 %v4146, 0.2
    %v4275 = vsel %vm4147, %v4083, %v4211
    %v4276 = vsel %vm4148, %v4084, %v4212
    %v4277 = vsel %vm4149, %v4085, %v4213
    %v4278 = vsel %vm4150, %v4086, %v4214
    %v4279 = vsel %vm4151, %v4087, %v4215
    %v4280 = vsel %vm4152, %v4088, %v4216
    %v4281 = vsel %vm4153, %v4089, %v4217
    %v4282 = vsel %vm4154, %v4090, %v4218
    %v4283 = vsel %vm4155, %v4091, %v4219
    %v4284 = vsel %vm4156, %v4092, %v4220
    %v4285 = vsel %vm4157, %v4093, %v4221
    %v4286 = vsel %vm4158, %v4094, %v4222
    %v4287 = vsel %vm4159, %v4095, %v4223
    %v4288 = vsel %vm4160, %v4096, %v4224
    %v4289 = vsel %vm4161, %v4097, %v4225
    %v4290 = vsel %vm4162, %v4098, %v4226
    %v4291 = vsel %vm4163, %v4099, %v4227
    %v4292 = vsel %vm4164, %v4100, %v4228
    %v4293 = vsel %vm4165, %v4101, %v4229
    %v4294 = vsel %vm4166, %v4102, %v4230
    %v4295 = vsel %vm4167, %v4103, %v4231
    %v4296 = vsel %vm4168, %v4104, %v4232
    %v4297 = vsel %vm4169, %v4105, %v4233
    %v4298 = vsel %vm4170, %v4106, %v4234
    %v4299 = vsel %vm4171, %v4107, %v4235
    %v4300 = vsel %vm4172, %v4108, %v4236
    %v4301 = vsel %vm4173, %v4109, %v4237
    %v4302 = vsel %vm4174, %v4110, %v4238
    %v4303 = vsel %vm4175, %v4111, %v4239
    %v4304 = vsel %vm4176, %v4112, %v4240
    %v4305 = vsel %vm4177, %v4113, %v4241
    %v4306 = vsel %vm4178, %v4114, %v4242
    %v4307 = vsel %vm4179, %v4115, %v4243
    %v4308 = vsel %vm4180, %v4116, %v4244
    %v4309 = vsel %vm4181, %v4117, %v4245
    %v4310 = vsel %vm4182, %v4118, %v4246
    %v4311 = vsel %vm4183, %v4119, %v4247
    %v4312 = vsel %vm4184, %v4120, %v4248
    %v4313 = vsel %vm4185, %v4121, %v4249
    %v4314 = vsel %vm4186, %v4122, %v4250
    %v4315 = vsel %vm4187, %v4123, %v4251
    %v4316 = vsel %vm4188, %v4124, %v4252
    %v4317 = vsel %vm4189, %v4125, %v4253
    %v4318 = vsel %vm4190, %v4126, %v4254
    %v4319 = vsel %vm4191, %v4127, %v4255
    %v4320 = vsel %vm4192, %v4128, %v4256
    %v4321 = vsel %vm4193, %v4129, %v4257
    %v4322 = vsel %vm4194, %v4130, %v4258
    %v4323 = vsel %vm4195, %v4131, %v4259
    %v4324 = vsel %vm4196, %v4132, %v4260
    %v4325 = vsel %vm4197, %v4133, %v4261
    %v4326 = vsel %vm4198, %v4134, %v4262
    %v4327 = vsel %vm4199, %v4135, %v4263
    %v4328 = vsel %vm4200, %v4136, %v4264
    %v4329 = vsel %vm4201, %v4137, %v4265
    %v4330 = vsel %vm4202, %v4138, %v4266
    %v4331 = vsel %vm4203, %v4139, %v4267
    %v4332 = vsel %vm4204, %v4140, %v4268
    %v4333 = vsel %vm4205, %v4141, %v4269
    %v4334 = vsel %vm4206, %v4142, %v4270
    %v4335 = vsel %vm4207, %v4143, %v4271
    %v4336 = vsel %vm4208, %v4144, %v4272
    %v4337 = vsel %vm4209, %v4145, %v4273
    %v4338 = vsel %vm4210, %v4146, %v4274
    %s4339 = sshll.u32 %s208, 4
    %4340 = dma.done %s213, %s4339
    %v4341 = vpack.c.bf16 %v4279, %v4275
    %v4342 = vpack.c.bf16 %v4280, %v4276
    %v4343 = vpack.c.bf16 %v4281, %v4277
    %v4344 = vpack.c.bf16 %v4282, %v4278
    %v4345 = vpack.c.bf16 %v4287, %v4283
    %v4346 = vpack.c.bf16 %v4288, %v4284
    %v4347 = vpack.c.bf16 %v4289, %v4285
    %v4348 = vpack.c.bf16 %v4290, %v4286
    %v4349 = vpack.c.bf16 %v4295, %v4291
    %v4350 = vpack.c.bf16 %v4296, %v4292
    %v4351 = vpack.c.bf16 %v4297, %v4293
    %v4352 = vpack.c.bf16 %v4298, %v4294
    %v4353 = vpack.c.bf16 %v4303, %v4299
    %v4354 = vpack.c.bf16 %v4304, %v4300
    %v4355 = vpack.c.bf16 %v4305, %v4301
    %v4356 = vpack.c.bf16 %v4306, %v4302
    %v4357 = vpack.c.bf16 %v4311, %v4307
    %v4358 = vpack.c.bf16 %v4312, %v4308
    %v4359 = vpack.c.bf16 %v4313, %v4309
    %v4360 = vpack.c.bf16 %v4314, %v4310
    %v4361 = vpack.c.bf16 %v4319, %v4315
    %v4362 = vpack.c.bf16 %v4320, %v4316
    %v4363 = vpack.c.bf16 %v4321, %v4317
    %v4364 = vpack.c.bf16 %v4322, %v4318
    %v4365 = vpack.c.bf16 %v4327, %v4323
    %v4366 = vpack.c.bf16 %v4328, %v4324
    %v4367 = vpack.c.bf16 %v4329, %v4325
    %v4368 = vpack.c.bf16 %v4330, %v4326
    %v4369 = vpack.c.bf16 %v4335, %v4331
    %v4370 = vpack.c.bf16 %v4336, %v4332
    %v4371 = vpack.c.bf16 %v4337, %v4333
    %v4372 = vpack.c.bf16 %v4338, %v4334
    %v4373 = vld [vmem:[%s212] sm:$0xff]
    %v4374 = vld [vmem:[%s212 + $0x8] sm:$0xff]
    %v4375 = vld [vmem:[%s212 + $0x10] sm:$0xff]
    %v4376 = vld [vmem:[%s212 + $0x18] sm:$0xff]
    %v4377 = vld [vmem:[%s212 + $0x20] sm:$0xff]
    %v4378 = vld [vmem:[%s212 + $0x28] sm:$0xff]
    %v4379 = vld [vmem:[%s212 + $0x30] sm:$0xff]
    %v4380 = vld [vmem:[%s212 + $0x38] sm:$0xff]
    %v4381 = vld [vmem:[%s212 + $0x40] sm:$0xff]
    %v4382 = vld [vmem:[%s212 + $0x48] sm:$0xff]
    %v4383 = vld [vmem:[%s212 + $0x50] sm:$0xff]
    %v4384 = vld [vmem:[%s212 + $0x58] sm:$0xff]
    %v4385 = vld [vmem:[%s212 + $0x60] sm:$0xff]
    %v4386 = vld [vmem:[%s212 + $0x68] sm:$0xff]
    %v4387 = vld [vmem:[%s212 + $0x70] sm:$0xff]
    %v4388 = vld [vmem:[%s212 + $0x78] sm:$0xff]
    %v4389 = vld [vmem:[%s212 + $0x80] sm:$0xff]
    %v4390 = vld [vmem:[%s212 + $0x88] sm:$0xff]
    %v4391 = vld [vmem:[%s212 + $0x90] sm:$0xff]
    %v4392 = vld [vmem:[%s212 + $0x98] sm:$0xff]
    %v4393 = vld [vmem:[%s212 + $0xa0] sm:$0xff]
    %v4394 = vld [vmem:[%s212 + $0xa8] sm:$0xff]
    %v4395 = vld [vmem:[%s212 + $0xb0] sm:$0xff]
    %v4396 = vld [vmem:[%s212 + $0xb8] sm:$0xff]
    %v4397 = vld [vmem:[%s212 + $0xc0] sm:$0xff]
    %v4398 = vld [vmem:[%s212 + $0xc8] sm:$0xff]
    %v4399 = vld [vmem:[%s212 + $0xd0] sm:$0xff]
    %v4400 = vld [vmem:[%s212 + $0xd8] sm:$0xff]
    %v4401 = vld [vmem:[%s212 + $0xe0] sm:$0xff]
    %v4402 = vld [vmem:[%s212 + $0xe8] sm:$0xff]
    %v4403 = vld [vmem:[%s212 + $0xf0] sm:$0xff]
    %v4404 = vld [vmem:[%s212 + $0xf8] sm:$0xff]
    %v4405 = vld [vmem:[%s212 + $0x100] sm:$0xff]
    %v4406 = vld [vmem:[%s212 + $0x108] sm:$0xff]
    %v4407 = vld [vmem:[%s212 + $0x110] sm:$0xff]
    %v4408 = vld [vmem:[%s212 + $0x118] sm:$0xff]
    %v4409 = vld [vmem:[%s212 + $0x120] sm:$0xff]
    %v4410 = vld [vmem:[%s212 + $0x128] sm:$0xff]
    %v4411 = vld [vmem:[%s212 + $0x130] sm:$0xff]
    %v4412 = vld [vmem:[%s212 + $0x138] sm:$0xff]
    %v4413 = vld [vmem:[%s212 + $0x140] sm:$0xff]
    %v4414 = vld [vmem:[%s212 + $0x148] sm:$0xff]
    %v4415 = vld [vmem:[%s212 + $0x150] sm:$0xff]
    %v4416 = vld [vmem:[%s212 + $0x158] sm:$0xff]
    %v4417 = vld [vmem:[%s212 + $0x160] sm:$0xff]
    %v4418 = vld [vmem:[%s212 + $0x168] sm:$0xff]
    %v4419 = vld [vmem:[%s212 + $0x170] sm:$0xff]
    %v4420 = vld [vmem:[%s212 + $0x178] sm:$0xff]
    %v4421 = vld [vmem:[%s212 + $0x180] sm:$0xff]
    %v4422 = vld [vmem:[%s212 + $0x188] sm:$0xff]
    %v4423 = vld [vmem:[%s212 + $0x190] sm:$0xff]
    %v4424 = vld [vmem:[%s212 + $0x198] sm:$0xff]
    %v4425 = vld [vmem:[%s212 + $0x1a0] sm:$0xff]
    %v4426 = vld [vmem:[%s212 + $0x1a8] sm:$0xff]
    %v4427 = vld [vmem:[%s212 + $0x1b0] sm:$0xff]
    %v4428 = vld [vmem:[%s212 + $0x1b8] sm:$0xff]
    %v4429 = vld [vmem:[%s212 + $0x1c0] sm:$0xff]
    %v4430 = vld [vmem:[%s212 + $0x1c8] sm:$0xff]
    %v4431 = vld [vmem:[%s212 + $0x1d0] sm:$0xff]
    %v4432 = vld [vmem:[%s212 + $0x1d8] sm:$0xff]
    %v4433 = vld [vmem:[%s212 + $0x1e0] sm:$0xff]
    %v4434 = vld [vmem:[%s212 + $0x1e8] sm:$0xff]
    %v4435 = vld [vmem:[%s212 + $0x1f0] sm:$0xff]
    %v4436 = vld [vmem:[%s212 + $0x1f8] sm:$0xff]
    %v4437 = vld [vmem:[%s212 + $0x200] sm:$0xff]
    %v4438 = vld [vmem:[%s212 + $0x208] sm:$0xff]
    %v4439 = vld [vmem:[%s212 + $0x210] sm:$0xff]
    %v4440 = vld [vmem:[%s212 + $0x218] sm:$0xff]
    %v4441 = vld [vmem:[%s212 + $0x220] sm:$0xff]
    %v4442 = vld [vmem:[%s212 + $0x228] sm:$0xff]
    %v4443 = vld [vmem:[%s212 + $0x230] sm:$0xff]
    %v4444 = vld [vmem:[%s212 + $0x238] sm:$0xff]
    %v4445 = vld [vmem:[%s212 + $0x240] sm:$0xff]
    %v4446 = vld [vmem:[%s212 + $0x248] sm:$0xff]
    %v4447 = vld [vmem:[%s212 + $0x250] sm:$0xff]
    %v4448 = vld [vmem:[%s212 + $0x258] sm:$0xff]
    %v4449 = vld [vmem:[%s212 + $0x260] sm:$0xff]
    %v4450 = vld [vmem:[%s212 + $0x268] sm:$0xff]
    %v4451 = vld [vmem:[%s212 + $0x270] sm:$0xff]
    %v4452 = vld [vmem:[%s212 + $0x278] sm:$0xff]
    %v4453 = vld [vmem:[%s212 + $0x280] sm:$0xff]
    %v4454 = vld [vmem:[%s212 + $0x288] sm:$0xff]
    %v4455 = vld [vmem:[%s212 + $0x290] sm:$0xff]
    %v4456 = vld [vmem:[%s212 + $0x298] sm:$0xff]
    %v4457 = vld [vmem:[%s212 + $0x2a0] sm:$0xff]
    %v4458 = vld [vmem:[%s212 + $0x2a8] sm:$0xff]
    %v4459 = vld [vmem:[%s212 + $0x2b0] sm:$0xff]
    %v4460 = vld [vmem:[%s212 + $0x2b8] sm:$0xff]
    %v4461 = vld [vmem:[%s212 + $0x2c0] sm:$0xff]
    %v4462 = vld [vmem:[%s212 + $0x2c8] sm:$0xff]
    %v4463 = vld [vmem:[%s212 + $0x2d0] sm:$0xff]
    %v4464 = vld [vmem:[%s212 + $0x2d8] sm:$0xff]
    %v4465 = vld [vmem:[%s212 + $0x2e0] sm:$0xff]
    %v4466 = vld [vmem:[%s212 + $0x2e8] sm:$0xff]
    %v4467 = vld [vmem:[%s212 + $0x2f0] sm:$0xff]
    %v4468 = vld [vmem:[%s212 + $0x2f8] sm:$0xff]
    %v4469 = vld [vmem:[%s212 + $0x300] sm:$0xff]
    %v4470 = vld [vmem:[%s212 + $0x308] sm:$0xff]
    %v4471 = vld [vmem:[%s212 + $0x310] sm:$0xff]
    %v4472 = vld [vmem:[%s212 + $0x318] sm:$0xff]
    %v4473 = vld [vmem:[%s212 + $0x320] sm:$0xff]
    %v4474 = vld [vmem:[%s212 + $0x328] sm:$0xff]
    %v4475 = vld [vmem:[%s212 + $0x330] sm:$0xff]
    %v4476 = vld [vmem:[%s212 + $0x338] sm:$0xff]
    %v4477 = vld [vmem:[%s212 + $0x340] sm:$0xff]
    %v4478 = vld [vmem:[%s212 + $0x348] sm:$0xff]
    %v4479 = vld [vmem:[%s212 + $0x350] sm:$0xff]
    %v4480 = vld [vmem:[%s212 + $0x358] sm:$0xff]
    %v4481 = vld [vmem:[%s212 + $0x360] sm:$0xff]
    %v4482 = vld [vmem:[%s212 + $0x368] sm:$0xff]
    %v4483 = vld [vmem:[%s212 + $0x370] sm:$0xff]
    %v4484 = vld [vmem:[%s212 + $0x378] sm:$0xff]
    %v4485 = vld [vmem:[%s212 + $0x380] sm:$0xff]
    %v4486 = vld [vmem:[%s212 + $0x388] sm:$0xff]
    %v4487 = vld [vmem:[%s212 + $0x390] sm:$0xff]
    %v4488 = vld [vmem:[%s212 + $0x398] sm:$0xff]
    %v4489 = vld [vmem:[%s212 + $0x3a0] sm:$0xff]
    %v4490 = vld [vmem:[%s212 + $0x3a8] sm:$0xff]
    %v4491 = vld [vmem:[%s212 + $0x3b0] sm:$0xff]
    %v4492 = vld [vmem:[%s212 + $0x3b8] sm:$0xff]
    %v4493 = vld [vmem:[%s212 + $0x3c0] sm:$0xff]
    %v4494 = vld [vmem:[%s212 + $0x3c8] sm:$0xff]
    %v4495 = vld [vmem:[%s212 + $0x3d0] sm:$0xff]
    %v4496 = vld [vmem:[%s212 + $0x3d8] sm:$0xff]
    %v4497 = vld [vmem:[%s212 + $0x3e0] sm:$0xff]
    %v4498 = vld [vmem:[%s212 + $0x3e8] sm:$0xff]
    %v4499 = vld [vmem:[%s212 + $0x3f0] sm:$0xff]
    %v4500 = vld [vmem:[%s212 + $0x3f8] sm:$0xff]
    %4501 = vmatprep.subr.bf16.mxu0 %v4374
    %4502 = vmatpush1.bf16.msra.mxu0 %v4373
    %4503 = vmatprep.subr.bf16.mxu0 %v4378
    %4504 = vmatpush1.bf16.msra.mxu0 %v4377
    %4505 = vmatprep.subr.bf16.mxu0 %v4382
    %4506 = vmatpush1.bf16.msra.mxu0 %v4381
    %4507 = vmatprep.subr.bf16.mxu0 %v4386
    %4508 = vmatpush1.bf16.msra.mxu0 %v4385
    %4509 = vmatprep.subr.bf16.mxu0 %v4390
    %4510 = vmatpush1.bf16.msra.mxu0 %v4389
    %4511 = vmatprep.subr.bf16.mxu0 %v4394
    %4512 = vmatpush1.bf16.msra.mxu0 %v4393
    %4513 = vmatprep.subr.bf16.mxu0 %v4398
    %4514 = vmatpush1.bf16.msra.mxu0 %v4397
    %4515 = vmatprep.subr.bf16.mxu0 %v4402
    %4516 = vmatpush1.bf16.msra.mxu0 %v4401
    %4517 = vmatprep.subr.bf16.mxu0 %v4406
    %4518 = vmatpush1.bf16.msra.mxu0 %v4405
    %4519 = vmatprep.subr.bf16.mxu0 %v4410
    %4520 = vmatpush1.bf16.msra.mxu0 %v4409
    %4521 = vmatprep.subr.bf16.mxu0 %v4414
    %4522 = vmatpush1.bf16.msra.mxu0 %v4413
    %4523 = vmatprep.subr.bf16.mxu0 %v4418
    %4524 = vmatpush1.bf16.msra.mxu0 %v4417
    %4525 = vmatprep.subr.bf16.mxu0 %v4422
    %4526 = vmatpush1.bf16.msra.mxu0 %v4421
    %4527 = vmatprep.subr.bf16.mxu0 %v4426
    %4528 = vmatpush1.bf16.msra.mxu0 %v4425
    %4529 = vmatprep.subr.bf16.mxu0 %v4430
    %4530 = vmatpush1.bf16.msra.mxu0 %v4429
    %4531 = vmatprep.subr.bf16.mxu0 %v4434
    %4532 = vmatpush1.bf16.msra.mxu0 %v4433
    %4533 = vmatprep.mubr.bf16.mxu0 %v4342
    %4534 = vmatmul.mubr.bf16.gmra.mrb[0].mxu0 %v4341
    %v4535 = vpop.f32.mrb[0].mxu0
    %v4536 = vadd.f32 0.0, %v4535
    %v4537 = vpop.f32.mrb[0].mxu0
    %v4538 = vadd.f32 0.0, %v4537
    %v4539 = vpop.f32.mrb[0].mxu0
    %v4540 = vadd.f32 0.0, %v4539
    %v4541 = vpop.f32.mrb[0].mxu0
    %v4542 = vadd.f32 0.0, %v4541
    %4543 = vmatprep.mubr.bf16.mxu0 %v4346
    %4544 = vmatmul.mubr.bf16.gmra.mrb[0].mxu0 %v4345
    %v4545 = vpop.f32.mrb[0].mxu0
    %v4546 = vadd.f32 0.0, %v4545
    %v4547 = vpop.f32.mrb[0].mxu0
    %v4548 = vadd.f32 0.0, %v4547
    %v4549 = vpop.f32.mrb[0].mxu0
    %v4550 = vadd.f32 0.0, %v4549
    %v4551 = vpop.f32.mrb[0].mxu0
    %v4552 = vadd.f32 0.0, %v4551
    %4553 = vmatprep.mubr.bf16.mxu0 %v4350
    %4554 = vmatmul.mubr.bf16.gmra.mrb[0].mxu0 %v4349
    %v4555 = vpop.f32.mrb[0].mxu0
    %v4556 = vadd.f32 0.0, %v4555
    %v4557 = vpop.f32.mrb[0].mxu0
    %v4558 = vadd.f32 0.0, %v4557
    %v4559 = vpop.f32.mrb[0].mxu0
    %v4560 = vadd.f32 0.0, %v4559
    %v4561 = vpop.f32.mrb[0].mxu0
    %v4562 = vadd.f32 0.0, %v4561
    %4563 = vmatprep.mubr.bf16.mxu0 %v4354
    %4564 = vmatmul.mubr.bf16.gmra.mrb[0].mxu0 %v4353
    %v4565 = vpop.f32.mrb[0].mxu0
    %v4566 = vadd.f32 0.0, %v4565
    %v4567 = vpop.f32.mrb[0].mxu0
    %v4568 = vadd.f32 0.0, %v4567
    %v4569 = vpop.f32.mrb[0].mxu0
    %v4570 = vadd.f32 0.0, %v4569
    %v4571 = vpop.f32.mrb[0].mxu0
    %v4572 = vadd.f32 0.0, %v4571
    %4573 = vmatprep.mubr.bf16.mxu0 %v4358
    %4574 = vmatmul.mubr.bf16.gmra.mrb[0].mxu0 %v4357
    %v4575 = vpop.f32.mrb[0].mxu0
    %v4576 = vadd.f32 0.0, %v4575
    %v4577 = vpop.f32.mrb[0].mxu0
    %v4578 = vadd.f32 0.0, %v4577
    %v4579 = vpop.f32.mrb[0].mxu0
    %v4580 = vadd.f32 0.0, %v4579
    %v4581 = vpop.f32.mrb[0].mxu0
    %v4582 = vadd.f32 0.0, %v4581
    %4583 = vmatprep.mubr.bf16.mxu0 %v4362
    %4584 = vmatmul.mubr.bf16.gmra.mrb[0].mxu0 %v4361
    %v4585 = vpop.f32.mrb[0].mxu0
    %v4586 = vadd.f32 0.0, %v4585
    %v4587 = vpop.f32.mrb[0].mxu0
    %v4588 = vadd.f32 0.0, %v4587
    %v4589 = vpop.f32.mrb[0].mxu0
    %v4590 = vadd.f32 0.0, %v4589
    %v4591 = vpop.f32.mrb[0].mxu0
    %v4592 = vadd.f32 0.0, %v4591
    %4593 = vmatprep.mubr.bf16.mxu0 %v4366
    %4594 = vmatmul.mubr.bf16.gmra.mrb[0].mxu0 %v4365
    %v4595 = vpop.f32.mrb[0].mxu0
    %v4596 = vadd.f32 0.0, %v4595
    %v4597 = vpop.f32.mrb[0].mxu0
    %v4598 = vadd.f32 0.0, %v4597
    %v4599 = vpop.f32.mrb[0].mxu0
    %v4600 = vadd.f32 0.0, %v4599
    %v4601 = vpop.f32.mrb[0].mxu0
    %v4602 = vadd.f32 0.0, %v4601
    %4603 = vmatprep.mubr.bf16.mxu0 %v4370
    %4604 = vmatmul.mubr.bf16.gmra.mrb[0].mxu0 %v4369
    %v4605 = vpop.f32.mrb[0].mxu0
    %v4606 = vadd.f32 0.0, %v4605
    %v4607 = vpop.f32.mrb[0].mxu0
    %v4608 = vadd.f32 0.0, %v4607
    %v4609 = vpop.f32.mrb[0].mxu0
    %v4610 = vadd.f32 0.0, %v4609
    %v4611 = vpop.f32.mrb[0].mxu0
    %v4612 = vadd.f32 0.0, %v4611
    %4613 = vdwg.mxu0
    %4614 = vmatprep.subr.bf16.mxu0 %v4438
    %4615 = vmatpush1.bf16.msra.mxu0 %v4437
    %4616 = vmatprep.subr.bf16.mxu0 %v4442
    %4617 = vmatpush1.bf16.msra.mxu0 %v4441
    %4618 = vmatprep.subr.bf16.mxu0 %v4446
    %4619 = vmatpush1.bf16.msra.mxu0 %v4445
    %4620 = vmatprep.subr.bf16.mxu0 %v4450
    %4621 = vmatpush1.bf16.msra.mxu0 %v4449
    %4622 = vmatprep.subr.bf16.mxu0 %v4454
    %4623 = vmatpush1.bf16.msra.mxu0 %v4453
    %4624 = vmatprep.subr.bf16.mxu0 %v4458
    %4625 = vmatpush1.bf16.msra.mxu0 %v4457
    %4626 = vmatprep.subr.bf16.mxu0 %v4462
    %4627 = vmatpush1.bf16.msra.mxu0 %v4461
    %4628 = vmatprep.subr.bf16.mxu0 %v4466
    %4629 = vmatpush1.bf16.msra.mxu0 %v4465
    %4630 = vmatprep.subr.bf16.mxu0 %v4470
    %4631 = vmatpush1.bf16.msra.mxu0 %v4469
    %4632 = vmatprep.subr.bf16.mxu0 %v4474
    %4633 = vmatpush1.bf16.msra.mxu0 %v4473
    %4634 = vmatprep.subr.bf16.mxu0 %v4478
    %4635 = vmatpush1.bf16.msra.mxu0 %v4477
    %4636 = vmatprep.subr.bf16.mxu0 %v4482
    %4637 = vmatpush1.bf16.msra.mxu0 %v4481
    %4638 = vmatprep.subr.bf16.mxu0 %v4486
    %4639 = vmatpush1.bf16.msra.mxu0 %v4485
    %4640 = vmatprep.subr.bf16.mxu0 %v4490
    %4641 = vmatpush1.bf16.msra.mxu0 %v4489
    %4642 = vmatprep.subr.bf16.mxu0 %v4494
    %4643 = vmatpush1.bf16.msra.mxu0 %v4493
    %4644 = vmatprep.subr.bf16.mxu0 %v4498
    %4645 = vmatpush1.bf16.msra.mxu0 %v4497
    %4646 = vmatprep.mubr.bf16.mxu0 %v4344
    %4647 = vmatmul.mubr.bf16.gmra.mrb[0].mxu0 %v4343
    %v4648 = vpop.f32.mrb[0].mxu0
    %v4649 = vadd.f32 %v4536, %v4648
    %v4650 = vpop.f32.mrb[0].mxu0
    %v4651 = vadd.f32 %v4538, %v4650
    %v4652 = vpop.f32.mrb[0].mxu0
    %v4653 = vadd.f32 %v4540, %v4652
    %v4654 = vpop.f32.mrb[0].mxu0
    %v4655 = vadd.f32 %v4542, %v4654
    %4656 = vmatprep.mubr.bf16.mxu0 %v4348
    %4657 = vmatmul.mubr.bf16.gmra.mrb[0].mxu0 %v4347
    %v4658 = vpop.f32.mrb[0].mxu0
    %v4659 = vadd.f32 %v4546, %v4658
    %v4660 = vpop.f32.mrb[0].mxu0
    %v4661 = vadd.f32 %v4548, %v4660
    %v4662 = vpop.f32.mrb[0].mxu0
    %v4663 = vadd.f32 %v4550, %v4662
    %v4664 = vpop.f32.mrb[0].mxu0
    %v4665 = vadd.f32 %v4552, %v4664
    %4666 = vmatprep.mubr.bf16.mxu0 %v4352
    %4667 = vmatmul.mubr.bf16.gmra.mrb[0].mxu0 %v4351
    %v4668 = vpop.f32.mrb[0].mxu0
    %v4669 = vadd.f32 %v4556, %v4668
    %v4670 = vpop.f32.mrb[0].mxu0
    %v4671 = vadd.f32 %v4558, %v4670
    %v4672 = vpop.f32.mrb[0].mxu0
    %v4673 = vadd.f32 %v4560, %v4672
    %v4674 = vpop.f32.mrb[0].mxu0
    %v4675 = vadd.f32 %v4562, %v4674
    %4676 = vmatprep.mubr.bf16.mxu0 %v4356
    %4677 = vmatmul.mubr.bf16.gmra.mrb[0].mxu0 %v4355
    %v4678 = vpop.f32.mrb[0].mxu0
    %v4679 = vadd.f32 %v4566, %v4678
    %v4680 = vpop.f32.mrb[0].mxu0
    %v4681 = vadd.f32 %v4568, %v4680
    %v4682 = vpop.f32.mrb[0].mxu0
    %v4683 = vadd.f32 %v4570, %v4682
    %v4684 = vpop.f32.mrb[0].mxu0
    %v4685 = vadd.f32 %v4572, %v4684
    %4686 = vmatprep.mubr.bf16.mxu0 %v4360
    %4687 = vmatmul.mubr.bf16.gmra.mrb[0].mxu0 %v4359
    %v4688 = vpop.f32.mrb[0].mxu0
    %v4689 = vadd.f32 %v4576, %v4688
    %v4690 = vpop.f32.mrb[0].mxu0
    %v4691 = vadd.f32 %v4578, %v4690
    %v4692 = vpop.f32.mrb[0].mxu0
    %v4693 = vadd.f32 %v4580, %v4692
    %v4694 = vpop.f32.mrb[0].mxu0
    %v4695 = vadd.f32 %v4582, %v4694
    %4696 = vmatprep.mubr.bf16.mxu0 %v4364
    %4697 = vmatmul.mubr.bf16.gmra.mrb[0].mxu0 %v4363
    %v4698 = vpop.f32.mrb[0].mxu0
    %v4699 = vadd.f32 %v4586, %v4698
    %v4700 = vpop.f32.mrb[0].mxu0
    %v4701 = vadd.f32 %v4588, %v4700
    %v4702 = vpop.f32.mrb[0].mxu0
    %v4703 = vadd.f32 %v4590, %v4702
    %v4704 = vpop.f32.mrb[0].mxu0
    %v4705 = vadd.f32 %v4592, %v4704
    %4706 = vmatprep.mubr.bf16.mxu0 %v4368
    %4707 = vmatmul.mubr.bf16.gmra.mrb[0].mxu0 %v4367
    %v4708 = vpop.f32.mrb[0].mxu0
    %v4709 = vadd.f32 %v4596, %v4708
    %v4710 = vpop.f32.mrb[0].mxu0
    %v4711 = vadd.f32 %v4598, %v4710
    %v4712 = vpop.f32.mrb[0].mxu0
    %v4713 = vadd.f32 %v4600, %v4712
    %v4714 = vpop.f32.mrb[0].mxu0
    %v4715 = vadd.f32 %v4602, %v4714
    %4716 = vmatprep.mubr.bf16.mxu0 %v4372
    %4717 = vmatmul.mubr.bf16.gmra.mrb[0].mxu0 %v4371
    %v4718 = vpop.f32.mrb[0].mxu0
    %v4719 = vadd.f32 %v4606, %v4718
    %v4720 = vpop.f32.mrb[0].mxu0
    %v4721 = vadd.f32 %v4608, %v4720
    %v4722 = vpop.f32.mrb[0].mxu0
    %v4723 = vadd.f32 %v4610, %v4722
    %v4724 = vpop.f32.mrb[0].mxu0
    %v4725 = vadd.f32 %v4612, %v4724
    %4726 = vdwg.mxu0
    %4727 = vmatprep.subr.bf16.mxu0 %v4376
    %4728 = vmatpush1.bf16.msra.mxu0 %v4375
    %4729 = vmatprep.subr.bf16.mxu0 %v4380
    %4730 = vmatpush1.bf16.msra.mxu0 %v4379
    %4731 = vmatprep.subr.bf16.mxu0 %v4384
    %4732 = vmatpush1.bf16.msra.mxu0 %v4383
    %4733 = vmatprep.subr.bf16.mxu0 %v4388
    %4734 = vmatpush1.bf16.msra.mxu0 %v4387
    %4735 = vmatprep.subr.bf16.mxu0 %v4392
    %4736 = vmatpush1.bf16.msra.mxu0 %v4391
    %4737 = vmatprep.subr.bf16.mxu0 %v4396
    %4738 = vmatpush1.bf16.msra.mxu0 %v4395
    %4739 = vmatprep.subr.bf16.mxu0 %v4400
    %4740 = vmatpush1.bf16.msra.mxu0 %v4399
    %4741 = vmatprep.subr.bf16.mxu0 %v4404
    %4742 = vmatpush1.bf16.msra.mxu0 %v4403
    %4743 = vmatprep.subr.bf16.mxu0 %v4408
    %4744 = vmatpush1.bf16.msra.mxu0 %v4407
    %4745 = vmatprep.subr.bf16.mxu0 %v4412
    %4746 = vmatpush1.bf16.msra.mxu0 %v4411
    %4747 = vmatprep.subr.bf16.mxu0 %v4416
    %4748 = vmatpush1.bf16.msra.mxu0 %v4415
    %4749 = vmatprep.subr.bf16.mxu0 %v4420
    %4750 = vmatpush1.bf16.msra.mxu0 %v4419
    %4751 = vmatprep.subr.bf16.mxu0 %v4424
    %4752 = vmatpush1.bf16.msra.mxu0 %v4423
    %4753 = vmatprep.subr.bf16.mxu0 %v4428
    %4754 = vmatpush1.bf16.msra.mxu0 %v4427
    %4755 = vmatprep.subr.bf16.mxu0 %v4432
    %4756 = vmatpush1.bf16.msra.mxu0 %v4431
    %4757 = vmatprep.subr.bf16.mxu0 %v4436
    %4758 = vmatpush1.bf16.msra.mxu0 %v4435
    %4759 = vmatprep.mubr.bf16.mxu0 %v4342
    %4760 = vmatmul.mubr.bf16.gmra.mrb[0].mxu0 %v4341
    %v4761 = vpop.f32.mrb[0].mxu0
    %v4762 = vadd.f32 0.0, %v4761
    %v4763 = vpop.f32.mrb[0].mxu0
    %v4764 = vadd.f32 0.0, %v4763
    %v4765 = vpop.f32.mrb[0].mxu0
    %v4766 = vadd.f32 0.0, %v4765
    %v4767 = vpop.f32.mrb[0].mxu0
    %v4768 = vadd.f32 0.0, %v4767
    %4769 = vmatprep.mubr.bf16.mxu0 %v4346
    %4770 = vmatmul.mubr.bf16.gmra.mrb[0].mxu0 %v4345
    %v4771 = vpop.f32.mrb[0].mxu0
    %v4772 = vadd.f32 0.0, %v4771
    %v4773 = vpop.f32.mrb[0].mxu0
    %v4774 = vadd.f32 0.0, %v4773
    %v4775 = vpop.f32.mrb[0].mxu0
    %v4776 = vadd.f32 0.0, %v4775
    %v4777 = vpop.f32.mrb[0].mxu0
    %v4778 = vadd.f32 0.0, %v4777
    %4779 = vmatprep.mubr.bf16.mxu0 %v4350
    %4780 = vmatmul.mubr.bf16.gmra.mrb[0].mxu0 %v4349
    %v4781 = vpop.f32.mrb[0].mxu0
    %v4782 = vadd.f32 0.0, %v4781
    %v4783 = vpop.f32.mrb[0].mxu0
    %v4784 = vadd.f32 0.0, %v4783
    %v4785 = vpop.f32.mrb[0].mxu0
    %v4786 = vadd.f32 0.0, %v4785
    %v4787 = vpop.f32.mrb[0].mxu0
    %v4788 = vadd.f32 0.0, %v4787
    %4789 = vmatprep.mubr.bf16.mxu0 %v4354
    %4790 = vmatmul.mubr.bf16.gmra.mrb[0].mxu0 %v4353
    %v4791 = vpop.f32.mrb[0].mxu0
    %v4792 = vadd.f32 0.0, %v4791
    %v4793 = vpop.f32.mrb[0].mxu0
    %v4794 = vadd.f32 0.0, %v4793
    %v4795 = vpop.f32.mrb[0].mxu0
    %v4796 = vadd.f32 0.0, %v4795
    %v4797 = vpop.f32.mrb[0].mxu0
    %v4798 = vadd.f32 0.0, %v4797
    %4799 = vmatprep.mubr.bf16.mxu0 %v4358
    %4800 = vmatmul.mubr.bf16.gmra.mrb[0].mxu0 %v4357
    %v4801 = vpop.f32.mrb[0].mxu0
    %v4802 = vadd.f32 0.0, %v4801
    %v4803 = vpop.f32.mrb[0].mxu0
    %v4804 = vadd.f32 0.0, %v4803
    %v4805 = vpop.f32.mrb[0].mxu0
    %v4806 = vadd.f32 0.0, %v4805
    %v4807 = vpop.f32.mrb[0].mxu0
    %v4808 = vadd.f32 0.0, %v4807
    %4809 = vmatprep.mubr.bf16.mxu0 %v4362
    %4810 = vmatmul.mubr.bf16.gmra.mrb[0].mxu0 %v4361
    %v4811 = vpop.f32.mrb[0].mxu0
    %v4812 = vadd.f32 0.0, %v4811
    %v4813 = vpop.f32.mrb[0].mxu0
    %v4814 = vadd.f32 0.0, %v4813
    %v4815 = vpop.f32.mrb[0].mxu0
    %v4816 = vadd.f32 0.0, %v4815
    %v4817 = vpop.f32.mrb[0].mxu0
    %v4818 = vadd.f32 0.0, %v4817
    %4819 = vmatprep.mubr.bf16.mxu0 %v4366
    %4820 = vmatmul.mubr.bf16.gmra.mrb[0].mxu0 %v4365
    %v4821 = vpop.f32.mrb[0].mxu0
    %v4822 = vadd.f32 0.0, %v4821
    %v4823 = vpop.f32.mrb[0].mxu0
    %v4824 = vadd.f32 0.0, %v4823
    %v4825 = vpop.f32.mrb[0].mxu0
    %v4826 = vadd.f32 0.0, %v4825
    %v4827 = vpop.f32.mrb[0].mxu0
    %v4828 = vadd.f32 0.0, %v4827
    %4829 = vmatprep.mubr.bf16.mxu0 %v4370
    %4830 = vmatmul.mubr.bf16.gmra.mrb[0].mxu0 %v4369
    %v4831 = vpop.f32.mrb[0].mxu0
    %v4832 = vadd.f32 0.0, %v4831
    %v4833 = vpop.f32.mrb[0].mxu0
    %v4834 = vadd.f32 0.0, %v4833
    %v4835 = vpop.f32.mrb[0].mxu0
    %v4836 = vadd.f32 0.0, %v4835
    %v4837 = vpop.f32.mrb[0].mxu0
    %v4838 = vadd.f32 0.0, %v4837
    %4839 = vdwg.mxu0
    %4840 = vmatprep.subr.bf16.mxu0 %v4440
    %4841 = vmatpush1.bf16.msra.mxu0 %v4439
    %4842 = vmatprep.subr.bf16.mxu0 %v4444
    %4843 = vmatpush1.bf16.msra.mxu0 %v4443
    %4844 = vmatprep.subr.bf16.mxu0 %v4448
    %4845 = vmatpush1.bf16.msra.mxu0 %v4447
    %4846 = vmatprep.subr.bf16.mxu0 %v4452
    %4847 = vmatpush1.bf16.msra.mxu0 %v4451
    %4848 = vmatprep.subr.bf16.mxu0 %v4456
    %4849 = vmatpush1.bf16.msra.mxu0 %v4455
    %4850 = vmatprep.subr.bf16.mxu0 %v4460
    %4851 = vmatpush1.bf16.msra.mxu0 %v4459
    %4852 = vmatprep.subr.bf16.mxu0 %v4464
    %4853 = vmatpush1.bf16.msra.mxu0 %v4463
    %4854 = vmatprep.subr.bf16.mxu0 %v4468
    %4855 = vmatpush1.bf16.msra.mxu0 %v4467
    %4856 = vmatprep.subr.bf16.mxu0 %v4472
    %4857 = vmatpush1.bf16.msra.mxu0 %v4471
    %4858 = vmatprep.subr.bf16.mxu0 %v4476
    %4859 = vmatpush1.bf16.msra.mxu0 %v4475
    %4860 = vmatprep.subr.bf16.mxu0 %v4480
    %4861 = vmatpush1.bf16.msra.mxu0 %v4479
    %4862 = vmatprep.subr.bf16.mxu0 %v4484
    %4863 = vmatpush1.bf16.msra.mxu0 %v4483
    %4864 = vmatprep.subr.bf16.mxu0 %v4488
    %4865 = vmatpush1.bf16.msra.mxu0 %v4487
    %4866 = vmatprep.subr.bf16.mxu0 %v4492
    %4867 = vmatpush1.bf16.msra.mxu0 %v4491
    %4868 = vmatprep.subr.bf16.mxu0 %v4496
    %4869 = vmatpush1.bf16.msra.mxu0 %v4495
    %4870 = vmatprep.subr.bf16.mxu0 %v4500
    %4871 = vmatpush1.bf16.msra.mxu0 %v4499
    %4872 = vmatprep.mubr.bf16.mxu0 %v4344
    %4873 = vmatmul.mubr.bf16.gmra.mrb[0].mxu0 %v4343
    %v4874 = vpop.f32.mrb[0].mxu0
    %v4875 = vadd.f32 %v4762, %v4874
    %v4876 = vpop.f32.mrb[0].mxu0
    %v4877 = vadd.f32 %v4764, %v4876
    %v4878 = vpop.f32.mrb[0].mxu0
    %v4879 = vadd.f32 %v4766, %v4878
    %v4880 = vpop.f32.mrb[0].mxu0
    %v4881 = vadd.f32 %v4768, %v4880
    %4882 = vmatprep.mubr.bf16.mxu0 %v4348
    %4883 = vmatmul.mubr.bf16.gmra.mrb[0].mxu0 %v4347
    %v4884 = vpop.f32.mrb[0].mxu0
    %v4885 = vadd.f32 %v4772, %v4884
    %v4886 = vpop.f32.mrb[0].mxu0
    %v4887 = vadd.f32 %v4774, %v4886
    %v4888 = vpop.f32.mrb[0].mxu0
    %v4889 = vadd.f32 %v4776, %v4888
    %v4890 = vpop.f32.mrb[0].mxu0
    %v4891 = vadd.f32 %v4778, %v4890
    %4892 = vmatprep.mubr.bf16.mxu0 %v4352
    %4893 = vmatmul.mubr.bf16.gmra.mrb[0].mxu0 %v4351
    %v4894 = vpop.f32.mrb[0].mxu0
    %v4895 = vadd.f32 %v4782, %v4894
    %v4896 = vpop.f32.mrb[0].mxu0
    %v4897 = vadd.f32 %v4784, %v4896
    %v4898 = vpop.f32.mrb[0].mxu0
    %v4899 = vadd.f32 %v4786, %v4898
    %v4900 = vpop.f32.mrb[0].mxu0
    %v4901 = vadd.f32 %v4788, %v4900
    %4902 = vmatprep.mubr.bf16.mxu0 %v4356
    %4903 = vmatmul.mubr.bf16.gmra.mrb[0].mxu0 %v4355
    %v4904 = vpop.f32.mrb[0].mxu0
    %v4905 = vadd.f32 %v4792, %v4904
    %v4906 = vpop.f32.mrb[0].mxu0
    %v4907 = vadd.f32 %v4794, %v4906
    %v4908 = vpop.f32.mrb[0].mxu0
    %v4909 = vadd.f32 %v4796, %v4908
    %v4910 = vpop.f32.mrb[0].mxu0
    %v4911 = vadd.f32 %v4798, %v4910
    %4912 = vmatprep.mubr.bf16.mxu0 %v4360
    %4913 = vmatmul.mubr.bf16.gmra.mrb[0].mxu0 %v4359
    %v4914 = vpop.f32.mrb[0].mxu0
    %v4915 = vadd.f32 %v4802, %v4914
    %v4916 = vpop.f32.mrb[0].mxu0
    %v4917 = vadd.f32 %v4804, %v4916
    %v4918 = vpop.f32.mrb[0].mxu0
    %v4919 = vadd.f32 %v4806, %v4918
    %v4920 = vpop.f32.mrb[0].mxu0
    %v4921 = vadd.f32 %v4808, %v4920
    %4922 = vmatprep.mubr.bf16.mxu0 %v4364
    %4923 = vmatmul.mubr.bf16.gmra.mrb[0].mxu0 %v4363
    %v4924 = vpop.f32.mrb[0].mxu0
    %v4925 = vadd.f32 %v4812, %v4924
    %v4926 = vpop.f32.mrb[0].mxu0
    %v4927 = vadd.f32 %v4814, %v4926
    %v4928 = vpop.f32.mrb[0].mxu0
    %v4929 = vadd.f32 %v4816, %v4928
    %v4930 = vpop.f32.mrb[0].mxu0
    %v4931 = vadd.f32 %v4818, %v4930
    %4932 = vmatprep.mubr.bf16.mxu0 %v4368
    %4933 = vmatmul.mubr.bf16.gmra.mrb[0].mxu0 %v4367
    %v4934 = vpop.f32.mrb[0].mxu0
    %v4935 = vadd.f32 %v4822, %v4934
    %v4936 = vpop.f32.mrb[0].mxu0
    %v4937 = vadd.f32 %v4824, %v4936
    %v4938 = vpop.f32.mrb[0].mxu0
    %v4939 = vadd.f32 %v4826, %v4938
    %v4940 = vpop.f32.mrb[0].mxu0
    %v4941 = vadd.f32 %v4828, %v4940
    %4942 = vmatprep.mubr.bf16.mxu0 %v4372
    %4943 = vmatmul.mubr.bf16.gmra.mrb[0].mxu0 %v4371
    %v4944 = vpop.f32.mrb[0].mxu0
    %v4945 = vadd.f32 %v4832, %v4944
    %v4946 = vpop.f32.mrb[0].mxu0
    %v4947 = vadd.f32 %v4834, %v4946
    %v4948 = vpop.f32.mrb[0].mxu0
    %v4949 = vadd.f32 %v4836, %v4948
    %v4950 = vpop.f32.mrb[0].mxu0
    %v4951 = vadd.f32 %v4838, %v4950
    %4952 = vdwg.mxu0
    %v4953 = vld [vmem:[#allocation16] sm:$0xf]
    %v4954 = vld [vmem:[#allocation18] sm:$0xf]
    %v4955 = vadd.f32 %v4649, %v4653
    %v4956 = vadd.f32 %v4955, %v4659
    %v4957 = vadd.f32 %v4956, %v4663
    %v4958 = vadd.f32 %v4957, %v4669
    %v4959 = vadd.f32 %v4958, %v4673
    %v4960 = vadd.f32 %v4959, %v4679
    %v4961 = vadd.f32 %v4960, %v4683
    %v4962 = vadd.f32 %v4961, %v4689
    %v4963 = vadd.f32 %v4962, %v4693
    %v4964 = vadd.f32 %v4963, %v4699
    %v4965 = vadd.f32 %v4964, %v4703
    %v4966 = vadd.f32 %v4965, %v4709
    %v4967 = vadd.f32 %v4966, %v4713
    %v4968 = vadd.f32 %v4967, %v4719
    %v4969 = vadd.f32 %v4968, %v4723
    %v4970 = vrot.slane %v4969, 4
    %v4971 = vadd.f32 %v4969, %v4970
    %v4972 = vrot.slane %v4971, 2
    %v4973 = vadd.f32 %v4971, %v4972
    %v4974 = vrot.slane %v4973, 1
    %v4975 = vadd.f32 %v4973, %v4974
    %v4976 = vadd.f32 %v4651, %v4655
    %v4977 = vadd.f32 %v4976, %v4661
    %v4978 = vadd.f32 %v4977, %v4665
    %v4979 = vadd.f32 %v4978, %v4671
    %v4980 = vadd.f32 %v4979, %v4675
    %v4981 = vadd.f32 %v4980, %v4681
    %v4982 = vadd.f32 %v4981, %v4685
    %v4983 = vadd.f32 %v4982, %v4691
    %v4984 = vadd.f32 %v4983, %v4695
    %v4985 = vadd.f32 %v4984, %v4701
    %v4986 = vadd.f32 %v4985, %v4705
    %v4987 = vadd.f32 %v4986, %v4711
    %v4988 = vadd.f32 %v4987, %v4715
    %v4989 = vadd.f32 %v4988, %v4721
    %v4990 = vadd.f32 %v4989, %v4725
    %v4991 = vrot.slane %v4990, 4
    %v4992 = vadd.f32 %v4990, %v4991
    %v4993 = vrot.slane %v4992, 2
    %v4994 = vadd.f32 %v4992, %v4993
    %v4995 = vrot.slane %v4994, 1
    %v4996 = vadd.f32 %v4994, %v4995
    %v4997 = vadd.f32 %v4875, %v4879
    %v4998 = vadd.f32 %v4997, %v4885
    %v4999 = vadd.f32 %v4998, %v4889
    %v5000 = vadd.f32 %v4999, %v4895
    %v5001 = vadd.f32 %v5000, %v4899
    %v5002 = vadd.f32 %v5001, %v4905
    %v5003 = vadd.f32 %v5002, %v4909
    %v5004 = vadd.f32 %v5003, %v4915
    %v5005 = vadd.f32 %v5004, %v4919
    %v5006 = vadd.f32 %v5005, %v4925
    %v5007 = vadd.f32 %v5006, %v4929
    %v5008 = vadd.f32 %v5007, %v4935
    %v5009 = vadd.f32 %v5008, %v4939
    %v5010 = vadd.f32 %v5009, %v4945
    %v5011 = vadd.f32 %v5010, %v4949
    %v5012 = vrot.slane %v5011, 4
    %v5013 = vadd.f32 %v5011, %v5012
    %v5014 = vrot.slane %v5013, 2
    %v5015 = vadd.f32 %v5013, %v5014
    %v5016 = vrot.slane %v5015, 1
    %v5017 = vadd.f32 %v5015, %v5016
    %v5018 = vadd.f32 %v4877, %v4881
    %v5019 = vadd.f32 %v5018, %v4887
    %v5020 = vadd.f32 %v5019, %v4891
    %v5021 = vadd.f32 %v5020, %v4897
    %v5022 = vadd.f32 %v5021, %v4901
    %v5023 = vadd.f32 %v5022, %v4907
    %v5024 = vadd.f32 %v5023, %v4911
    %v5025 = vadd.f32 %v5024, %v4917
    %v5026 = vadd.f32 %v5025, %v4921
    %v5027 = vadd.f32 %v5026, %v4927
    %v5028 = vadd.f32 %v5027, %v4931
    %v5029 = vadd.f32 %v5028, %v4937
    %v5030 = vadd.f32 %v5029, %v4941
    %v5031 = vadd.f32 %v5030, %v4947
    %v5032 = vadd.f32 %v5031, %v4951
    %v5033 = vrot.slane %v5032, 4
    %v5034 = vadd.f32 %v5032, %v5033
    %v5035 = vrot.slane %v5034, 2
    %v5036 = vadd.f32 %v5034, %v5035
    %v5037 = vrot.slane %v5036, 1
    %v5038 = vadd.f32 %v5036, %v5037
    %v5039 = vmul.f32 %v4975, %v1074
    %v5040 = vmul.f32 %v4996, %v1074
    %v5041 = vmul.f32 %v5017, %v1074
    %v5042 = vmul.f32 %v5038, %v1074
    %v5043 = vmul.f32 %v4649, %v4649
    %v5044 = vmul.f32 %v4651, %v4651
    %v5045 = vmul.f32 %v4875, %v4875
    %v5046 = vmul.f32 %v4877, %v4877
    %v5047 = vmul.f32 %v4653, %v4653
    %v5048 = vmul.f32 %v4655, %v4655
    %v5049 = vmul.f32 %v4879, %v4879
    %v5050 = vmul.f32 %v4881, %v4881
    %v5051 = vmul.f32 %v4659, %v4659
    %v5052 = vmul.f32 %v4661, %v4661
    %v5053 = vmul.f32 %v4885, %v4885
    %v5054 = vmul.f32 %v4887, %v4887
    %v5055 = vmul.f32 %v4663, %v4663
    %v5056 = vmul.f32 %v4665, %v4665
    %v5057 = vmul.f32 %v4889, %v4889
    %v5058 = vmul.f32 %v4891, %v4891
    %v5059 = vmul.f32 %v4669, %v4669
    %v5060 = vmul.f32 %v4671, %v4671
    %v5061 = vmul.f32 %v4895, %v4895
    %v5062 = vmul.f32 %v4897, %v4897
    %v5063 = vmul.f32 %v4673, %v4673
    %v5064 = vmul.f32 %v4675, %v4675
    %v5065 = vmul.f32 %v4899, %v4899
    %v5066 = vmul.f32 %v4901, %v4901
    %v5067 = vmul.f32 %v4679, %v4679
    %v5068 = vmul.f32 %v4681, %v4681
    %v5069 = vmul.f32 %v4905, %v4905
    %v5070 = vmul.f32 %v4907, %v4907
    %v5071 = vmul.f32 %v4683, %v4683
    %v5072 = vmul.f32 %v4685, %v4685
    %v5073 = vmul.f32 %v4909, %v4909
    %v5074 = vmul.f32 %v4911, %v4911
    %v5075 = vmul.f32 %v4689, %v4689
    %v5076 = vmul.f32 %v4691, %v4691
    %v5077 = vmul.f32 %v4915, %v4915
    %v5078 = vmul.f32 %v4917, %v4917
    %v5079 = vmul.f32 %v4693, %v4693
    %v5080 = vmul.f32 %v4695, %v4695
    %v5081 = vmul.f32 %v4919, %v4919
    %v5082 = vmul.f32 %v4921, %v4921
    %v5083 = vmul.f32 %v4699, %v4699
    %v5084 = vmul.f32 %v4701, %v4701
    %v5085 = vmul.f32 %v4925, %v4925
    %v5086 = vmul.f32 %v4927, %v4927
    %v5087 = vmul.f32 %v4703, %v4703
    %v5088 = vmul.f32 %v4705, %v4705
    %v5089 = vmul.f32 %v4929, %v4929
    %v5090 = vmul.f32 %v4931, %v4931
    %v5091 = vmul.f32 %v4709, %v4709
    %v5092 = vmul.f32 %v4711, %v4711
    %v5093 = vmul.f32 %v4935, %v4935
    %v5094 = vmul.f32 %v4937, %v4937
    %v5095 = vmul.f32 %v4713, %v4713
    %v5096 = vmul.f32 %v4715, %v4715
    %v5097 = vmul.f32 %v4939, %v4939
    %v5098 = vmul.f32 %v4941, %v4941
    %v5099 = vmul.f32 %v4719, %v4719
    %v5100 = vmul.f32 %v4721, %v4721
    %v5101 = vmul.f32 %v4945, %v4945
    %v5102 = vmul.f32 %v4947, %v4947
    %v5103 = vmul.f32 %v4723, %v4723
    %v5104 = vmul.f32 %v4725, %v4725
    %v5105 = vmul.f32 %v4949, %v4949
    %v5106 = vmul.f32 %v4951, %v4951
    %v5107 = vadd.f32 %v5043, %v5047
    %v5108 = vadd.f32 %v5107, %v5051
    %v5109 = vadd.f32 %v5108, %v5055
    %v5110 = vadd.f32 %v5109, %v5059
    %v5111 = vadd.f32 %v5110, %v5063
    %v5112 = vadd.f32 %v5111, %v5067
    %v5113 = vadd.f32 %v5112, %v5071
    %v5114 = vadd.f32 %v5113, %v5075
    %v5115 = vadd.f32 %v5114, %v5079
    %v5116 = vadd.f32 %v5115, %v5083
    %v5117 = vadd.f32 %v5116, %v5087
    %v5118 = vadd.f32 %v5117, %v5091
    %v5119 = vadd.f32 %v5118, %v5095
    %v5120 = vadd.f32 %v5119, %v5099
    %v5121 = vadd.f32 %v5120, %v5103
    %v5122 = vrot.slane %v5121, 4
    %v5123 = vadd.f32 %v5121, %v5122
    %v5124 = vrot.slane %v5123, 2
    %v5125 = vadd.f32 %v5123, %v5124
    %v5126 = vrot.slane %v5125, 1
    %v5127 = vadd.f32 %v5125, %v5126
    %v5128 = vadd.f32 %v5044, %v5048
    %v5129 = vadd.f32 %v5128, %v5052
    %v5130 = vadd.f32 %v5129, %v5056
    %v5131 = vadd.f32 %v5130, %v5060
    %v5132 = vadd.f32 %v5131, %v5064
    %v5133 = vadd.f32 %v5132, %v5068
    %v5134 = vadd.f32 %v5133, %v5072
    %v5135 = vadd.f32 %v5134, %v5076
    %v5136 = vadd.f32 %v5135, %v5080
    %v5137 = vadd.f32 %v5136, %v5084
    %v5138 = vadd.f32 %v5137, %v5088
    %v5139 = vadd.f32 %v5138, %v5092
    %v5140 = vadd.f32 %v5139, %v5096
    %v5141 = vadd.f32 %v5140, %v5100
    %v5142 = vadd.f32 %v5141, %v5104
    %v5143 = vrot.slane %v5142, 4
    %v5144 = vadd.f32 %v5142, %v5143
    %v5145 = vrot.slane %v5144, 2
    %v5146 = vadd.f32 %v5144, %v5145
    %v5147 = vrot.slane %v5146, 1
    %v5148 = vadd.f32 %v5146, %v5147
    %v5149 = vadd.f32 %v5045, %v5049
    %v5150 = vadd.f32 %v5149, %v5053
    %v5151 = vadd.f32 %v5150, %v5057
    %v5152 = vadd.f32 %v5151, %v5061
    %v5153 = vadd.f32 %v5152, %v5065
    %v5154 = vadd.f32 %v5153, %v5069
    %v5155 = vadd.f32 %v5154, %v5073
    %v5156 = vadd.f32 %v5155, %v5077
    %v5157 = vadd.f32 %v5156, %v5081
    %v5158 = vadd.f32 %v5157, %v5085
    %v5159 = vadd.f32 %v5158, %v5089
    %v5160 = vadd.f32 %v5159, %v5093
    %v5161 = vadd.f32 %v5160, %v5097
    %v5162 = vadd.f32 %v5161, %v5101
    %v5163 = vadd.f32 %v5162, %v5105
    %v5164 = vrot.slane %v5163, 4
    %v5165 = vadd.f32 %v5163, %v5164
    %v5166 = vrot.slane %v5165, 2
    %v5167 = vadd.f32 %v5165, %v5166
    %v5168 = vrot.slane %v5167, 1
    %v5169 = vadd.f32 %v5167, %v5168
    %v5170 = vadd.f32 %v5046, %v5050
    %v5171 = vadd.f32 %v5170, %v5054
    %v5172 = vadd.f32 %v5171, %v5058
    %v5173 = vadd.f32 %v5172, %v5062
    %v5174 = vadd.f32 %v5173, %v5066
    %v5175 = vadd.f32 %v5174, %v5070
    %v5176 = vadd.f32 %v5175, %v5074
    %v5177 = vadd.f32 %v5176, %v5078
    %v5178 = vadd.f32 %v5177, %v5082
    %v5179 = vadd.f32 %v5178, %v5086
    %v5180 = vadd.f32 %v5179, %v5090
    %v5181 = vadd.f32 %v5180, %v5094
    %v5182 = vadd.f32 %v5181, %v5098
    %v5183 = vadd.f32 %v5182, %v5102
    %v5184 = vadd.f32 %v5183, %v5106
    %v5185 = vrot.slane %v5184, 4
    %v5186 = vadd.f32 %v5184, %v5185
    %v5187 = vrot.slane %v5186, 2
    %v5188 = vadd.f32 %v5186, %v5187
    %v5189 = vrot.slane %v5188, 1
    %v5190 = vadd.f32 %v5188, %v5189
    %v5191 = vmul.f32 %v5127, %v1074
    %v5192 = vmul.f32 %v5148, %v1074
    %v5193 = vmul.f32 %v5169, %v1074
    %v5194 = vmul.f32 %v5190, %v1074
    %v5195 = vmul.f32 %v5039, %v5039
    %v5196 = vmul.f32 %v5040, %v5040
    %v5197 = vmul.f32 %v5041, %v5041
    %v5198 = vmul.f32 %v5042, %v5042
    %v5199 = vsub.f32 %v5191, %v5195
    %v5200 = vsub.f32 %v5192, %v5196
    %v5201 = vsub.f32 %v5193, %v5197
    %v5202 = vsub.f32 %v5194, %v5198
    %v5203 = vadd.f32 %v5199, 1e-05
    %v5204 = vadd.f32 %v5200, 1e-05
    %v5205 = vadd.f32 %v5201, 1e-05
    %v5206 = vadd.f32 %v5202, 1e-05
    %v5207 = vrsqrt.pop %v5203
    %v5208 = vrsqrt.pop %v5204
    %v5209 = vrsqrt.pop %v5205
    %v5210 = vrsqrt.pop %v5206
    %v5215 = vcombine.low %v5207, %v5208
    %v5216 = vcombine.low %v5209, %v5210
    %v5218 = vunpack.c.l.s4 1966171168
    %v5219 = vunpack.c.0.s8 %v5218
    %v5220 = vlaneseq
    %v5221 = vshrl.u32 %v5220, 7
    %v5222 = vsub.s32 %v5219, %v5221
    %v5223 = vrot.slane %v5215, %v5222
    %v5225 = vunpack.c.l.s4 1966171168
    %v5226 = vunpack.c.0.s8 %v5225
    %v5227 = vlaneseq
    %v5228 = vshrl.u32 %v5227, 7
    %v5229 = vsub.s32 %v5226, %v5228
    %v5230 = vrot.slane %v5216, %v5229
    %v5231 = vcombine.low %v5223, %v5230
    %v5233 = vunpack.c.l.s4 1966171168
    %v5234 = vunpack.c.0.s8 %v5233
    %v5235 = vlaneseq
    %v5236 = vshrl.u32 %v5235, 7
    %v5237 = vsub.s32 %v5234, %v5236
    %v5238 = vrot.slane %v5231, %v5237
    %v5240 = vmul.f32 %v4953, %v5238
    %v5242 = vlaneseq
    %v5243 = vshrl.u32 %v5242, 7
    %v5244 = vsub.s32 0, %v5243
    %v5245 = vrot.slane %v5240, %v5244
    %v5246 = vlaneseq
    %v5247 = vshrl.u32 %v5246, 7
    %v5248 = vsub.s32 1, %v5247
    %v5249 = vrot.slane %v5240, %v5248
    %v5250 = vlaneseq
    %v5251 = vshrl.u32 %v5250, 7
    %v5252 = vsub.s32 2, %v5251
    %v5253 = vrot.slane %v5240, %v5252
    %v5254 = vlaneseq
    %v5255 = vshrl.u32 %v5254, 7
    %v5256 = vsub.s32 3, %v5255
    %v5257 = vrot.slane %v5240, %v5256
    %v5262 = vmul.f32 %v5039, %v5245
    %v5263 = vmul.f32 %v5040, %v5249
    %v5264 = vmul.f32 %v5041, %v5253
    %v5265 = vmul.f32 %v5042, %v5257
    %v5270 = vcombine.low %v5262, %v5263
    %v5271 = vcombine.low %v5264, %v5265
    %v5273 = vunpack.c.l.s4 1966171168
    %v5274 = vunpack.c.0.s8 %v5273
    %v5275 = vlaneseq
    %v5276 = vshrl.u32 %v5275, 7
    %v5277 = vsub.s32 %v5274, %v5276
    %v5278 = vrot.slane %v5270, %v5277
    %v5280 = vunpack.c.l.s4 1966171168
    %v5281 = vunpack.c.0.s8 %v5280
    %v5282 = vlaneseq
    %v5283 = vshrl.u32 %v5282, 7
    %v5284 = vsub.s32 %v5281, %v5283
    %v5285 = vrot.slane %v5271, %v5284
    %v5286 = vcombine.low %v5278, %v5285
    %v5288 = vunpack.c.l.s4 1966171168
    %v5289 = vunpack.c.0.s8 %v5288
    %v5290 = vlaneseq
    %v5291 = vshrl.u32 %v5290, 7
    %v5292 = vsub.s32 %v5289, %v5291
    %v5293 = vrot.slane %v5286, %v5292
    %v5295 = vsub.f32 %v4954, %v5293
    %v5296 = vmul.f32 %v4649, %v5245
    %v5297 = vmul.f32 %v4651, %v5249
    %v5298 = vmul.f32 %v4875, %v5253
    %v5299 = vmul.f32 %v4877, %v5257
    %v5300 = vmul.f32 %v4653, %v5245
    %v5301 = vmul.f32 %v4655, %v5249
    %v5302 = vmul.f32 %v4879, %v5253
    %v5303 = vmul.f32 %v4881, %v5257
    %v5304 = vmul.f32 %v4659, %v5245
    %v5305 = vmul.f32 %v4661, %v5249
    %v5306 = vmul.f32 %v4885, %v5253
    %v5307 = vmul.f32 %v4887, %v5257
    %v5308 = vmul.f32 %v4663, %v5245
    %v5309 = vmul.f32 %v4665, %v5249
    %v5310 = vmul.f32 %v4889, %v5253
    %v5311 = vmul.f32 %v4891, %v5257
    %v5312 = vmul.f32 %v4669, %v5245
    %v5313 = vmul.f32 %v4671, %v5249
    %v5314 = vmul.f32 %v4895, %v5253
    %v5315 = vmul.f32 %v4897, %v5257
    %v5316 = vmul.f32 %v4673, %v5245
    %v5317 = vmul.f32 %v4675, %v5249
    %v5318 = vmul.f32 %v4899, %v5253
    %v5319 = vmul.f32 %v4901, %v5257
    %v5320 = vmul.f32 %v4679, %v5245
    %v5321 = vmul.f32 %v4681, %v5249
    %v5322 = vmul.f32 %v4905, %v5253
    %v5323 = vmul.f32 %v4907, %v5257
    %v5324 = vmul.f32 %v4683, %v5245
    %v5325 = vmul.f32 %v4685, %v5249
    %v5326 = vmul.f32 %v4909, %v5253
    %v5327 = vmul.f32 %v4911, %v5257
    %v5328 = vmul.f32 %v4689, %v5245
    %v5329 = vmul.f32 %v4691, %v5249
    %v5330 = vmul.f32 %v4915, %v5253
    %v5331 = vmul.f32 %v4917, %v5257
    %v5332 = vmul.f32 %v4693, %v5245
    %v5333 = vmul.f32 %v4695, %v5249
    %v5334 = vmul.f32 %v4919, %v5253
    %v5335 = vmul.f32 %v4921, %v5257
    %v5336 = vmul.f32 %v4699, %v5245
    %v5337 = vmul.f32 %v4701, %v5249
    %v5338 = vmul.f32 %v4925, %v5253
    %v5339 = vmul.f32 %v4927, %v5257
    %v5340 = vmul.f32 %v4703, %v5245
    %v5341 = vmul.f32 %v4705, %v5249
    %v5342 = vmul.f32 %v4929, %v5253
    %v5343 = vmul.f32 %v4931, %v5257
    %v5344 = vmul.f32 %v4709, %v5245
    %v5345 = vmul.f32 %v4711, %v5249
    %v5346 = vmul.f32 %v4935, %v5253
    %v5347 = vmul.f32 %v4937, %v5257
    %v5348 = vmul.f32 %v4713, %v5245
    %v5349 = vmul.f32 %v4715, %v5249
    %v5350 = vmul.f32 %v4939, %v5253
    %v5351 = vmul.f32 %v4941, %v5257
    %v5352 = vmul.f32 %v4719, %v5245
    %v5353 = vmul.f32 %v4721, %v5249
    %v5354 = vmul.f32 %v4945, %v5253
    %v5355 = vmul.f32 %v4947, %v5257
    %v5356 = vmul.f32 %v4723, %v5245
    %v5357 = vmul.f32 %v4725, %v5249
    %v5358 = vmul.f32 %v4949, %v5253
    %v5359 = vmul.f32 %v4951, %v5257
    %v5361 = vlaneseq
    %v5362 = vshrl.u32 %v5361, 7
    %v5363 = vsub.s32 0, %v5362
    %v5364 = vrot.slane %v5295, %v5363
    %v5365 = vlaneseq
    %v5366 = vshrl.u32 %v5365, 7
    %v5367 = vsub.s32 1, %v5366
    %v5368 = vrot.slane %v5295, %v5367
    %v5369 = vlaneseq
    %v5370 = vshrl.u32 %v5369, 7
    %v5371 = vsub.s32 2, %v5370
    %v5372 = vrot.slane %v5295, %v5371
    %v5373 = vlaneseq
    %v5374 = vshrl.u32 %v5373, 7
    %v5375 = vsub.s32 3, %v5374
    %v5376 = vrot.slane %v5295, %v5375
    %v5381 = vadd.f32 %v5296, %v5364
    %v5382 = vadd.f32 %v5297, %v5368
    %v5383 = vadd.f32 %v5298, %v5372
    %v5384 = vadd.f32 %v5299, %v5376
    %v5385 = vadd.f32 %v5300, %v5364
    %v5386 = vadd.f32 %v5301, %v5368
    %v5387 = vadd.f32 %v5302, %v5372
    %v5388 = vadd.f32 %v5303, %v5376
    %v5389 = vadd.f32 %v5304, %v5364
    %v5390 = vadd.f32 %v5305, %v5368
    %v5391 = vadd.f32 %v5306, %v5372
    %v5392 = vadd.f32 %v5307, %v5376
    %v5393 = vadd.f32 %v5308, %v5364
    %v5394 = vadd.f32 %v5309, %v5368
    %v5395 = vadd.f32 %v5310, %v5372
    %v5396 = vadd.f32 %v5311, %v5376
    %v5397 = vadd.f32 %v5312, %v5364
    %v5398 = vadd.f32 %v5313, %v5368
    %v5399 = vadd.f32 %v5314, %v5372
    %v5400 = vadd.f32 %v5315, %v5376
    %v5401 = vadd.f32 %v5316, %v5364
    %v5402 = vadd.f32 %v5317, %v5368
    %v5403 = vadd.f32 %v5318, %v5372
    %v5404 = vadd.f32 %v5319, %v5376
    %v5405 = vadd.f32 %v5320, %v5364
    %v5406 = vadd.f32 %v5321, %v5368
    %v5407 = vadd.f32 %v5322, %v5372
    %v5408 = vadd.f32 %v5323, %v5376
    %v5409 = vadd.f32 %v5324, %v5364
    %v5410 = vadd.f32 %v5325, %v5368
    %v5411 = vadd.f32 %v5326, %v5372
    %v5412 = vadd.f32 %v5327, %v5376
    %v5413 = vadd.f32 %v5328, %v5364
    %v5414 = vadd.f32 %v5329, %v5368
    %v5415 = vadd.f32 %v5330, %v5372
    %v5416 = vadd.f32 %v5331, %v5376
    %v5417 = vadd.f32 %v5332, %v5364
    %v5418 = vadd.f32 %v5333, %v5368
    %v5419 = vadd.f32 %v5334, %v5372
    %v5420 = vadd.f32 %v5335, %v5376
    %v5421 = vadd.f32 %v5336, %v5364
    %v5422 = vadd.f32 %v5337, %v5368
    %v5423 = vadd.f32 %v5338, %v5372
    %v5424 = vadd.f32 %v5339, %v5376
    %v5425 = vadd.f32 %v5340, %v5364
    %v5426 = vadd.f32 %v5341, %v5368
    %v5427 = vadd.f32 %v5342, %v5372
    %v5428 = vadd.f32 %v5343, %v5376
    %v5429 = vadd.f32 %v5344, %v5364
    %v5430 = vadd.f32 %v5345, %v5368
    %v5431 = vadd.f32 %v5346, %v5372
    %v5432 = vadd.f32 %v5347, %v5376
    %v5433 = vadd.f32 %v5348, %v5364
    %v5434 = vadd.f32 %v5349, %v5368
    %v5435 = vadd.f32 %v5350, %v5372
    %v5436 = vadd.f32 %v5351, %v5376
    %v5437 = vadd.f32 %v5352, %v5364
    %v5438 = vadd.f32 %v5353, %v5368
    %v5439 = vadd.f32 %v5354, %v5372
    %v5440 = vadd.f32 %v5355, %v5376
    %v5441 = vadd.f32 %v5356, %v5364
    %v5442 = vadd.f32 %v5357, %v5368
    %v5443 = vadd.f32 %v5358, %v5372
    %v5444 = vadd.f32 %v5359, %v5376
    %5445 = vst [vmem:[#allocation19] sm:$0xff] %v5381
    %5446 = vst [vmem:[#allocation19 + $0x8] sm:$0xff] %v5382
    %5447 = vst [vmem:[#allocation19 + $0x10] sm:$0xff] %v5383
    %5448 = vst [vmem:[#allocation19 + $0x18] sm:$0xff] %v5384
    %5449 = vst [vmem:[#allocation19 + $0x20] sm:$0xff] %v5385
    %5450 = vst [vmem:[#allocation19 + $0x28] sm:$0xff] %v5386
    %5451 = vst [vmem:[#allocation19 + $0x30] sm:$0xff] %v5387
    %5452 = vst [vmem:[#allocation19 + $0x38] sm:$0xff] %v5388
    %5453 = vst [vmem:[#allocation19 + $0x40] sm:$0xff] %v5389
    %5454 = vst [vmem:[#allocation19 + $0x48] sm:$0xff] %v5390
    %5455 = vst [vmem:[#allocation19 + $0x50] sm:$0xff] %v5391
    %5456 = vst [vmem:[#allocation19 + $0x58] sm:$0xff] %v5392
    %5457 = vst [vmem:[#allocation19 + $0x60] sm:$0xff] %v5393
    %5458 = vst [vmem:[#allocation19 + $0x68] sm:$0xff] %v5394
    %5459 = vst [vmem:[#allocation19 + $0x70] sm:$0xff] %v5395
    %5460 = vst [vmem:[#allocation19 + $0x78] sm:$0xff] %v5396
    %5461 = vst [vmem:[#allocation19 + $0x80] sm:$0xff] %v5397
    %5462 = vst [vmem:[#allocation19 + $0x88] sm:$0xff] %v5398
    %5463 = vst [vmem:[#allocation19 + $0x90] sm:$0xff] %v5399
    %5464 = vst [vmem:[#allocation19 + $0x98] sm:$0xff] %v5400
    %5465 = vst [vmem:[#allocation19 + $0xa0] sm:$0xff] %v5401
    %5466 = vst [vmem:[#allocation19 + $0xa8] sm:$0xff] %v5402
    %5467 = vst [vmem:[#allocation19 + $0xb0] sm:$0xff] %v5403
    %5468 = vst [vmem:[#allocation19 + $0xb8] sm:$0xff] %v5404
    %5469 = vst [vmem:[#allocation19 + $0xc0] sm:$0xff] %v5405
    %5470 = vst [vmem:[#allocation19 + $0xc8] sm:$0xff] %v5406
    %5471 = vst [vmem:[#allocation19 + $0xd0] sm:$0xff] %v5407
    %5472 = vst [vmem:[#allocation19 + $0xd8] sm:$0xff] %v5408
    %5473 = vst [vmem:[#allocation19 + $0xe0] sm:$0xff] %v5409
    %5474 = vst [vmem:[#allocation19 + $0xe8] sm:$0xff] %v5410
    %5475 = vst [vmem:[#allocation19 + $0xf0] sm:$0xff] %v5411
    %5476 = vst [vmem:[#allocation19 + $0xf8] sm:$0xff] %v5412
    %5477 = vst [vmem:[#allocation19 + $0x100] sm:$0xff] %v5413
    %5478 = vst [vmem:[#allocation19 + $0x108] sm:$0xff] %v5414
    %5479 = vst [vmem:[#allocation19 + $0x110] sm:$0xff] %v5415
    %5480 = vst [vmem:[#allocation19 + $0x118] sm:$0xff] %v5416
    %5481 = vst [vmem:[#allocation19 + $0x120] sm:$0xff] %v5417
    %5482 = vst [vmem:[#allocation19 + $0x128] sm:$0xff] %v5418
    %5483 = vst [vmem:[#allocation19 + $0x130] sm:$0xff] %v5419
    %5484 = vst [vmem:[#allocation19 + $0x138] sm:$0xff] %v5420
    %5485 = vst [vmem:[#allocation19 + $0x140] sm:$0xff] %v5421
    %5486 = vst [vmem:[#allocation19 + $0x148] sm:$0xff] %v5422
    %5487 = vst [vmem:[#allocation19 + $0x150] sm:$0xff] %v5423
    %5488 = vst [vmem:[#allocation19 + $0x158] sm:$0xff] %v5424
    %5489 = vst [vmem:[#allocation19 + $0x160] sm:$0xff] %v5425
    %5490 = vst [vmem:[#allocation19 + $0x168] sm:$0xff] %v5426
    %5491 = vst [vmem:[#allocation19 + $0x170] sm:$0xff] %v5427
    %5492 = vst [vmem:[#allocation19 + $0x178] sm:$0xff] %v5428
    %5493 = vst [vmem:[#allocation19 + $0x180] sm:$0xff] %v5429
    %5494 = vst [vmem:[#allocation19 + $0x188] sm:$0xff] %v5430
    %5495 = vst [vmem:[#allocation19 + $0x190] sm:$0xff] %v5431
    %5496 = vst [vmem:[#allocation19 + $0x198] sm:$0xff] %v5432
    %5497 = vst [vmem:[#allocation19 + $0x1a0] sm:$0xff] %v5433
    %5498 = vst [vmem:[#allocation19 + $0x1a8] sm:$0xff] %v5434
    %5499 = vst [vmem:[#allocation19 + $0x1b0] sm:$0xff] %v5435
    %5500 = vst [vmem:[#allocation19 + $0x1b8] sm:$0xff] %v5436
    %5501 = vst [vmem:[#allocation19 + $0x1c0] sm:$0xff] %v5437
    %5502 = vst [vmem:[#allocation19 + $0x1c8] sm:$0xff] %v5438
    %5503 = vst [vmem:[#allocation19 + $0x1d0] sm:$0xff] %v5439
    %5504 = vst [vmem:[#allocation19 + $0x1d8] sm:$0xff] %v5440
    %5505 = vst [vmem:[#allocation19 + $0x1e0] sm:$0xff] %v5441
    %5506 = vst [vmem:[#allocation19 + $0x1e8] sm:$0xff] %v5442
    %5507 = vst [vmem:[#allocation19 + $0x1f0] sm:$0xff] %v5443
    %5508 = vst [vmem:[#allocation19 + $0x1f8] sm:$0xff] %v5444
    // Predicated region
    $region74: #{single_layer_model.1} parent=1 // pred_check
      _
    $region75: #{single_layer_model.1} parent=1 // pred_check_branch
      %5510 = sbr.rel (0) target = $region77
    $region76: #{single_layer_model.1} parent=1 // pred_region
      %s5512 = ssub.s32 8192, 8192
      %5513 = vsyncadd [#allocation6], %s5512
      %s5514 = sshll.u32 [#allocation19], 4
      %s5515 = int_to_ptr.vmem [resolvable:$true] %s5514
      %5520 = dma.vmem_to_hbm [thread:$0]  %s5515, 8192, %s10, [#allocation6], 512, 512, 32
    $region77: #{single_layer_model.1} parent=1 // pred_fallthru
      _
    // Predicated region
    $region78: #{single_layer_model.1} parent=1 // pred_check
      _
    $region79: #{single_layer_model.1} parent=1 // pred_check_branch
      %5522 = sbr.rel (0) target = $region81
    $region80: #{single_layer_model.1} parent=1 // pred_region
      %5523 = dma.done [#allocation6], 8192
    $region81: #{single_layer_model.1} parent=1 // pred_fallthru
      _
    %5524 = vsyncpa [#allocation5], 1
    %5525 = vsyncpa [#allocation8], 1
    %5526 = vsyncpa [#allocation11], 1
    %5527 = vsyncpa [#allocation14], 1
    %5528 = vsyncpa [#allocation17], 1
    %5529 = vsyncpa [#allocation6], 1
  %5530 = vsyncmov [#allocation3]
  %s5531 = vpop.sfrf %5530
  %p5532 = scmp.eq.s32.totalorder %s5531, 0
  %p5533 = pneg %p5532
  %5535 = shalt.err (%p5533)
  %s5536 = scalar_lea.sflag [#allocation3], 1
  %5537 = vsyncmov %s5536
  %s5538 = vpop.sfrf %5537
  %p5539 = scmp.eq.s32.totalorder %s5538, 0
  %p5540 = pneg %p5539
  %5542 = shalt.err (%p5540)

</llo_original>
